<compile_context>
chip_gen: v5e
topology: v5e:2x2
jax: 0.10.0
libtpu: 0.0.40
codegen_flags: <defaults>
</compile_context>

<pallas_src>
import math

import jax
import jax.numpy as jnp
from jax.experimental import pallas as pl
from jax.experimental.pallas import tpu as pltpu

# ---- Model dimensions (from the PyTorch script; input_dim chosen small) ----
HIDDEN_DIM = 400
HIDDEN_DIM2 = 256
HIDDEN_DIM3 = 128
LATENT_DIM = 64
INPUT_DIM = 32          # == output_dim (sequence reconstruction)
BATCH = 8

# ---- Padded (lane-dense) dimensions used inside the kernel ----
H1P = 512               # hidden_dim (400) zero-padded to a multiple of 128
H2 = HIDDEN_DIM2        # 256
H3 = HIDDEN_DIM3        # 128
INP = 128               # input_dim padded
OUTP = 128              # output_dim padded
ML = 2 * LATENT_DIM     # fused mean||logvar width (128)

# Packed-bias layout: widths in layer order; every offset is a multiple of 128.
_BIAS_WIDTHS = (H1P, H1P, H2, H3, ML, H3, H2, H1P, H1P, OUTP)
_BIAS_OFFS = []
_o = 0
for _w in _BIAS_WIDTHS:
    _BIAS_OFFS.append(_o)
    _o += _w
B_TOTAL = _o            # 3072
(OFF_BI, OFF_BI2, OFF_BI3, OFF_BI4, OFF_BMV,
 OFF_BD1, OFF_BD2, OFF_BD3, OFF_BD4, OFF_BO) = _BIAS_OFFS


def _vae_kernel(
    # Auto-DMA'd (VMEM) inputs: tiny / needed immediately.
    x_ref, eps_ref, b_ref, wi_ref,
    # Later-layer weights stay in HBM; streamed manually below.
    wi2_hbm, wi3_hbm, wi4_hbm, wmv_hbm, wd1_hbm, wd2_hbm, wd3_hbm, wd4_hbm, wo_hbm,
    # Outputs.
    xhat_ref, ml_ref,
    # VMEM scratch for streamed weights + DMA semaphores.
    wi2_v, wi3_v, wi4_v, wmv_v, wd1_v, wd2_v, wd3_v, wd4_v, wo_v, sems,
):
    # Kick off all weight prefetches up front (issued in layer order) so weight
    # HBM traffic overlaps the dependent matmul chain.
    hbm_refs = (wi2_hbm, wi3_hbm, wi4_hbm, wmv_hbm, wd1_hbm,
                wd2_hbm, wd3_hbm, wd4_hbm, wo_hbm)
    vmem_bufs = (wi2_v, wi3_v, wi4_v, wmv_v, wd1_v, wd2_v, wd3_v, wd4_v, wo_v)
    copies = []
    for i, (src, dst) in enumerate(zip(hbm_refs, vmem_bufs)):
        cp = pltpu.make_async_copy(src, dst, sems.at[i])
        cp.start()
        copies.append(cp)

    def bias(off, width):
        return b_ref[:, off:off + width]            # static slice, (1, width) f32

    def linear(h, w, b):
        # bf16 operands on the MXU, f32 accumulate; bias add stays f32 (VPU).
        return jnp.dot(h.astype(jnp.bfloat16), w,
                       preferred_element_type=jnp.float32) + b

    def relu(h):
        return jnp.maximum(h, 0.0)

    x = x_ref[...]

    # ---- Encoder ----
    h = relu(linear(x, wi_ref[...], bias(OFF_BI, H1P)))        # 128 -> 512
    copies[0].wait()
    h = relu(linear(h, wi2_v[...], bias(OFF_BI2, H1P)))        # 512 -> 512
    copies[1].wait()
    h = relu(linear(h, wi3_v[...], bias(OFF_BI3, H2)))         # 512 -> 256
    copies[2].wait()
    h = relu(linear(h, wi4_v[...], bias(OFF_BI4, H3)))         # 256 -> 128
    copies[3].wait()
    ml = linear(h, wmv_v[...], bias(OFF_BMV, ML))              # 128 -> 128 (mean || logvar)

    # ---- Reparameterization: z = mean + exp(0.5 * log_var) * eps ----
    mean = ml[:, :LATENT_DIM]
    log_var = ml[:, LATENT_DIM:]
    z = mean + jnp.exp(0.5 * log_var) * eps_ref[...]

    # ---- Decoder ----
    copies[4].wait()
    d = relu(linear(z, wd1_v[...], bias(OFF_BD1, H3)))         # 64  -> 128
    copies[5].wait()
    d = relu(linear(d, wd2_v[...], bias(OFF_BD2, H2)))         # 128 -> 256
    copies[6].wait()
    d = relu(linear(d, wd3_v[...], bias(OFF_BD3, H1P)))        # 256 -> 512
    copies[7].wait()
    d = relu(linear(d, wd4_v[...], bias(OFF_BD4, H1P)))        # 512 -> 512
    copies[8].wait()
    logits = linear(d, wo_v[...], bias(OFF_BO, OUTP))          # 512 -> 128
    # sigmoid(x) = 1 / (1 + exp(-x)); divide routed to the EUP reciprocal slot.
    xhat_ref[...] = pl.reciprocal(1.0 + jnp.exp(-logits), approx=True)
    ml_ref[...] = ml


def _vae_pallas_call(batch):
    vmem = pl.BlockSpec(memory_space=pltpu.MemorySpace.VMEM)
    hbm = pl.BlockSpec(memory_space=pl.ANY)
    return pl.pallas_call(
        _vae_kernel,
        out_shape=(
            jax.ShapeDtypeStruct((batch, OUTP), jnp.float32),   # x_hat (padded)
            jax.ShapeDtypeStruct((batch, ML), jnp.float32),     # mean || log_var
        ),
        in_specs=[vmem, vmem, vmem, vmem] + [hbm] * 9,
        out_specs=(vmem, vmem),
        scratch_shapes=[
            pltpu.VMEM((H1P, H1P), jnp.bfloat16),        # wi2
            pltpu.VMEM((H1P, H2), jnp.bfloat16),         # wi3
            pltpu.VMEM((H2, H3), jnp.bfloat16),          # wi4
            pltpu.VMEM((H3, ML), jnp.bfloat16),          # wmv (fused mean/var)
            pltpu.VMEM((LATENT_DIM, H3), jnp.bfloat16),  # wd1
            pltpu.VMEM((H3, H2), jnp.bfloat16),          # wd2
            pltpu.VMEM((H2, H1P), jnp.bfloat16),         # wd3
            pltpu.VMEM((H1P, H1P), jnp.bfloat16),        # wd4
            pltpu.VMEM((H1P, OUTP), jnp.bfloat16),       # wo
            pltpu.SemaphoreType.DMA((9,)),
        ],
    )


@jax.jit
def vae_forward(x, eps, prep):
    """Whole VAE forward pass (encoder, reparameterize, decoder) in one kernel."""
    (wi_p, b_all, wi2_p, wi3_p, wi4_p, wmv_p,
     wd1_p, wd2_p, wd3_p, wd4_p, wo_p) = prep
    batch, in_dim = x.shape
    x_p = jnp.pad(x, ((0, 0), (0, INP - in_dim)))
    xhat_p, ml = _vae_pallas_call(batch)(
        x_p, eps, b_all, wi_p,
        wi2_p, wi3_p, wi4_p, wmv_p, wd1_p, wd2_p, wd3_p, wd4_p, wo_p)
    x_hat = xhat_p[:, :INPUT_DIM]
    mean = ml[:, :LATENT_DIM]
    log_var = ml[:, LATENT_DIM:]
    return x_hat, mean, log_var


# ---------------- Parameter construction (outside the kernel) ----------------

def init_linear(key, fan_in, fan_out):
    """PyTorch nn.Linear default init: U(-1/sqrt(fan_in), 1/sqrt(fan_in)).
    Weight is stored transposed vs PyTorch: shape (in_features, out_features)."""
    kw, kb = jax.random.split(key)
    bound = 1.0 / math.sqrt(fan_in)
    w = jax.random.uniform(kw, (fan_in, fan_out), jnp.float32, -bound, bound)
    b = jax.random.uniform(kb, (fan_out,), jnp.float32, -bound, bound)
    return w, b


def init_params(key):
    layer_dims = [
        # Encoder
        (INPUT_DIM, HIDDEN_DIM),       # FC_input
        (HIDDEN_DIM, HIDDEN_DIM),      # FC_input2
        (HIDDEN_DIM, HIDDEN_DIM2),     # FC_input3
        (HIDDEN_DIM2, HIDDEN_DIM3),    # FC_input4
        (HIDDEN_DIM3, LATENT_DIM),     # FC_mean
        (HIDDEN_DIM3, LATENT_DIM),     # FC_var
        # Decoder
        (LATENT_DIM, HIDDEN_DIM3),     # FC_hidden
        (HIDDEN_DIM3, HIDDEN_DIM2),    # FC_hidden4
        (HIDDEN_DIM2, HIDDEN_DIM),     # FC_hidden3
        (HIDDEN_DIM, HIDDEN_DIM),      # FC_hidden2
        (HIDDEN_DIM, INPUT_DIM),       # FC_output
    ]
    keys = jax.random.split(key, len(layer_dims))
    return [init_linear(k, fi, fo) for k, (fi, fo) in zip(keys, layer_dims)]


def _pad2(w, rows, cols):
    return jnp.pad(w, ((0, rows - w.shape[0]), (0, cols - w.shape[1])))


def _pad1(b, n):
    return jnp.pad(b, (0, n - b.shape[0]))


def prepare_params(params):
    """One-time prep: zero-pad to lane-dense shapes, fuse FC_mean/FC_var,
    pack all biases into one buffer, cast weights to bf16."""
    ((wi, bi), (wi2, bi2), (wi3, bi3), (wi4, bi4), (wm, bm), (wv, bv),
     (wd1, bd1), (wd2, bd2), (wd3, bd3), (wd4, bd4), (wo, bo)) = params

    bf16 = jnp.bfloat16
    wi_p = _pad2(wi, INP, H1P).astype(bf16)
    wi2_p = _pad2(wi2, H1P, H1P).astype(bf16)
    wi3_p = _pad2(wi3, H1P, H2).astype(bf16)
    wi4_p = wi4.astype(bf16)                                  # (256, 128)
    wmv_p = jnp.concatenate([wm, wv], axis=1).astype(bf16)    # (128, 128)
    wd1_p = wd1.astype(bf16)                                  # (64, 128)
    wd2_p = wd2.astype(bf16)                                  # (128, 256)
    wd3_p = _pad2(wd3, H2, H1P).astype(bf16)
    wd4_p = _pad2(wd4, H1P, H1P).astype(bf16)
    wo_p = _pad2(wo, H1P, OUTP).astype(bf16)

    b_all = jnp.concatenate([
        _pad1(bi, H1P), _pad1(bi2, H1P), _pad1(bi3, H2), _pad1(bi4, H3),
        jnp.concatenate([bm, bv]),
        _pad1(bd1, H3), _pad1(bd2, H2), _pad1(bd3, H1P), _pad1(bd4, H1P),
        _pad1(bo, OUTP),
    ]).reshape(1, B_TOTAL).astype(jnp.float32)

    return (wi_p, b_all, wi2_p, wi3_p, wi4_p, wmv_p,
            wd1_p, wd2_p, wd3_p, wd4_p, wo_p)


def vae_reference(x, eps, params):
    """Pure-JAX reference mirroring the kernel numerics (bf16 weights/dot inputs)."""
    def lin(h, w, b):
        return jnp.dot(h.astype(jnp.bfloat16), w.astype(jnp.bfloat16),
                       preferred_element_type=jnp.float32) + b

    relu = lambda h: jnp.maximum(h, 0.0)
    ((wi, bi), (wi2, bi2), (wi3, bi3), (wi4, bi4), (wm, bm), (wv, bv),
     (wd1, bd1), (wd2, bd2), (wd3, bd3), (wd4, bd4), (wo, bo)) = params

    h = relu(lin(x, wi, bi))
    h = relu(lin(h, wi2, bi2))
    h = relu(lin(h, wi3, bi3))
    h = relu(lin(h, wi4, bi4))
    mean = lin(h, wm, bm)
    log_var = lin(h, wv, bv)
    z = mean + jnp.exp(0.5 * log_var) * eps
    d = relu(lin(z, wd1, bd1))
    d = relu(lin(d, wd2, bd2))
    d = relu(lin(d, wd3, bd3))
    d = relu(lin(d, wd4, bd4))
    x_hat = jax.nn.sigmoid(lin(d, wo, bo))
    return x_hat, mean, log_var


if __name__ == "__main__":
    key = jax.random.PRNGKey(0)
    k_x, k_eps, k_params = jax.random.split(key, 3)

    x = jax.random.normal(k_x, (BATCH, INPUT_DIM), dtype=jnp.float32)
    eps = jax.random.normal(k_eps, (BATCH, LATENT_DIM), dtype=jnp.float32)
    params = init_params(k_params)
    prep = prepare_params(params)

    x_hat, mean, log_var = vae_forward(x, eps, prep)
    jax.block_until_ready((x_hat, mean, log_var))

    assert x_hat.shape == (BATCH, INPUT_DIM)
    assert mean.shape == (BATCH, LATENT_DIM)
    assert log_var.shape == (BATCH, LATENT_DIM)

    # Compare against a pure-JAX reference with matching (bf16-weight) numerics.
    ref_xhat, ref_mean, ref_logvar = vae_reference(x, eps, params)
    assert bool(jnp.allclose(mean, ref_mean, rtol=1e-2, atol=2e-3)), "mean mismatch"
    assert bool(jnp.allclose(log_var, ref_logvar, rtol=1e-2, atol=2e-3)), "log_var mismatch"
    assert bool(jnp.allclose(x_hat, ref_xhat, rtol=1e-2, atol=1e-2)), "x_hat mismatch"
    assert bool(jnp.all((x_hat >= -1e-3) & (x_hat <= 1.0 + 1e-3)))

    print("KERNEL_OK")
</pallas_src>

<mosaic_0001>
module attributes {stable_mosaic.version = 11 : i64} {
  func.func @_vae_kernel(%arg0: memref<8x128xf32, #tpu.memory_space<vmem>>, %arg1: memref<8x64xf32, #tpu.memory_space<vmem>>, %arg2: memref<1x3072xf32, #tpu.memory_space<vmem>>, %arg3: memref<128x512xbf16, #tpu.memory_space<vmem>>, %arg4: memref<512x512xbf16, #tpu.memory_space<any>>, %arg5: memref<512x256xbf16, #tpu.memory_space<any>>, %arg6: memref<256x128xbf16, #tpu.memory_space<any>>, %arg7: memref<128x128xbf16, #tpu.memory_space<any>>, %arg8: memref<64x128xbf16, #tpu.memory_space<any>>, %arg9: memref<128x256xbf16, #tpu.memory_space<any>>, %arg10: memref<256x512xbf16, #tpu.memory_space<any>>, %arg11: memref<512x512xbf16, #tpu.memory_space<any>>, %arg12: memref<512x128xbf16, #tpu.memory_space<any>>, %arg13: memref<8x128xf32, #tpu.memory_space<vmem>>, %arg14: memref<8x128xf32, #tpu.memory_space<vmem>>, %arg15: memref<512x512xbf16, #tpu.memory_space<vmem>>, %arg16: memref<512x256xbf16, #tpu.memory_space<vmem>>, %arg17: memref<256x128xbf16, #tpu.memory_space<vmem>>, %arg18: memref<128x128xbf16, #tpu.memory_space<vmem>>, %arg19: memref<64x128xbf16, #tpu.memory_space<vmem>>, %arg20: memref<128x256xbf16, #tpu.memory_space<vmem>>, %arg21: memref<256x512xbf16, #tpu.memory_space<vmem>>, %arg22: memref<512x512xbf16, #tpu.memory_space<vmem>>, %arg23: memref<512x128xbf16, #tpu.memory_space<vmem>>, %arg24: memref<9x!tpu.dma_semaphore, #tpu.memory_space<semaphore_mem>>) attributes {dimension_semantics = [], scalar_prefetch = 0 : i64, scratch_operands = 10 : i64, tpu.core_type = #tpu.core_type<tc>} {
    %c0_i32 = arith.constant 0 : i32
    %0 = tpu.memref_slice %arg24[%c0_i32] : memref<9x!tpu.dma_semaphore, #tpu.memory_space<semaphore_mem>> -> memref<1x!tpu.dma_semaphore, #tpu.memory_space<semaphore_mem>>
    %1 = tpu.memref_squeeze %0 : memref<1x!tpu.dma_semaphore, #tpu.memory_space<semaphore_mem>> -> memref<!tpu.dma_semaphore, #tpu.memory_space<semaphore_mem>>
    tpu.enqueue_dma source(%arg4 : memref<512x512xbf16, #tpu.memory_space<any>>) target(%arg15 : memref<512x512xbf16, #tpu.memory_space<vmem>>) target_semaphore(%1 : memref<!tpu.dma_semaphore, #tpu.memory_space<semaphore_mem>>)
    %c1_i32 = arith.constant 1 : i32
    %2 = tpu.memref_slice %arg24[%c1_i32] : memref<9x!tpu.dma_semaphore, #tpu.memory_space<semaphore_mem>> -> memref<1x!tpu.dma_semaphore, #tpu.memory_space<semaphore_mem>>
    %3 = tpu.memref_squeeze %2 : memref<1x!tpu.dma_semaphore, #tpu.memory_space<semaphore_mem>> -> memref<!tpu.dma_semaphore, #tpu.memory_space<semaphore_mem>>
    tpu.enqueue_dma source(%arg5 : memref<512x256xbf16, #tpu.memory_space<any>>) target(%arg16 : memref<512x256xbf16, #tpu.memory_space<vmem>>) target_semaphore(%3 : memref<!tpu.dma_semaphore, #tpu.memory_space<semaphore_mem>>)
    %c2_i32 = arith.constant 2 : i32
    %4 = tpu.memref_slice %arg24[%c2_i32] : memref<9x!tpu.dma_semaphore, #tpu.memory_space<semaphore_mem>> -> memref<1x!tpu.dma_semaphore, #tpu.memory_space<semaphore_mem>>
    %5 = tpu.memref_squeeze %4 : memref<1x!tpu.dma_semaphore, #tpu.memory_space<semaphore_mem>> -> memref<!tpu.dma_semaphore, #tpu.memory_space<semaphore_mem>>
    tpu.enqueue_dma source(%arg6 : memref<256x128xbf16, #tpu.memory_space<any>>) target(%arg17 : memref<256x128xbf16, #tpu.memory_space<vmem>>) target_semaphore(%5 : memref<!tpu.dma_semaphore, #tpu.memory_space<semaphore_mem>>)
    %c3_i32 = arith.constant 3 : i32
    %6 = tpu.memref_slice %arg24[%c3_i32] : memref<9x!tpu.dma_semaphore, #tpu.memory_space<semaphore_mem>> -> memref<1x!tpu.dma_semaphore, #tpu.memory_space<semaphore_mem>>
    %7 = tpu.memref_squeeze %6 : memref<1x!tpu.dma_semaphore, #tpu.memory_space<semaphore_mem>> -> memref<!tpu.dma_semaphore, #tpu.memory_space<semaphore_mem>>
    tpu.enqueue_dma source(%arg7 : memref<128x128xbf16, #tpu.memory_space<any>>) target(%arg18 : memref<128x128xbf16, #tpu.memory_space<vmem>>) target_semaphore(%7 : memref<!tpu.dma_semaphore, #tpu.memory_space<semaphore_mem>>)
    %c4_i32 = arith.constant 4 : i32
    %8 = tpu.memref_slice %arg24[%c4_i32] : memref<9x!tpu.dma_semaphore, #tpu.memory_space<semaphore_mem>> -> memref<1x!tpu.dma_semaphore, #tpu.memory_space<semaphore_mem>>
    %9 = tpu.memref_squeeze %8 : memref<1x!tpu.dma_semaphore, #tpu.memory_space<semaphore_mem>> -> memref<!tpu.dma_semaphore, #tpu.memory_space<semaphore_mem>>
    tpu.enqueue_dma source(%arg8 : memref<64x128xbf16, #tpu.memory_space<any>>) target(%arg19 : memref<64x128xbf16, #tpu.memory_space<vmem>>) target_semaphore(%9 : memref<!tpu.dma_semaphore, #tpu.memory_space<semaphore_mem>>)
    %c5_i32 = arith.constant 5 : i32
    %10 = tpu.memref_slice %arg24[%c5_i32] : memref<9x!tpu.dma_semaphore, #tpu.memory_space<semaphore_mem>> -> memref<1x!tpu.dma_semaphore, #tpu.memory_space<semaphore_mem>>
    %11 = tpu.memref_squeeze %10 : memref<1x!tpu.dma_semaphore, #tpu.memory_space<semaphore_mem>> -> memref<!tpu.dma_semaphore, #tpu.memory_space<semaphore_mem>>
    tpu.enqueue_dma source(%arg9 : memref<128x256xbf16, #tpu.memory_space<any>>) target(%arg20 : memref<128x256xbf16, #tpu.memory_space<vmem>>) target_semaphore(%11 : memref<!tpu.dma_semaphore, #tpu.memory_space<semaphore_mem>>)
    %c6_i32 = arith.constant 6 : i32
    %12 = tpu.memref_slice %arg24[%c6_i32] : memref<9x!tpu.dma_semaphore, #tpu.memory_space<semaphore_mem>> -> memref<1x!tpu.dma_semaphore, #tpu.memory_space<semaphore_mem>>
    %13 = tpu.memref_squeeze %12 : memref<1x!tpu.dma_semaphore, #tpu.memory_space<semaphore_mem>> -> memref<!tpu.dma_semaphore, #tpu.memory_space<semaphore_mem>>
    tpu.enqueue_dma source(%arg10 : memref<256x512xbf16, #tpu.memory_space<any>>) target(%arg21 : memref<256x512xbf16, #tpu.memory_space<vmem>>) target_semaphore(%13 : memref<!tpu.dma_semaphore, #tpu.memory_space<semaphore_mem>>)
    %c7_i32 = arith.constant 7 : i32
    %14 = tpu.memref_slice %arg24[%c7_i32] : memref<9x!tpu.dma_semaphore, #tpu.memory_space<semaphore_mem>> -> memref<1x!tpu.dma_semaphore, #tpu.memory_space<semaphore_mem>>
    %15 = tpu.memref_squeeze %14 : memref<1x!tpu.dma_semaphore, #tpu.memory_space<semaphore_mem>> -> memref<!tpu.dma_semaphore, #tpu.memory_space<semaphore_mem>>
    tpu.enqueue_dma source(%arg11 : memref<512x512xbf16, #tpu.memory_space<any>>) target(%arg22 : memref<512x512xbf16, #tpu.memory_space<vmem>>) target_semaphore(%15 : memref<!tpu.dma_semaphore, #tpu.memory_space<semaphore_mem>>)
    %c8_i32 = arith.constant 8 : i32
    %16 = tpu.memref_slice %arg24[%c8_i32] : memref<9x!tpu.dma_semaphore, #tpu.memory_space<semaphore_mem>> -> memref<1x!tpu.dma_semaphore, #tpu.memory_space<semaphore_mem>>
    %17 = tpu.memref_squeeze %16 : memref<1x!tpu.dma_semaphore, #tpu.memory_space<semaphore_mem>> -> memref<!tpu.dma_semaphore, #tpu.memory_space<semaphore_mem>>
    tpu.enqueue_dma source(%arg12 : memref<512x128xbf16, #tpu.memory_space<any>>) target(%arg23 : memref<512x128xbf16, #tpu.memory_space<vmem>>) target_semaphore(%17 : memref<!tpu.dma_semaphore, #tpu.memory_space<semaphore_mem>>)
    %c0 = arith.constant 0 : index
    %c0_0 = arith.constant 0 : index
    %18 = vector.load %arg0[%c0, %c0_0] : memref<8x128xf32, #tpu.memory_space<vmem>>, vector<8x128xf32>
    %c0_1 = arith.constant 0 : index
    %c0_2 = arith.constant 0 : index
    %19 = vector.load %arg3[%c0_1, %c0_2] : memref<128x512xbf16, #tpu.memory_space<vmem>>, vector<128x512xbf16>
    %c0_3 = arith.constant 0 : index
    %c0_4 = arith.constant 0 : index
    %20 = vector.load %arg2[%c0_3, %c0_4] : memref<1x3072xf32, #tpu.memory_space<vmem>>, vector<1x512xf32>
    %21 = arith.truncf %18 : vector<8x128xf32> to vector<8x128xbf16>
    %cst = arith.constant dense<0.000000e+00> : vector<8x512xf32>
    %22 = tpu.matmul %21, %19, %cst {dimension_numbers = #tpu.dot_dimension_numbers<[1], [0], [0], [1], [0, 0, 1, 1], [], []>} : vector<8x128xbf16>, vector<128x512xbf16>, vector<8x512xf32> -> vector<8x512xf32>
    %23 = vector.broadcast %20 : vector<1x512xf32> to vector<8x512xf32>
    %24 = arith.addf %22, %23 : vector<8x512xf32>
    %cst_5 = arith.constant 0.000000e+00 : f32
    %25 = vector.broadcast %cst_5 : f32 to vector<8x512xf32>
    %26 = arith.maximumf %24, %25 : vector<8x512xf32>
    %c0_i32_6 = arith.constant 0 : i32
    %27 = tpu.memref_slice %arg24[%c0_i32_6] : memref<9x!tpu.dma_semaphore, #tpu.memory_space<semaphore_mem>> -> memref<1x!tpu.dma_semaphore, #tpu.memory_space<semaphore_mem>>
    %28 = tpu.memref_squeeze %27 : memref<1x!tpu.dma_semaphore, #tpu.memory_space<semaphore_mem>> -> memref<!tpu.dma_semaphore, #tpu.memory_space<semaphore_mem>>
    tpu.wait_dma2 semaphore(%28 : memref<!tpu.dma_semaphore, #tpu.memory_space<semaphore_mem>>) src(%arg4 : memref<512x512xbf16, #tpu.memory_space<any>>) dst(%arg15 : memref<512x512xbf16, #tpu.memory_space<vmem>>)
    %c0_7 = arith.constant 0 : index
    %c0_8 = arith.constant 0 : index
    %29 = vector.load %arg15[%c0_7, %c0_8] : memref<512x512xbf16, #tpu.memory_space<vmem>>, vector<512x512xbf16>
    %c0_9 = arith.constant 0 : index
    %c512 = arith.constant 512 : index
    %30 = vector.load %arg2[%c0_9, %c512] : memref<1x3072xf32, #tpu.memory_space<vmem>>, vector<1x512xf32>
    %31 = arith.truncf %26 : vector<8x512xf32> to vector<8x512xbf16>
    %cst_10 = arith.constant dense<0.000000e+00> : vector<8x512xf32>
    %32 = tpu.matmul %31, %29, %cst_10 {dimension_numbers = #tpu.dot_dimension_numbers<[1], [0], [0], [1], [0, 0, 1, 1], [], []>} : vector<8x512xbf16>, vector<512x512xbf16>, vector<8x512xf32> -> vector<8x512xf32>
    %33 = vector.broadcast %30 : vector<1x512xf32> to vector<8x512xf32>
    %34 = arith.addf %32, %33 : vector<8x512xf32>
    %cst_11 = arith.constant 0.000000e+00 : f32
    %35 = vector.broadcast %cst_11 : f32 to vector<8x512xf32>
    %36 = arith.maximumf %34, %35 : vector<8x512xf32>
    %c1_i32_12 = arith.constant 1 : i32
    %37 = tpu.memref_slice %arg24[%c1_i32_12] : memref<9x!tpu.dma_semaphore, #tpu.memory_space<semaphore_mem>> -> memref<1x!tpu.dma_semaphore, #tpu.memory_space<semaphore_mem>>
    %38 = tpu.memref_squeeze %37 : memref<1x!tpu.dma_semaphore, #tpu.memory_space<semaphore_mem>> -> memref<!tpu.dma_semaphore, #tpu.memory_space<semaphore_mem>>
    tpu.wait_dma2 semaphore(%38 : memref<!tpu.dma_semaphore, #tpu.memory_space<semaphore_mem>>) src(%arg5 : memref<512x256xbf16, #tpu.memory_space<any>>) dst(%arg16 : memref<512x256xbf16, #tpu.memory_space<vmem>>)
    %c0_13 = arith.constant 0 : index
    %c0_14 = arith.constant 0 : index
    %39 = vector.load %arg16[%c0_13, %c0_14] : memref<512x256xbf16, #tpu.memory_space<vmem>>, vector<512x256xbf16>
    %c0_15 = arith.constant 0 : index
    %c1024 = arith.constant 1024 : index
    %40 = vector.load %arg2[%c0_15, %c1024] : memref<1x3072xf32, #tpu.memory_space<vmem>>, vector<1x256xf32>
    %41 = arith.truncf %36 : vector<8x512xf32> to vector<8x512xbf16>
    %cst_16 = arith.constant dense<0.000000e+00> : vector<8x256xf32>
    %42 = tpu.matmul %41, %39, %cst_16 {dimension_numbers = #tpu.dot_dimension_numbers<[1], [0], [0], [1], [0, 0, 1, 1], [], []>} : vector<8x512xbf16>, vector<512x256xbf16>, vector<8x256xf32> -> vector<8x256xf32>
    %43 = vector.broadcast %40 : vector<1x256xf32> to vector<8x256xf32>
    %44 = arith.addf %42, %43 : vector<8x256xf32>
    %cst_17 = arith.constant 0.000000e+00 : f32
    %45 = vector.broadcast %cst_17 : f32 to vector<8x256xf32>
    %46 = arith.maximumf %44, %45 : vector<8x256xf32>
    %c2_i32_18 = arith.constant 2 : i32
    %47 = tpu.memref_slice %arg24[%c2_i32_18] : memref<9x!tpu.dma_semaphore, #tpu.memory_space<semaphore_mem>> -> memref<1x!tpu.dma_semaphore, #tpu.memory_space<semaphore_mem>>
    %48 = tpu.memref_squeeze %47 : memref<1x!tpu.dma_semaphore, #tpu.memory_space<semaphore_mem>> -> memref<!tpu.dma_semaphore, #tpu.memory_space<semaphore_mem>>
    tpu.wait_dma2 semaphore(%48 : memref<!tpu.dma_semaphore, #tpu.memory_space<semaphore_mem>>) src(%arg6 : memref<256x128xbf16, #tpu.memory_space<any>>) dst(%arg17 : memref<256x128xbf16, #tpu.memory_space<vmem>>)
    %c0_19 = arith.constant 0 : index
    %c0_20 = arith.constant 0 : index
    %49 = vector.load %arg17[%c0_19, %c0_20] : memref<256x128xbf16, #tpu.memory_space<vmem>>, vector<256x128xbf16>
    %c0_21 = arith.constant 0 : index
    %c1280 = arith.constant 1280 : index
    %50 = vector.load %arg2[%c0_21, %c1280] : memref<1x3072xf32, #tpu.memory_space<vmem>>, vector<1x128xf32>
    %51 = arith.truncf %46 : vector<8x256xf32> to vector<8x256xbf16>
    %cst_22 = arith.constant dense<0.000000e+00> : vector<8x128xf32>
    %52 = tpu.matmul %51, %49, %cst_22 {dimension_numbers = #tpu.dot_dimension_numbers<[1], [0], [0], [1], [0, 0, 1, 1], [], []>} : vector<8x256xbf16>, vector<256x128xbf16>, vector<8x128xf32> -> vector<8x128xf32>
    %53 = vector.broadcast %50 : vector<1x128xf32> to vector<8x128xf32>
    %54 = arith.addf %52, %53 : vector<8x128xf32>
    %cst_23 = arith.constant 0.000000e+00 : f32
    %55 = vector.broadcast %cst_23 : f32 to vector<8x128xf32>
    %56 = arith.maximumf %54, %55 : vector<8x128xf32>
    %c3_i32_24 = arith.constant 3 : i32
    %57 = tpu.memref_slice %arg24[%c3_i32_24] : memref<9x!tpu.dma_semaphore, #tpu.memory_space<semaphore_mem>> -> memref<1x!tpu.dma_semaphore, #tpu.memory_space<semaphore_mem>>
    %58 = tpu.memref_squeeze %57 : memref<1x!tpu.dma_semaphore, #tpu.memory_space<semaphore_mem>> -> memref<!tpu.dma_semaphore, #tpu.memory_space<semaphore_mem>>
    tpu.wait_dma2 semaphore(%58 : memref<!tpu.dma_semaphore, #tpu.memory_space<semaphore_mem>>) src(%arg7 : memref<128x128xbf16, #tpu.memory_space<any>>) dst(%arg18 : memref<128x128xbf16, #tpu.memory_space<vmem>>)
    %c0_25 = arith.constant 0 : index
    %c0_26 = arith.constant 0 : index
    %59 = vector.load %arg18[%c0_25, %c0_26] : memref<128x128xbf16, #tpu.memory_space<vmem>>, vector<128x128xbf16>
    %c0_27 = arith.constant 0 : index
    %c1408 = arith.constant 1408 : index
    %60 = vector.load %arg2[%c0_27, %c1408] : memref<1x3072xf32, #tpu.memory_space<vmem>>, vector<1x128xf32>
    %61 = arith.truncf %56 : vector<8x128xf32> to vector<8x128xbf16>
    %cst_28 = arith.constant dense<0.000000e+00> : vector<8x128xf32>
    %62 = tpu.matmul %61, %59, %cst_28 {dimension_numbers = #tpu.dot_dimension_numbers<[1], [0], [0], [1], [0, 0, 1, 1], [], []>} : vector<8x128xbf16>, vector<128x128xbf16>, vector<8x128xf32> -> vector<8x128xf32>
    %63 = vector.broadcast %60 : vector<1x128xf32> to vector<8x128xf32>
    %64 = arith.addf %62, %63 : vector<8x128xf32>
    %65 = vector.extract_strided_slice %64 {offsets = [0, 0], sizes = [8, 64], strides = [1, 1]} : vector<8x128xf32> to vector<8x64xf32>
    %66 = vector.extract_strided_slice %64 {offsets = [0, 64], sizes = [8, 64], strides = [1, 1]} : vector<8x128xf32> to vector<8x64xf32>
    %cst_29 = arith.constant 5.000000e-01 : f32
    %67 = vector.broadcast %cst_29 : f32 to vector<8x64xf32>
    %68 = arith.mulf %67, %66 : vector<8x64xf32>
    %69 = math.exp %68 : vector<8x64xf32>
    %c0_30 = arith.constant 0 : index
    %c0_31 = arith.constant 0 : index
    %70 = vector.load %arg1[%c0_30, %c0_31] : memref<8x64xf32, #tpu.memory_space<vmem>>, vector<8x64xf32>
    %71 = arith.mulf %69, %70 : vector<8x64xf32>
    %72 = arith.addf %65, %71 : vector<8x64xf32>
    %c4_i32_32 = arith.constant 4 : i32
    %73 = tpu.memref_slice %arg24[%c4_i32_32] : memref<9x!tpu.dma_semaphore, #tpu.memory_space<semaphore_mem>> -> memref<1x!tpu.dma_semaphore, #tpu.memory_space<semaphore_mem>>
    %74 = tpu.memref_squeeze %73 : memref<1x!tpu.dma_semaphore, #tpu.memory_space<semaphore_mem>> -> memref<!tpu.dma_semaphore, #tpu.memory_space<semaphore_mem>>
    tpu.wait_dma2 semaphore(%74 : memref<!tpu.dma_semaphore, #tpu.memory_space<semaphore_mem>>) src(%arg8 : memref<64x128xbf16, #tpu.memory_space<any>>) dst(%arg19 : memref<64x128xbf16, #tpu.memory_space<vmem>>)
    %c0_33 = arith.constant 0 : index
    %c0_34 = arith.constant 0 : index
    %75 = vector.load %arg19[%c0_33, %c0_34] : memref<64x128xbf16, #tpu.memory_space<vmem>>, vector<64x128xbf16>
    %c0_35 = arith.constant 0 : index
    %c1536 = arith.constant 1536 : index
    %76 = vector.load %arg2[%c0_35, %c1536] : memref<1x3072xf32, #tpu.memory_space<vmem>>, vector<1x128xf32>
    %77 = arith.truncf %72 : vector<8x64xf32> to vector<8x64xbf16>
    %cst_36 = arith.constant dense<0.000000e+00> : vector<8x128xf32>
    %78 = tpu.matmul %77, %75, %cst_36 {dimension_numbers = #tpu.dot_dimension_numbers<[1], [0], [0], [1], [0, 0, 1, 1], [], []>} : vector<8x64xbf16>, vector<64x128xbf16>, vector<8x128xf32> -> vector<8x128xf32>
    %79 = vector.broadcast %76 : vector<1x128xf32> to vector<8x128xf32>
    %80 = arith.addf %78, %79 : vector<8x128xf32>
    %cst_37 = arith.constant 0.000000e+00 : f32
    %81 = vector.broadcast %cst_37 : f32 to vector<8x128xf32>
    %82 = arith.maximumf %80, %81 : vector<8x128xf32>
    %c5_i32_38 = arith.constant 5 : i32
    %83 = tpu.memref_slice %arg24[%c5_i32_38] : memref<9x!tpu.dma_semaphore, #tpu.memory_space<semaphore_mem>> -> memref<1x!tpu.dma_semaphore, #tpu.memory_space<semaphore_mem>>
    %84 = tpu.memref_squeeze %83 : memref<1x!tpu.dma_semaphore, #tpu.memory_space<semaphore_mem>> -> memref<!tpu.dma_semaphore, #tpu.memory_space<semaphore_mem>>
    tpu.wait_dma2 semaphore(%84 : memref<!tpu.dma_semaphore, #tpu.memory_space<semaphore_mem>>) src(%arg9 : memref<128x256xbf16, #tpu.memory_space<any>>) dst(%arg20 : memref<128x256xbf16, #tpu.memory_space<vmem>>)
    %c0_39 = arith.constant 0 : index
    %c0_40 = arith.constant 0 : index
    %85 = vector.load %arg20[%c0_39, %c0_40] : memref<128x256xbf16, #tpu.memory_space<vmem>>, vector<128x256xbf16>
    %c0_41 = arith.constant 0 : index
    %c1664 = arith.constant 1664 : index
    %86 = vector.load %arg2[%c0_41, %c1664] : memref<1x3072xf32, #tpu.memory_space<vmem>>, vector<1x256xf32>
    %87 = arith.truncf %82 : vector<8x128xf32> to vector<8x128xbf16>
    %cst_42 = arith.constant dense<0.000000e+00> : vector<8x256xf32>
    %88 = tpu.matmul %87, %85, %cst_42 {dimension_numbers = #tpu.dot_dimension_numbers<[1], [0], [0], [1], [0, 0, 1, 1], [], []>} : vector<8x128xbf16>, vector<128x256xbf16>, vector<8x256xf32> -> vector<8x256xf32>
    %89 = vector.broadcast %86 : vector<1x256xf32> to vector<8x256xf32>
    %90 = arith.addf %88, %89 : vector<8x256xf32>
    %cst_43 = arith.constant 0.000000e+00 : f32
    %91 = vector.broadcast %cst_43 : f32 to vector<8x256xf32>
    %92 = arith.maximumf %90, %91 : vector<8x256xf32>
    %c6_i32_44 = arith.constant 6 : i32
    %93 = tpu.memref_slice %arg24[%c6_i32_44] : memref<9x!tpu.dma_semaphore, #tpu.memory_space<semaphore_mem>> -> memref<1x!tpu.dma_semaphore, #tpu.memory_space<semaphore_mem>>
    %94 = tpu.memref_squeeze %93 : memref<1x!tpu.dma_semaphore, #tpu.memory_space<semaphore_mem>> -> memref<!tpu.dma_semaphore, #tpu.memory_space<semaphore_mem>>
    tpu.wait_dma2 semaphore(%94 : memref<!tpu.dma_semaphore, #tpu.memory_space<semaphore_mem>>) src(%arg10 : memref<256x512xbf16, #tpu.memory_space<any>>) dst(%arg21 : memref<256x512xbf16, #tpu.memory_space<vmem>>)
    %c0_45 = arith.constant 0 : index
    %c0_46 = arith.constant 0 : index
    %95 = vector.load %arg21[%c0_45, %c0_46] : memref<256x512xbf16, #tpu.memory_space<vmem>>, vector<256x512xbf16>
    %c0_47 = arith.constant 0 : index
    %c1920 = arith.constant 1920 : index
    %96 = vector.load %arg2[%c0_47, %c1920] : memref<1x3072xf32, #tpu.memory_space<vmem>>, vector<1x512xf32>
    %97 = arith.truncf %92 : vector<8x256xf32> to vector<8x256xbf16>
    %cst_48 = arith.constant dense<0.000000e+00> : vector<8x512xf32>
    %98 = tpu.matmul %97, %95, %cst_48 {dimension_numbers = #tpu.dot_dimension_numbers<[1], [0], [0], [1], [0, 0, 1, 1], [], []>} : vector<8x256xbf16>, vector<256x512xbf16>, vector<8x512xf32> -> vector<8x512xf32>
    %99 = vector.broadcast %96 : vector<1x512xf32> to vector<8x512xf32>
    %100 = arith.addf %98, %99 : vector<8x512xf32>
    %cst_49 = arith.constant 0.000000e+00 : f32
    %101 = vector.broadcast %cst_49 : f32 to vector<8x512xf32>
    %102 = arith.maximumf %100, %101 : vector<8x512xf32>
    %c7_i32_50 = arith.constant 7 : i32
    %103 = tpu.memref_slice %arg24[%c7_i32_50] : memref<9x!tpu.dma_semaphore, #tpu.memory_space<semaphore_mem>> -> memref<1x!tpu.dma_semaphore, #tpu.memory_space<semaphore_mem>>
    %104 = tpu.memref_squeeze %103 : memref<1x!tpu.dma_semaphore, #tpu.memory_space<semaphore_mem>> -> memref<!tpu.dma_semaphore, #tpu.memory_space<semaphore_mem>>
    tpu.wait_dma2 semaphore(%104 : memref<!tpu.dma_semaphore, #tpu.memory_space<semaphore_mem>>) src(%arg11 : memref<512x512xbf16, #tpu.memory_space<any>>) dst(%arg22 : memref<512x512xbf16, #tpu.memory_space<vmem>>)
    %c0_51 = arith.constant 0 : index
    %c0_52 = arith.constant 0 : index
    %105 = vector.load %arg22[%c0_51, %c0_52] : memref<512x512xbf16, #tpu.memory_space<vmem>>, vector<512x512xbf16>
    %c0_53 = arith.constant 0 : index
    %c2432 = arith.constant 2432 : index
    %106 = vector.load %arg2[%c0_53, %c2432] : memref<1x3072xf32, #tpu.memory_space<vmem>>, vector<1x512xf32>
    %107 = arith.truncf %102 : vector<8x512xf32> to vector<8x512xbf16>
    %cst_54 = arith.constant dense<0.000000e+00> : vector<8x512xf32>
    %108 = tpu.matmul %107, %105, %cst_54 {dimension_numbers = #tpu.dot_dimension_numbers<[1], [0], [0], [1], [0, 0, 1, 1], [], []>} : vector<8x512xbf16>, vector<512x512xbf16>, vector<8x512xf32> -> vector<8x512xf32>
    %109 = vector.broadcast %106 : vector<1x512xf32> to vector<8x512xf32>
    %110 = arith.addf %108, %109 : vector<8x512xf32>
    %cst_55 = arith.constant 0.000000e+00 : f32
    %111 = vector.broadcast %cst_55 : f32 to vector<8x512xf32>
    %112 = arith.maximumf %110, %111 : vector<8x512xf32>
    %c8_i32_56 = arith.constant 8 : i32
    %113 = tpu.memref_slice %arg24[%c8_i32_56] : memref<9x!tpu.dma_semaphore, #tpu.memory_space<semaphore_mem>> -> memref<1x!tpu.dma_semaphore, #tpu.memory_space<semaphore_mem>>
    %114 = tpu.memref_squeeze %113 : memref<1x!tpu.dma_semaphore, #tpu.memory_space<semaphore_mem>> -> memref<!tpu.dma_semaphore, #tpu.memory_space<semaphore_mem>>
    tpu.wait_dma2 semaphore(%114 : memref<!tpu.dma_semaphore, #tpu.memory_space<semaphore_mem>>) src(%arg12 : memref<512x128xbf16, #tpu.memory_space<any>>) dst(%arg23 : memref<512x128xbf16, #tpu.memory_space<vmem>>)
    %c0_57 = arith.constant 0 : index
    %c0_58 = arith.constant 0 : index
    %115 = vector.load %arg23[%c0_57, %c0_58] : memref<512x128xbf16, #tpu.memory_space<vmem>>, vector<512x128xbf16>
    %c0_59 = arith.constant 0 : index
    %c2944 = arith.constant 2944 : index
    %116 = vector.load %arg2[%c0_59, %c2944] : memref<1x3072xf32, #tpu.memory_space<vmem>>, vector<1x128xf32>
    %117 = arith.truncf %112 : vector<8x512xf32> to vector<8x512xbf16>
    %cst_60 = arith.constant dense<0.000000e+00> : vector<8x128xf32>
    %118 = tpu.matmul %117, %115, %cst_60 {dimension_numbers = #tpu.dot_dimension_numbers<[1], [0], [0], [1], [0, 0, 1, 1], [], []>} : vector<8x512xbf16>, vector<512x128xbf16>, vector<8x128xf32> -> vector<8x128xf32>
    %119 = vector.broadcast %116 : vector<1x128xf32> to vector<8x128xf32>
    %120 = arith.addf %118, %119 : vector<8x128xf32>
    %cst_61 = arith.constant 0.000000e+00 : f32
    %121 = vector.broadcast %cst_61 : f32 to vector<8x128xf32>
    %122 = arith.subf %121, %120 : vector<8x128xf32>
    %123 = math.exp %122 : vector<8x128xf32>
    %cst_62 = arith.constant 1.000000e+00 : f32
    %124 = vector.broadcast %cst_62 : f32 to vector<8x128xf32>
    %125 = arith.addf %124, %123 : vector<8x128xf32>
    %126 = tpu.reciprocal %125 {approx = true} : vector<8x128xf32> -> vector<8x128xf32>
    %c0_63 = arith.constant 0 : index
    %c0_64 = arith.constant 0 : index
    %127 = vector.load %arg13[%c0_63, %c0_64] : memref<8x128xf32, #tpu.memory_space<vmem>>, vector<8x128xf32>
    tpu.vector_store %arg13[%c0_63, %c0_64], %126 {strides = array<i32>} : memref<8x128xf32, #tpu.memory_space<vmem>>, vector<8x128xf32>,
    %c0_65 = arith.constant 0 : index
    %c0_66 = arith.constant 0 : index
    %128 = vector.load %arg14[%c0_65, %c0_66] : memref<8x128xf32, #tpu.memory_space<vmem>>, vector<8x128xf32>
    tpu.vector_store %arg14[%c0_65, %c0_66], %64 {strides = array<i32>} : memref<8x128xf32, #tpu.memory_space<vmem>>, vector<8x128xf32>,
    return
  }
}

</mosaic_0001>

<llo_original>
// kernel: vae_forward.1
$region0: #{vae_forward.1}
  #allocation0 [shape = 'u32[]', space=smem, size = 0x4, offset = 0x4, fixed_abs, tag = 'smem constant byte address 0x4 - core index']
  #allocation1 [shape = 'u32[72,128]{1,0:T(1,128)}', space=vmem, size = 0x9000, scoped, tag = 'internal scratch']
  #allocation2 [shape = 'bf16[512,512]{1,0:T(8,128)(2,1)}', space=vmem, size = 0x80000, scoped, tag = 'scratch operand']
  #allocation3 [shape = 'bf16[512,256]{1,0:T(8,128)(2,1)}', space=vmem, size = 0x40000, scoped, tag = 'scratch operand']
  #allocation4 [shape = 'bf16[256,128]{1,0:T(8,128)(2,1)}', space=vmem, size = 0x10000, scoped, tag = 'scratch operand']
  #allocation5 [shape = 'bf16[128,128]{1,0:T(8,128)(2,1)}', space=vmem, size = 0x8000, scoped, tag = 'scratch operand']
  #allocation6 [shape = 'bf16[64,128]{1,0:T(8,128)(2,1)}', space=vmem, size = 0x4000, scoped, tag = 'scratch operand']
  #allocation7 [shape = 'bf16[128,256]{1,0:T(8,128)(2,1)}', space=vmem, size = 0x10000, scoped, tag = 'scratch operand']
  #allocation8 [shape = 'bf16[256,512]{1,0:T(8,128)(2,1)}', space=vmem, size = 0x40000, scoped, tag = 'scratch operand']
  #allocation9 [shape = 'bf16[512,512]{1,0:T(8,128)(2,1)}', space=vmem, size = 0x80000, scoped, tag = 'scratch operand']
  #allocation10 [shape = 'bf16[512,128]{1,0:T(8,128)(2,1)}', space=vmem, size = 0x20000, scoped, tag = 'scratch operand']
  #allocation11 [shape = 's32[9]{0}', space=sflag, size = 0x24, scoped, tag = 'scratch operand']
  #allocation18 [shape = 's32[]', space=sflag, size = 0x4, offset = 0, fixed_abs, tag = 'sflag constant byte address 0x0 - dummy sync flag']
  #allocation19 [shape = 's32[]', space=sflag, size = 0x4, offset = 0, fixed_abs, tag = 'sflag constant byte address 0x0 - dummy sync flag']
  #allocation20 [shape = 'u32[]', space=smem, size = 0x4, offset = 0x44, fixed_abs, tag = 'smem constant byte address 0x44 - assertion arg 0']
  #allocation21 [shape = 'u32[]', space=smem, size = 0x4, offset = 0x48, fixed_abs, tag = 'smem constant byte address 0x48 - assertion arg 1']
  #allocation22 [shape = 's32[]', space=sflag, size = 0x4, offset = 0, fixed_abs, tag = 'sflag constant byte address 0x0 - dummy sync flag']
  #allocation23 [shape = 's32[]', space=sflag, size = 0x4, offset = 0, fixed_abs, tag = 'sflag constant byte address 0x0 - dummy sync flag']
  #allocation24 [shape = 's32[]', space=sflag, size = 0x4, offset = 0, fixed_abs, tag = 'sflag constant byte address 0x0 - dummy sync flag']
  #allocation25 [shape = 's32[]', space=sflag, size = 0x4, offset = 0, fixed_abs, tag = 'sflag constant byte address 0x0 - dummy sync flag']
  #allocation26 [shape = 's32[]', space=sflag, size = 0x4, offset = 0, fixed_abs, tag = 'sflag constant byte address 0x0 - dummy sync flag']
  #allocation27 [shape = 's32[]', space=sflag, size = 0x4, offset = 0, fixed_abs, tag = 'sflag constant byte address 0x0 - dummy sync flag']
  #allocation28 [shape = 's32[]', space=sflag, size = 0x4, offset = 0, fixed_abs, tag = 'sflag constant byte address 0x0 - dummy sync flag']
  #allocation29 [shape = 's32[]', space=sflag, size = 0x4, offset = 0, fixed_abs, tag = 'sflag constant byte address 0x0 - dummy sync flag']
  #allocation30 [shape = 's32[]', space=sflag, size = 0x4, offset = 0, fixed_abs, tag = 'sflag constant byte address 0x0 - dummy sync flag']
  #allocation31 [shape = 's32[]', space=sflag, size = 0x4, offset = 0, fixed_abs, tag = 'sflag constant byte address 0x0 - dummy sync flag']
  #allocation32 [shape = 's32[]', space=sflag, size = 0x4, offset = 0, fixed_abs, tag = 'sflag constant byte address 0x0 - dummy sync flag']
  #allocation33 [shape = 's32[]', space=sflag, size = 0x4, offset = 0, fixed_abs, tag = 'sflag constant byte address 0x0 - dummy sync flag']
  #allocation34 [shape = 's32[]', space=sflag, size = 0x4, offset = 0, fixed_abs, tag = 'sflag constant byte address 0x0 - dummy sync flag']
  #allocation35 [shape = 's32[]', space=sflag, size = 0x4, offset = 0, fixed_abs, tag = 'sflag constant byte address 0x0 - dummy sync flag']
  #allocation36 [shape = 's32[]', space=sflag, size = 0x4, offset = 0, fixed_abs, tag = 'sflag constant byte address 0x0 - dummy sync flag']
  #allocation37 [shape = 's32[]', space=sflag, size = 0x4, offset = 0, fixed_abs, tag = 'sflag constant byte address 0x0 - dummy sync flag']
  %s0 = inlined_call_operand.vmem [shape: f32[8,128], index: 0, kind: input, shape index: {}]
  %s1 = inlined_call_operand.vmem [shape: f32[8,64], index: 1, kind: input, shape index: {}]
  %s2 = inlined_call_operand.hbm [shape: f32[1,3072], index: 2, kind: input, shape index: {}]
  %s3 = inlined_call_operand.hbm [shape: bf16[128,512], index: 3, kind: input, shape index: {}]
  %s4 = inlined_call_operand.hbm [shape: bf16[512,512], index: 4, kind: input, shape index: {}]
  %s5 = inlined_call_operand.hbm [shape: bf16[512,256], index: 5, kind: input, shape index: {}]
  %s6 = inlined_call_operand.hbm [shape: bf16[256,128], index: 6, kind: input, shape index: {}]
  %s7 = inlined_call_operand.hbm [shape: bf16[128,128], index: 7, kind: input, shape index: {}]
  %s8 = inlined_call_operand.hbm [shape: bf16[64,128], index: 8, kind: input, shape index: {}]
  %s9 = inlined_call_operand.hbm [shape: bf16[128,256], index: 9, kind: input, shape index: {}]
  %s10 = inlined_call_operand.hbm [shape: bf16[256,512], index: 10, kind: input, shape index: {}]
  %s11 = inlined_call_operand.hbm [shape: bf16[512,512], index: 11, kind: input, shape index: {}]
  %s12 = inlined_call_operand.hbm [shape: bf16[512,128], index: 12, kind: input, shape index: {}]
  %s13 = inlined_call_operand.hbm [shape: f32[8,128], index: 13, kind: output, shape index: {0}]
  %s14 = inlined_call_operand.vmem [shape: f32[8,128], index: 14, kind: output, shape index: {1}]
  %15 = xla_tuple %s13, %s14
  %s16 = sld [smem:[#allocation0]]
  $region78: #{vae_forward.1} parent=0
    _
  %s18 = ssub.s32 1, %s16
  %s19 = scalar_select 0, %s18, %s16
  $region1: #{vae_forward.1} parent=0
    #allocation12 [shape = 'u8[12288]{0}', space=vmem, size = 0x3000, scoped, tag = 'input window, operand 2, single buffered']
    #allocation13 [shape = 's32[1]{0}', space=sflag, size = 0x4, scoped, tag = 'scoped memory for vae_forward.1']
    #allocation14 [shape = 's32[1]{0}', space=sflag, size = 0x4, scoped, tag = 'scoped memory for vae_forward.1']
    #allocation15 [shape = 'u8[131072]{0}', space=vmem, size = 0x20000, scoped, tag = 'input window, operand 3, single buffered']
    #allocation16 [shape = 's32[1]{0}', space=sflag, size = 0x4, scoped, tag = 'scoped memory for vae_forward.1']
    #allocation17 [shape = 'u8[4096]{0}', space=vmem, size = 0x1000, scoped, tag = 'output window, operand 0, single buffered']
    %20 = vsyncpa [#allocation13], 0
    %21 = vsyncpa [#allocation16], 0
    %22 = vsyncpa [#allocation14], 0
    // Predicated region
    $region2: #{vae_forward.1} parent=1 // pred_check
      _
    $region3: #{vae_forward.1} parent=1 // pred_check_branch
      %24 = sbr.rel (0) target = $region5
    $region4: #{vae_forward.1} parent=1 // pred_region
      _
    $region5: #{vae_forward.1} parent=1 // pred_fallthru
      _
    // Predicated region
    $region6: #{vae_forward.1} parent=1 // pred_check
      _
    $region7: #{vae_forward.1} parent=1 // pred_check_branch
      %26 = sbr.rel (0) target = $region9
    $region8: #{vae_forward.1} parent=1 // pred_region
      _
    $region9: #{vae_forward.1} parent=1 // pred_fallthru
      _
    // Predicated region
    $region10: #{vae_forward.1} parent=1 // pred_check
      _
    $region11: #{vae_forward.1} parent=1 // pred_check_branch
      %28 = sbr.rel (0) target = $region13
    $region12: #{vae_forward.1} parent=1 // pred_region
      %30 = vsyncadd [#allocation13], 0
      %s32 = sshll.u32 %s2, 4
      %s33 = int_to_ptr.hbm [resolvable:$true] %s32
      %s34 = sshll.u32 [#allocation12], 4
      %s35 = int_to_ptr.vmem [resolvable:$true] %s34
      %37 = dma.hbm_to_vmem [thread:$0]  %s33, 384, %s35, [#allocation13]
    $region13: #{vae_forward.1} parent=1 // pred_fallthru
      _
    // Predicated region
    $region14: #{vae_forward.1} parent=1 // pred_check
      _
    $region15: #{vae_forward.1} parent=1 // pred_check_branch
      %39 = sbr.rel (0) target = $region17
    $region16: #{vae_forward.1} parent=1 // pred_region
      %41 = vsyncadd [#allocation16], 0
      %s42 = sshll.u32 %s3, 4
      %s43 = int_to_ptr.hbm [resolvable:$true] %s42
      %s44 = sshll.u32 [#allocation15], 4
      %s45 = int_to_ptr.vmem [resolvable:$true] %s44
      %50 = dma.hbm_to_vmem [thread:$0]  %s43, 4096, %s45, [#allocation16], 256, 256, 16
    $region17: #{vae_forward.1} parent=1 // pred_fallthru
      _
    // Predicated region
    $region18: #{vae_forward.1} parent=1 // pred_check
      _
    $region19: #{vae_forward.1} parent=1 // pred_check_branch
      %52 = sbr.rel (0) target = $region21
    $region20: #{vae_forward.1} parent=1 // pred_region
      %54 = dma.done [#allocation13], 384
    $region21: #{vae_forward.1} parent=1 // pred_fallthru
      _
    // Predicated region
    $region22: #{vae_forward.1} parent=1 // pred_check
      _
    $region23: #{vae_forward.1} parent=1 // pred_check_branch
      %56 = sbr.rel (0) target = $region25
    $region24: #{vae_forward.1} parent=1 // pred_region
      %58 = dma.done [#allocation16], 4096
    $region25: #{vae_forward.1} parent=1 // pred_fallthru
      _
    // Predicated region
    $region26: #{vae_forward.1} parent=1 // pred_check
      _
    $region27: #{vae_forward.1} parent=1 // pred_check_branch
      %61 = sbr.rel target = $region29
    $region28: #{vae_forward.1} parent=1 // pred_region
      %62 = sst [smem:[#allocation20]] [#allocation19]
      %63 = sst [smem:[#allocation21]] [#allocation18]
    $region29: #{vae_forward.1} parent=1 // pred_fallthru
      _
    %65 = shalt.err (0)
    %s67 = sshll.u32 %s4, 4
    %s68 = int_to_ptr.hbm [resolvable:$true] %s67
    %s69 = sshll.u32 [#allocation2], 4
    %s70 = int_to_ptr.vmem [resolvable:$true] %s69
    %72 = dma.hbm_to_vmem [thread:$0]  %s68, 16384, %s70, [#allocation11]
    %s73 = scalar_lea.sflag [#allocation11], 1
    // Predicated region
    $region30: #{vae_forward.1} parent=1 // pred_check
      _
    $region31: #{vae_forward.1} parent=1 // pred_check_branch
      %75 = sbr.rel target = $region33
    $region32: #{vae_forward.1} parent=1 // pred_region
      %76 = sst [smem:[#allocation20]] [#allocation23]
      %77 = sst [smem:[#allocation21]] [#allocation22]
    $region33: #{vae_forward.1} parent=1 // pred_fallthru
      _
    %79 = shalt.err (0)
    %s81 = sshll.u32 %s5, 4
    %s82 = int_to_ptr.hbm [resolvable:$true] %s81
    %s83 = sshll.u32 [#allocation3], 4
    %s84 = int_to_ptr.vmem [resolvable:$true] %s83
    %86 = dma.hbm_to_vmem [thread:$0]  %s82, 8192, %s84, %s73
    %s87 = scalar_lea.sflag [#allocation11], 2
    // Predicated region
    $region34: #{vae_forward.1} parent=1 // pred_check
      _
    $region35: #{vae_forward.1} parent=1 // pred_check_branch
      %89 = sbr.rel target = $region37
    $region36: #{vae_forward.1} parent=1 // pred_region
      %90 = sst [smem:[#allocation20]] [#allocation25]
      %91 = sst [smem:[#allocation21]] [#allocation24]
    $region37: #{vae_forward.1} parent=1 // pred_fallthru
      _
    %93 = shalt.err (0)
    %s95 = sshll.u32 %s6, 4
    %s96 = int_to_ptr.hbm [resolvable:$true] %s95
    %s97 = sshll.u32 [#allocation4], 4
    %s98 = int_to_ptr.vmem [resolvable:$true] %s97
    %100 = dma.hbm_to_vmem [thread:$0]  %s96, 2048, %s98, %s87
    %s101 = scalar_lea.sflag [#allocation11], 3
    // Predicated region
    $region38: #{vae_forward.1} parent=1 // pred_check
      _
    $region39: #{vae_forward.1} parent=1 // pred_check_branch
      %103 = sbr.rel target = $region41
    $region40: #{vae_forward.1} parent=1 // pred_region
      %104 = sst [smem:[#allocation20]] [#allocation27]
      %105 = sst [smem:[#allocation21]] [#allocation26]
    $region41: #{vae_forward.1} parent=1 // pred_fallthru
      _
    %107 = shalt.err (0)
    %s109 = sshll.u32 %s7, 4
    %s110 = int_to_ptr.hbm [resolvable:$true] %s109
    %s111 = sshll.u32 [#allocation5], 4
    %s112 = int_to_ptr.vmem [resolvable:$true] %s111
    %114 = dma.hbm_to_vmem [thread:$0]  %s110, 1024, %s112, %s101
    %s115 = scalar_lea.sflag [#allocation11], 4
    // Predicated region
    $region42: #{vae_forward.1} parent=1 // pred_check
      _
    $region43: #{vae_forward.1} parent=1 // pred_check_branch
      %117 = sbr.rel target = $region45
    $region44: #{vae_forward.1} parent=1 // pred_region
      %118 = sst [smem:[#allocation20]] [#allocation29]
      %119 = sst [smem:[#allocation21]] [#allocation28]
    $region45: #{vae_forward.1} parent=1 // pred_fallthru
      _
    %121 = shalt.err (0)
    %s123 = sshll.u32 %s8, 4
    %s124 = int_to_ptr.hbm [resolvable:$true] %s123
    %s125 = sshll.u32 [#allocation6], 4
    %s126 = int_to_ptr.vmem [resolvable:$true] %s125
    %128 = dma.hbm_to_vmem [thread:$0]  %s124, 512, %s126, %s115
    %s129 = scalar_lea.sflag [#allocation11], 5
    // Predicated region
    $region46: #{vae_forward.1} parent=1 // pred_check
      _
    $region47: #{vae_forward.1} parent=1 // pred_check_branch
      %131 = sbr.rel target = $region49
    $region48: #{vae_forward.1} parent=1 // pred_region
      %132 = sst [smem:[#allocation20]] [#allocation31]
      %133 = sst [smem:[#allocation21]] [#allocation30]
    $region49: #{vae_forward.1} parent=1 // pred_fallthru
      _
    %135 = shalt.err (0)
    %s137 = sshll.u32 %s9, 4
    %s138 = int_to_ptr.hbm [resolvable:$true] %s137
    %s139 = sshll.u32 [#allocation7], 4
    %s140 = int_to_ptr.vmem [resolvable:$true] %s139
    %142 = dma.hbm_to_vmem [thread:$0]  %s138, 2048, %s140, %s129
    %s143 = scalar_lea.sflag [#allocation11], 6
    // Predicated region
    $region50: #{vae_forward.1} parent=1 // pred_check
      _
    $region51: #{vae_forward.1} parent=1 // pred_check_branch
      %145 = sbr.rel target = $region53
    $region52: #{vae_forward.1} parent=1 // pred_region
      %146 = sst [smem:[#allocation20]] [#allocation33]
      %147 = sst [smem:[#allocation21]] [#allocation32]
    $region53: #{vae_forward.1} parent=1 // pred_fallthru
      _
    %149 = shalt.err (0)
    %s151 = sshll.u32 %s10, 4
    %s152 = int_to_ptr.hbm [resolvable:$true] %s151
    %s153 = sshll.u32 [#allocation8], 4
    %s154 = int_to_ptr.vmem [resolvable:$true] %s153
    %156 = dma.hbm_to_vmem [thread:$0]  %s152, 8192, %s154, %s143
    %s157 = scalar_lea.sflag [#allocation11], 7
    // Predicated region
    $region54: #{vae_forward.1} parent=1 // pred_check
      _
    $region55: #{vae_forward.1} parent=1 // pred_check_branch
      %159 = sbr.rel target = $region57
    $region56: #{vae_forward.1} parent=1 // pred_region
      %160 = sst [smem:[#allocation20]] [#allocation35]
      %161 = sst [smem:[#allocation21]] [#allocation34]
    $region57: #{vae_forward.1} parent=1 // pred_fallthru
      _
    %163 = shalt.err (0)
    %s165 = sshll.u32 %s11, 4
    %s166 = int_to_ptr.hbm [resolvable:$true] %s165
    %s167 = sshll.u32 [#allocation9], 4
    %s168 = int_to_ptr.vmem [resolvable:$true] %s167
    %170 = dma.hbm_to_vmem [thread:$0]  %s166, 16384, %s168, %s157
    %s171 = scalar_lea.sflag [#allocation11], 8
    // Predicated region
    $region58: #{vae_forward.1} parent=1 // pred_check
      _
    $region59: #{vae_forward.1} parent=1 // pred_check_branch
      %173 = sbr.rel target = $region61
    $region60: #{vae_forward.1} parent=1 // pred_region
      %174 = sst [smem:[#allocation20]] [#allocation37]
      %175 = sst [smem:[#allocation21]] [#allocation36]
    $region61: #{vae_forward.1} parent=1 // pred_fallthru
      _
    %177 = shalt.err (0)
    %s179 = sshll.u32 %s12, 4
    %s180 = int_to_ptr.hbm [resolvable:$true] %s179
    %s181 = sshll.u32 [#allocation10], 4
    %s182 = int_to_ptr.vmem [resolvable:$true] %s181
    %184 = dma.hbm_to_vmem [thread:$0]  %s180, 4096, %s182, %s171
    %v185 = vld [vmem:[%s0] sm:$0xff]
    %v186 = vld [vmem:[#allocation15] sm:$0xff]
    %v187 = vld [vmem:[#allocation15 + $0x8] sm:$0xff]
    %v188 = vld [vmem:[#allocation15 + $0x10] sm:$0xff]
    %v189 = vld [vmem:[#allocation15 + $0x18] sm:$0xff]
    %v190 = vld [vmem:[#allocation15 + $0x20] sm:$0xff]
    %v191 = vld [vmem:[#allocation15 + $0x28] sm:$0xff]
    %v192 = vld [vmem:[#allocation15 + $0x30] sm:$0xff]
    %v193 = vld [vmem:[#allocation15 + $0x38] sm:$0xff]
    %v194 = vld [vmem:[#allocation15 + $0x40] sm:$0xff]
    %v195 = vld [vmem:[#allocation15 + $0x48] sm:$0xff]
    %v196 = vld [vmem:[#allocation15 + $0x50] sm:$0xff]
    %v197 = vld [vmem:[#allocation15 + $0x58] sm:$0xff]
    %v198 = vld [vmem:[#allocation15 + $0x60] sm:$0xff]
    %v199 = vld [vmem:[#allocation15 + $0x68] sm:$0xff]
    %v200 = vld [vmem:[#allocation15 + $0x70] sm:$0xff]
    %v201 = vld [vmem:[#allocation15 + $0x78] sm:$0xff]
    %v202 = vld [vmem:[#allocation15 + $0x80] sm:$0xff]
    %v203 = vld [vmem:[#allocation15 + $0x88] sm:$0xff]
    %v204 = vld [vmem:[#allocation15 + $0x90] sm:$0xff]
    %v205 = vld [vmem:[#allocation15 + $0x98] sm:$0xff]
    %v206 = vld [vmem:[#allocation15 + $0xa0] sm:$0xff]
    %v207 = vld [vmem:[#allocation15 + $0xa8] sm:$0xff]
    %v208 = vld [vmem:[#allocation15 + $0xb0] sm:$0xff]
    %v209 = vld [vmem:[#allocation15 + $0xb8] sm:$0xff]
    %v210 = vld [vmem:[#allocation15 + $0xc0] sm:$0xff]
    %v211 = vld [vmem:[#allocation15 + $0xc8] sm:$0xff]
    %v212 = vld [vmem:[#allocation15 + $0xd0] sm:$0xff]
    %v213 = vld [vmem:[#allocation15 + $0xd8] sm:$0xff]
    %v214 = vld [vmem:[#allocation15 + $0xe0] sm:$0xff]
    %v215 = vld [vmem:[#allocation15 + $0xe8] sm:$0xff]
    %v216 = vld [vmem:[#allocation15 + $0xf0] sm:$0xff]
    %v217 = vld [vmem:[#allocation15 + $0xf8] sm:$0xff]
    %v218 = vld [vmem:[#allocation12] sm:$0xf]
    %v219 = vpack.c.bf16 %v185, %v185
    %v221 = vperm.slane %v218, 0
    %v222 = vperm.slane %v218, 1
    %v223 = vperm.slane %v218, 2
    %v224 = vperm.slane %v218, 3
    %v261 = vunpack.c.l.b16 %v186
    %v262 = vunpack.c.h.b16 %v186
    %v263 = vunpack.c.l.b16 %v187
    %v264 = vunpack.c.h.b16 %v187
    %v265 = vunpack.c.l.b16 %v188
    %v266 = vunpack.c.h.b16 %v188
    %v267 = vunpack.c.l.b16 %v189
    %v268 = vunpack.c.h.b16 %v189
    %v269 = vunpack.c.l.b16 %v190
    %v270 = vunpack.c.h.b16 %v190
    %v271 = vunpack.c.l.b16 %v191
    %v272 = vunpack.c.h.b16 %v191
    %v273 = vunpack.c.l.b16 %v192
    %v274 = vunpack.c.h.b16 %v192
    %v275 = vunpack.c.l.b16 %v193
    %v276 = vunpack.c.h.b16 %v193
    %v277 = vunpack.c.l.b16 %v194
    %v278 = vunpack.c.h.b16 %v194
    %v279 = vunpack.c.l.b16 %v195
    %v280 = vunpack.c.h.b16 %v195
    %v281 = vunpack.c.l.b16 %v196
    %v282 = vunpack.c.h.b16 %v196
    %v283 = vunpack.c.l.b16 %v197
    %v284 = vunpack.c.h.b16 %v197
    %v285 = vunpack.c.l.b16 %v198
    %v286 = vunpack.c.h.b16 %v198
    %v287 = vunpack.c.l.b16 %v199
    %v288 = vunpack.c.h.b16 %v199
    %v289 = vunpack.c.l.b16 %v200
    %v290 = vunpack.c.h.b16 %v200
    %v291 = vunpack.c.l.b16 %v201
    %v292 = vunpack.c.h.b16 %v201
    %v293 = vunpack.c.l.b16 %v202
    %v294 = vunpack.c.h.b16 %v202
    %v295 = vunpack.c.l.b16 %v203
    %v296 = vunpack.c.h.b16 %v203
    %v297 = vunpack.c.l.b16 %v204
    %v298 = vunpack.c.h.b16 %v204
    %v299 = vunpack.c.l.b16 %v205
    %v300 = vunpack.c.h.b16 %v205
    %v301 = vunpack.c.l.b16 %v206
    %v302 = vunpack.c.h.b16 %v206
    %v303 = vunpack.c.l.b16 %v207
    %v304 = vunpack.c.h.b16 %v207
    %v305 = vunpack.c.l.b16 %v208
    %v306 = vunpack.c.h.b16 %v208
    %v307 = vunpack.c.l.b16 %v209
    %v308 = vunpack.c.h.b16 %v209
    %v309 = vunpack.c.l.b16 %v210
    %v310 = vunpack.c.h.b16 %v210
    %v311 = vunpack.c.l.b16 %v211
    %v312 = vunpack.c.h.b16 %v211
    %v313 = vunpack.c.l.b16 %v212
    %v314 = vunpack.c.h.b16 %v212
    %v315 = vunpack.c.l.b16 %v213
    %v316 = vunpack.c.h.b16 %v213
    %v317 = vunpack.c.l.b16 %v214
    %v318 = vunpack.c.h.b16 %v214
    %v319 = vunpack.c.l.b16 %v215
    %v320 = vunpack.c.h.b16 %v215
    %v321 = vunpack.c.l.b16 %v216
    %v322 = vunpack.c.h.b16 %v216
    %v323 = vunpack.c.l.b16 %v217
    %v324 = vunpack.c.h.b16 %v217
    %v325 = vpack.c.b16 %v265, %v261
    %v326 = vpack.c.b16 %v266, %v262
    %v327 = vpack.c.b16 %v267, %v263
    %v328 = vpack.c.b16 %v268, %v264
    %v329 = vpack.c.b16 %v273, %v269
    %v330 = vpack.c.b16 %v274, %v270
    %v331 = vpack.c.b16 %v275, %v271
    %v332 = vpack.c.b16 %v276, %v272
    %v333 = vpack.c.b16 %v281, %v277
    %v334 = vpack.c.b16 %v282, %v278
    %v335 = vpack.c.b16 %v283, %v279
    %v336 = vpack.c.b16 %v284, %v280
    %v337 = vpack.c.b16 %v289, %v285
    %v338 = vpack.c.b16 %v290, %v286
    %v339 = vpack.c.b16 %v291, %v287
    %v340 = vpack.c.b16 %v292, %v288
    %v341 = vpack.c.b16 %v297, %v293
    %v342 = vpack.c.b16 %v298, %v294
    %v343 = vpack.c.b16 %v299, %v295
    %v344 = vpack.c.b16 %v300, %v296
    %v345 = vpack.c.b16 %v305, %v301
    %v346 = vpack.c.b16 %v306, %v302
    %v347 = vpack.c.b16 %v307, %v303
    %v348 = vpack.c.b16 %v308, %v304
    %v349 = vpack.c.b16 %v313, %v309
    %v350 = vpack.c.b16 %v314, %v310
    %v351 = vpack.c.b16 %v315, %v311
    %v352 = vpack.c.b16 %v316, %v312
    %v353 = vpack.c.b16 %v321, %v317
    %v354 = vpack.c.b16 %v322, %v318
    %v355 = vpack.c.b16 %v323, %v319
    %v356 = vpack.c.b16 %v324, %v320
    %389 = vmatpush.bf16.msra.mxu0 %v353
    %390 = vmatpush.bf16.msra.mxu0 %v349
    %391 = vmatpush.bf16.msra.mxu0 %v345
    %392 = vmatpush.bf16.msra.mxu0 %v341
    %393 = vmatpush.bf16.msra.mxu0 %v337
    %394 = vmatpush.bf16.msra.mxu0 %v333
    %395 = vmatpush.bf16.msra.mxu0 %v329
    %396 = vmatpush.bf16.msra.mxu0 %v325
    %397 = vmatmul.bf16.gmra.mxu0 %v219
    %v398 = vpop.f32.mrf.mxu0
    %v399 = vadd.f32 %v221, %v398
    %v400 = vpop.f32.mrf.mxu0
    %401 = vdwg.mxu0
    %402 = vmatpush.bf16.msra.mxu0 %v354
    %403 = vmatpush.bf16.msra.mxu0 %v350
    %404 = vmatpush.bf16.msra.mxu0 %v346
    %405 = vmatpush.bf16.msra.mxu0 %v342
    %406 = vmatpush.bf16.msra.mxu0 %v338
    %407 = vmatpush.bf16.msra.mxu0 %v334
    %408 = vmatpush.bf16.msra.mxu0 %v330
    %409 = vmatpush.bf16.msra.mxu0 %v326
    %410 = vmatmul.bf16.gmra.mxu0 %v219
    %v411 = vpop.f32.mrf.mxu0
    %v412 = vadd.f32 %v222, %v411
    %v413 = vpop.f32.mrf.mxu0
    %414 = vdwg.mxu0
    %415 = vmatpush.bf16.msra.mxu0 %v355
    %416 = vmatpush.bf16.msra.mxu0 %v351
    %417 = vmatpush.bf16.msra.mxu0 %v347
    %418 = vmatpush.bf16.msra.mxu0 %v343
    %419 = vmatpush.bf16.msra.mxu0 %v339
    %420 = vmatpush.bf16.msra.mxu0 %v335
    %421 = vmatpush.bf16.msra.mxu0 %v331
    %422 = vmatpush.bf16.msra.mxu0 %v327
    %423 = vmatmul.bf16.gmra.mxu0 %v219
    %v424 = vpop.f32.mrf.mxu0
    %v425 = vadd.f32 %v223, %v424
    %v426 = vpop.f32.mrf.mxu0
    %427 = vdwg.mxu0
    %428 = vmatpush.bf16.msra.mxu0 %v356
    %429 = vmatpush.bf16.msra.mxu0 %v352
    %430 = vmatpush.bf16.msra.mxu0 %v348
    %431 = vmatpush.bf16.msra.mxu0 %v344
    %432 = vmatpush.bf16.msra.mxu0 %v340
    %433 = vmatpush.bf16.msra.mxu0 %v336
    %434 = vmatpush.bf16.msra.mxu0 %v332
    %435 = vmatpush.bf16.msra.mxu0 %v328
    %436 = vmatmul.bf16.gmra.mxu0 %v219
    %v437 = vpop.f32.mrf.mxu0
    %v438 = vadd.f32 %v224, %v437
    %v439 = vpop.f32.mrf.mxu0
    %440 = vdwg.mxu0
    %v441 = vmax.f32 %v399, 0.0
    %v442 = vmax.f32 %v412, 0.0
    %v443 = vmax.f32 %v425, 0.0
    %v444 = vmax.f32 %v438, 0.0
    %s445 = smul.u32 4, 64
    %s446 = smul.u32 %s445, 4
    %s447 = sshll.u32 %s446, 4
    %448 = dma.done [#allocation11], %s447
    %v449 = vld [vmem:[#allocation2] sm:$0xff]
    %v450 = vld [vmem:[#allocation2 + $0x8] sm:$0xff]
    %v451 = vld [vmem:[#allocation2 + $0x10] sm:$0xff]
    %v452 = vld [vmem:[#allocation2 + $0x18] sm:$0xff]
    %v453 = vld [vmem:[#allocation2 + $0x20] sm:$0xff]
    %v454 = vld [vmem:[#allocation2 + $0x28] sm:$0xff]
    %v455 = vld [vmem:[#allocation2 + $0x30] sm:$0xff]
    %v456 = vld [vmem:[#allocation2 + $0x38] sm:$0xff]
    %v457 = vld [vmem:[#allocation2 + $0x40] sm:$0xff]
    %v458 = vld [vmem:[#allocation2 + $0x48] sm:$0xff]
    %v459 = vld [vmem:[#allocation2 + $0x50] sm:$0xff]
    %v460 = vld [vmem:[#allocation2 + $0x58] sm:$0xff]
    %v461 = vld [vmem:[#allocation2 + $0x60] sm:$0xff]
    %v462 = vld [vmem:[#allocation2 + $0x68] sm:$0xff]
    %v463 = vld [vmem:[#allocation2 + $0x70] sm:$0xff]
    %v464 = vld [vmem:[#allocation2 + $0x78] sm:$0xff]
    %v465 = vld [vmem:[#allocation2 + $0x80] sm:$0xff]
    %v466 = vld [vmem:[#allocation2 + $0x88] sm:$0xff]
    %v467 = vld [vmem:[#allocation2 + $0x90] sm:$0xff]
    %v468 = vld [vmem:[#allocation2 + $0x98] sm:$0xff]
    %v469 = vld [vmem:[#allocation2 + $0xa0] sm:$0xff]
    %v470 = vld [vmem:[#allocation2 + $0xa8] sm:$0xff]
    %v471 = vld [vmem:[#allocation2 + $0xb0] sm:$0xff]
    %v472 = vld [vmem:[#allocation2 + $0xb8] sm:$0xff]
    %v473 = vld [vmem:[#allocation2 + $0xc0] sm:$0xff]
    %v474 = vld [vmem:[#allocation2 + $0xc8] sm:$0xff]
    %v475 = vld [vmem:[#allocation2 + $0xd0] sm:$0xff]
    %v476 = vld [vmem:[#allocation2 + $0xd8] sm:$0xff]
    %v477 = vld [vmem:[#allocation2 + $0xe0] sm:$0xff]
    %v478 = vld [vmem:[#allocation2 + $0xe8] sm:$0xff]
    %v479 = vld [vmem:[#allocation2 + $0xf0] sm:$0xff]
    %v480 = vld [vmem:[#allocation2 + $0xf8] sm:$0xff]
    %v481 = vld [vmem:[#allocation2 + $0x100] sm:$0xff]
    %v482 = vld [vmem:[#allocation2 + $0x108] sm:$0xff]
    %v483 = vld [vmem:[#allocation2 + $0x110] sm:$0xff]
    %v484 = vld [vmem:[#allocation2 + $0x118] sm:$0xff]
    %v485 = vld [vmem:[#allocation2 + $0x120] sm:$0xff]
    %v486 = vld [vmem:[#allocation2 + $0x128] sm:$0xff]
    %v487 = vld [vmem:[#allocation2 + $0x130] sm:$0xff]
    %v488 = vld [vmem:[#allocation2 + $0x138] sm:$0xff]
    %v489 = vld [vmem:[#allocation2 + $0x140] sm:$0xff]
    %v490 = vld [vmem:[#allocation2 + $0x148] sm:$0xff]
    %v491 = vld [vmem:[#allocation2 + $0x150] sm:$0xff]
    %v492 = vld [vmem:[#allocation2 + $0x158] sm:$0xff]
    %v493 = vld [vmem:[#allocation2 + $0x160] sm:$0xff]
    %v494 = vld [vmem:[#allocation2 + $0x168] sm:$0xff]
    %v495 = vld [vmem:[#allocation2 + $0x170] sm:$0xff]
    %v496 = vld [vmem:[#allocation2 + $0x178] sm:$0xff]
    %v497 = vld [vmem:[#allocation2 + $0x180] sm:$0xff]
    %v498 = vld [vmem:[#allocation2 + $0x188] sm:$0xff]
    %v499 = vld [vmem:[#allocation2 + $0x190] sm:$0xff]
    %v500 = vld [vmem:[#allocation2 + $0x198] sm:$0xff]
    %v501 = vld [vmem:[#allocation2 + $0x1a0] sm:$0xff]
    %v502 = vld [vmem:[#allocation2 + $0x1a8] sm:$0xff]
    %v503 = vld [vmem:[#allocation2 + $0x1b0] sm:$0xff]
    %v504 = vld [vmem:[#allocation2 + $0x1b8] sm:$0xff]
    %v505 = vld [vmem:[#allocation2 + $0x1c0] sm:$0xff]
    %v506 = vld [vmem:[#allocation2 + $0x1c8] sm:$0xff]
    %v507 = vld [vmem:[#allocation2 + $0x1d0] sm:$0xff]
    %v508 = vld [vmem:[#allocation2 + $0x1d8] sm:$0xff]
    %v509 = vld [vmem:[#allocation2 + $0x1e0] sm:$0xff]
    %v510 = vld [vmem:[#allocation2 + $0x1e8] sm:$0xff]
    %v511 = vld [vmem:[#allocation2 + $0x1f0] sm:$0xff]
    %v512 = vld [vmem:[#allocation2 + $0x1f8] sm:$0xff]
    %v513 = vld [vmem:[#allocation2 + $0x200] sm:$0xff]
    %v514 = vld [vmem:[#allocation2 + $0x208] sm:$0xff]
    %v515 = vld [vmem:[#allocation2 + $0x210] sm:$0xff]
    %v516 = vld [vmem:[#allocation2 + $0x218] sm:$0xff]
    %v517 = vld [vmem:[#allocation2 + $0x220] sm:$0xff]
    %v518 = vld [vmem:[#allocation2 + $0x228] sm:$0xff]
    %v519 = vld [vmem:[#allocation2 + $0x230] sm:$0xff]
    %v520 = vld [vmem:[#allocation2 + $0x238] sm:$0xff]
    %v521 = vld [vmem:[#allocation2 + $0x240] sm:$0xff]
    %v522 = vld [vmem:[#allocation2 + $0x248] sm:$0xff]
    %v523 = vld [vmem:[#allocation2 + $0x250] sm:$0xff]
    %v524 = vld [vmem:[#allocation2 + $0x258] sm:$0xff]
    %v525 = vld [vmem:[#allocation2 + $0x260] sm:$0xff]
    %v526 = vld [vmem:[#allocation2 + $0x268] sm:$0xff]
    %v527 = vld [vmem:[#allocation2 + $0x270] sm:$0xff]
    %v528 = vld [vmem:[#allocation2 + $0x278] sm:$0xff]
    %v529 = vld [vmem:[#allocation2 + $0x280] sm:$0xff]
    %v530 = vld [vmem:[#allocation2 + $0x288] sm:$0xff]
    %v531 = vld [vmem:[#allocation2 + $0x290] sm:$0xff]
    %v532 = vld [vmem:[#allocation2 + $0x298] sm:$0xff]
    %v533 = vld [vmem:[#allocation2 + $0x2a0] sm:$0xff]
    %v534 = vld [vmem:[#allocation2 + $0x2a8] sm:$0xff]
    %v535 = vld [vmem:[#allocation2 + $0x2b0] sm:$0xff]
    %v536 = vld [vmem:[#allocation2 + $0x2b8] sm:$0xff]
    %v537 = vld [vmem:[#allocation2 + $0x2c0] sm:$0xff]
    %v538 = vld [vmem:[#allocation2 + $0x2c8] sm:$0xff]
    %v539 = vld [vmem:[#allocation2 + $0x2d0] sm:$0xff]
    %v540 = vld [vmem:[#allocation2 + $0x2d8] sm:$0xff]
    %v541 = vld [vmem:[#allocation2 + $0x2e0] sm:$0xff]
    %v542 = vld [vmem:[#allocation2 + $0x2e8] sm:$0xff]
    %v543 = vld [vmem:[#allocation2 + $0x2f0] sm:$0xff]
    %v544 = vld [vmem:[#allocation2 + $0x2f8] sm:$0xff]
    %v545 = vld [vmem:[#allocation2 + $0x300] sm:$0xff]
    %v546 = vld [vmem:[#allocation2 + $0x308] sm:$0xff]
    %v547 = vld [vmem:[#allocation2 + $0x310] sm:$0xff]
    %v548 = vld [vmem:[#allocation2 + $0x318] sm:$0xff]
    %v549 = vld [vmem:[#allocation2 + $0x320] sm:$0xff]
    %v550 = vld [vmem:[#allocation2 + $0x328] sm:$0xff]
    %v551 = vld [vmem:[#allocation2 + $0x330] sm:$0xff]
    %v552 = vld [vmem:[#allocation2 + $0x338] sm:$0xff]
    %v553 = vld [vmem:[#allocation2 + $0x340] sm:$0xff]
    %v554 = vld [vmem:[#allocation2 + $0x348] sm:$0xff]
    %v555 = vld [vmem:[#allocation2 + $0x350] sm:$0xff]
    %v556 = vld [vmem:[#allocation2 + $0x358] sm:$0xff]
    %v557 = vld [vmem:[#allocation2 + $0x360] sm:$0xff]
    %v558 = vld [vmem:[#allocation2 + $0x368] sm:$0xff]
    %v559 = vld [vmem:[#allocation2 + $0x370] sm:$0xff]
    %v560 = vld [vmem:[#allocation2 + $0x378] sm:$0xff]
    %v561 = vld [vmem:[#allocation2 + $0x380] sm:$0xff]
    %v562 = vld [vmem:[#allocation2 + $0x388] sm:$0xff]
    %v563 = vld [vmem:[#allocation2 + $0x390] sm:$0xff]
    %v564 = vld [vmem:[#allocation2 + $0x398] sm:$0xff]
    %v565 = vld [vmem:[#allocation2 + $0x3a0] sm:$0xff]
    %v566 = vld [vmem:[#allocation2 + $0x3a8] sm:$0xff]
    %v567 = vld [vmem:[#allocation2 + $0x3b0] sm:$0xff]
    %v568 = vld [vmem:[#allocation2 + $0x3b8] sm:$0xff]
    %v569 = vld [vmem:[#allocation2 + $0x3c0] sm:$0xff]
    %v570 = vld [vmem:[#allocation2 + $0x3c8] sm:$0xff]
    %v571 = vld [vmem:[#allocation2 + $0x3d0] sm:$0xff]
    %v572 = vld [vmem:[#allocation2 + $0x3d8] sm:$0xff]
    %v573 = vld [vmem:[#allocation2 + $0x3e0] sm:$0xff]
    %v574 = vld [vmem:[#allocation2 + $0x3e8] sm:$0xff]
    %v575 = vld [vmem:[#allocation2 + $0x3f0] sm:$0xff]
    %v576 = vld [vmem:[#allocation2 + $0x3f8] sm:$0xff]
    %v577 = vld [vmem:[#allocation12 + $0x4] sm:$0xf]
    %v578 = vpack.c.bf16 %v441, %v441
    %v579 = vpack.c.bf16 %v442, %v442
    %v580 = vpack.c.bf16 %v443, %v443
    %v581 = vpack.c.bf16 %v444, %v444
    %v583 = vperm.slane %v577, 0
    %v584 = vperm.slane %v577, 1
    %v585 = vperm.slane %v577, 2
    %v586 = vperm.slane %v577, 3
    %v719 = vunpack.c.l.b16 %v449
    %v720 = vunpack.c.h.b16 %v449
    %v721 = vunpack.c.l.b16 %v450
    %v722 = vunpack.c.h.b16 %v450
    %v723 = vunpack.c.l.b16 %v451
    %v724 = vunpack.c.h.b16 %v451
    %v725 = vunpack.c.l.b16 %v452
    %v726 = vunpack.c.h.b16 %v452
    %v727 = vunpack.c.l.b16 %v453
    %v728 = vunpack.c.h.b16 %v453
    %v729 = vunpack.c.l.b16 %v454
    %v730 = vunpack.c.h.b16 %v454
    %v731 = vunpack.c.l.b16 %v455
    %v732 = vunpack.c.h.b16 %v455
    %v733 = vunpack.c.l.b16 %v456
    %v734 = vunpack.c.h.b16 %v456
    %v735 = vunpack.c.l.b16 %v457
    %v736 = vunpack.c.h.b16 %v457
    %v737 = vunpack.c.l.b16 %v458
    %v738 = vunpack.c.h.b16 %v458
    %v739 = vunpack.c.l.b16 %v459
    %v740 = vunpack.c.h.b16 %v459
    %v741 = vunpack.c.l.b16 %v460
    %v742 = vunpack.c.h.b16 %v460
    %v743 = vunpack.c.l.b16 %v461
    %v744 = vunpack.c.h.b16 %v461
    %v745 = vunpack.c.l.b16 %v462
    %v746 = vunpack.c.h.b16 %v462
    %v747 = vunpack.c.l.b16 %v463
    %v748 = vunpack.c.h.b16 %v463
    %v749 = vunpack.c.l.b16 %v464
    %v750 = vunpack.c.h.b16 %v464
    %v751 = vunpack.c.l.b16 %v465
    %v752 = vunpack.c.h.b16 %v465
    %v753 = vunpack.c.l.b16 %v466
    %v754 = vunpack.c.h.b16 %v466
    %v755 = vunpack.c.l.b16 %v467
    %v756 = vunpack.c.h.b16 %v467
    %v757 = vunpack.c.l.b16 %v468
    %v758 = vunpack.c.h.b16 %v468
    %v759 = vunpack.c.l.b16 %v469
    %v760 = vunpack.c.h.b16 %v469
    %v761 = vunpack.c.l.b16 %v470
    %v762 = vunpack.c.h.b16 %v470
    %v763 = vunpack.c.l.b16 %v471
    %v764 = vunpack.c.h.b16 %v471
    %v765 = vunpack.c.l.b16 %v472
    %v766 = vunpack.c.h.b16 %v472
    %v767 = vunpack.c.l.b16 %v473
    %v768 = vunpack.c.h.b16 %v473
    %v769 = vunpack.c.l.b16 %v474
    %v770 = vunpack.c.h.b16 %v474
    %v771 = vunpack.c.l.b16 %v475
    %v772 = vunpack.c.h.b16 %v475
    %v773 = vunpack.c.l.b16 %v476
    %v774 = vunpack.c.h.b16 %v476
    %v775 = vunpack.c.l.b16 %v477
    %v776 = vunpack.c.h.b16 %v477
    %v777 = vunpack.c.l.b16 %v478
    %v778 = vunpack.c.h.b16 %v478
    %v779 = vunpack.c.l.b16 %v479
    %v780 = vunpack.c.h.b16 %v479
    %v781 = vunpack.c.l.b16 %v480
    %v782 = vunpack.c.h.b16 %v480
    %v783 = vunpack.c.l.b16 %v481
    %v784 = vunpack.c.h.b16 %v481
    %v785 = vunpack.c.l.b16 %v482
    %v786 = vunpack.c.h.b16 %v482
    %v787 = vunpack.c.l.b16 %v483
    %v788 = vunpack.c.h.b16 %v483
    %v789 = vunpack.c.l.b16 %v484
    %v790 = vunpack.c.h.b16 %v484
    %v791 = vunpack.c.l.b16 %v485
    %v792 = vunpack.c.h.b16 %v485
    %v793 = vunpack.c.l.b16 %v486
    %v794 = vunpack.c.h.b16 %v486
    %v795 = vunpack.c.l.b16 %v487
    %v796 = vunpack.c.h.b16 %v487
    %v797 = vunpack.c.l.b16 %v488
    %v798 = vunpack.c.h.b16 %v488
    %v799 = vunpack.c.l.b16 %v489
    %v800 = vunpack.c.h.b16 %v489
    %v801 = vunpack.c.l.b16 %v490
    %v802 = vunpack.c.h.b16 %v490
    %v803 = vunpack.c.l.b16 %v491
    %v804 = vunpack.c.h.b16 %v491
    %v805 = vunpack.c.l.b16 %v492
    %v806 = vunpack.c.h.b16 %v492
    %v807 = vunpack.c.l.b16 %v493
    %v808 = vunpack.c.h.b16 %v493
    %v809 = vunpack.c.l.b16 %v494
    %v810 = vunpack.c.h.b16 %v494
    %v811 = vunpack.c.l.b16 %v495
    %v812 = vunpack.c.h.b16 %v495
    %v813 = vunpack.c.l.b16 %v496
    %v814 = vunpack.c.h.b16 %v496
    %v815 = vunpack.c.l.b16 %v497
    %v816 = vunpack.c.h.b16 %v497
    %v817 = vunpack.c.l.b16 %v498
    %v818 = vunpack.c.h.b16 %v498
    %v819 = vunpack.c.l.b16 %v499
    %v820 = vunpack.c.h.b16 %v499
    %v821 = vunpack.c.l.b16 %v500
    %v822 = vunpack.c.h.b16 %v500
    %v823 = vunpack.c.l.b16 %v501
    %v824 = vunpack.c.h.b16 %v501
    %v825 = vunpack.c.l.b16 %v502
    %v826 = vunpack.c.h.b16 %v502
    %v827 = vunpack.c.l.b16 %v503
    %v828 = vunpack.c.h.b16 %v503
    %v829 = vunpack.c.l.b16 %v504
    %v830 = vunpack.c.h.b16 %v504
    %v831 = vunpack.c.l.b16 %v505
    %v832 = vunpack.c.h.b16 %v505
    %v833 = vunpack.c.l.b16 %v506
    %v834 = vunpack.c.h.b16 %v506
    %v835 = vunpack.c.l.b16 %v507
    %v836 = vunpack.c.h.b16 %v507
    %v837 = vunpack.c.l.b16 %v508
    %v838 = vunpack.c.h.b16 %v508
    %v839 = vunpack.c.l.b16 %v509
    %v840 = vunpack.c.h.b16 %v509
    %v841 = vunpack.c.l.b16 %v510
    %v842 = vunpack.c.h.b16 %v510
    %v843 = vunpack.c.l.b16 %v511
    %v844 = vunpack.c.h.b16 %v511
    %v845 = vunpack.c.l.b16 %v512
    %v846 = vunpack.c.h.b16 %v512
    %v847 = vunpack.c.l.b16 %v513
    %v848 = vunpack.c.h.b16 %v513
    %v849 = vunpack.c.l.b16 %v514
    %v850 = vunpack.c.h.b16 %v514
    %v851 = vunpack.c.l.b16 %v515
    %v852 = vunpack.c.h.b16 %v515
    %v853 = vunpack.c.l.b16 %v516
    %v854 = vunpack.c.h.b16 %v516
    %v855 = vunpack.c.l.b16 %v517
    %v856 = vunpack.c.h.b16 %v517
    %v857 = vunpack.c.l.b16 %v518
    %v858 = vunpack.c.h.b16 %v518
    %v859 = vunpack.c.l.b16 %v519
    %v860 = vunpack.c.h.b16 %v519
    %v861 = vunpack.c.l.b16 %v520
    %v862 = vunpack.c.h.b16 %v520
    %v863 = vunpack.c.l.b16 %v521
    %v864 = vunpack.c.h.b16 %v521
    %v865 = vunpack.c.l.b16 %v522
    %v866 = vunpack.c.h.b16 %v522
    %v867 = vunpack.c.l.b16 %v523
    %v868 = vunpack.c.h.b16 %v523
    %v869 = vunpack.c.l.b16 %v524
    %v870 = vunpack.c.h.b16 %v524
    %v871 = vunpack.c.l.b16 %v525
    %v872 = vunpack.c.h.b16 %v525
    %v873 = vunpack.c.l.b16 %v526
    %v874 = vunpack.c.h.b16 %v526
    %v875 = vunpack.c.l.b16 %v527
    %v876 = vunpack.c.h.b16 %v527
    %v877 = vunpack.c.l.b16 %v528
    %v878 = vunpack.c.h.b16 %v528
    %v879 = vunpack.c.l.b16 %v529
    %v880 = vunpack.c.h.b16 %v529
    %v881 = vunpack.c.l.b16 %v530
    %v882 = vunpack.c.h.b16 %v530
    %v883 = vunpack.c.l.b16 %v531
    %v884 = vunpack.c.h.b16 %v531
    %v885 = vunpack.c.l.b16 %v532
    %v886 = vunpack.c.h.b16 %v532
    %v887 = vunpack.c.l.b16 %v533
    %v888 = vunpack.c.h.b16 %v533
    %v889 = vunpack.c.l.b16 %v534
    %v890 = vunpack.c.h.b16 %v534
    %v891 = vunpack.c.l.b16 %v535
    %v892 = vunpack.c.h.b16 %v535
    %v893 = vunpack.c.l.b16 %v536
    %v894 = vunpack.c.h.b16 %v536
    %v895 = vunpack.c.l.b16 %v537
    %v896 = vunpack.c.h.b16 %v537
    %v897 = vunpack.c.l.b16 %v538
    %v898 = vunpack.c.h.b16 %v538
    %v899 = vunpack.c.l.b16 %v539
    %v900 = vunpack.c.h.b16 %v539
    %v901 = vunpack.c.l.b16 %v540
    %v902 = vunpack.c.h.b16 %v540
    %v903 = vunpack.c.l.b16 %v541
    %v904 = vunpack.c.h.b16 %v541
    %v905 = vunpack.c.l.b16 %v542
    %v906 = vunpack.c.h.b16 %v542
    %v907 = vunpack.c.l.b16 %v543
    %v908 = vunpack.c.h.b16 %v543
    %v909 = vunpack.c.l.b16 %v544
    %v910 = vunpack.c.h.b16 %v544
    %v911 = vunpack.c.l.b16 %v545
    %v912 = vunpack.c.h.b16 %v545
    %v913 = vunpack.c.l.b16 %v546
    %v914 = vunpack.c.h.b16 %v546
    %v915 = vunpack.c.l.b16 %v547
    %v916 = vunpack.c.h.b16 %v547
    %v917 = vunpack.c.l.b16 %v548
    %v918 = vunpack.c.h.b16 %v548
    %v919 = vunpack.c.l.b16 %v549
    %v920 = vunpack.c.h.b16 %v549
    %v921 = vunpack.c.l.b16 %v550
    %v922 = vunpack.c.h.b16 %v550
    %v923 = vunpack.c.l.b16 %v551
    %v924 = vunpack.c.h.b16 %v551
    %v925 = vunpack.c.l.b16 %v552
    %v926 = vunpack.c.h.b16 %v552
    %v927 = vunpack.c.l.b16 %v553
    %v928 = vunpack.c.h.b16 %v553
    %v929 = vunpack.c.l.b16 %v554
    %v930 = vunpack.c.h.b16 %v554
    %v931 = vunpack.c.l.b16 %v555
    %v932 = vunpack.c.h.b16 %v555
    %v933 = vunpack.c.l.b16 %v556
    %v934 = vunpack.c.h.b16 %v556
    %v935 = vunpack.c.l.b16 %v557
    %v936 = vunpack.c.h.b16 %v557
    %v937 = vunpack.c.l.b16 %v558
    %v938 = vunpack.c.h.b16 %v558
    %v939 = vunpack.c.l.b16 %v559
    %v940 = vunpack.c.h.b16 %v559
    %v941 = vunpack.c.l.b16 %v560
    %v942 = vunpack.c.h.b16 %v560
    %v943 = vunpack.c.l.b16 %v561
    %v944 = vunpack.c.h.b16 %v561
    %v945 = vunpack.c.l.b16 %v562
    %v946 = vunpack.c.h.b16 %v562
    %v947 = vunpack.c.l.b16 %v563
    %v948 = vunpack.c.h.b16 %v563
    %v949 = vunpack.c.l.b16 %v564
    %v950 = vunpack.c.h.b16 %v564
    %v951 = vunpack.c.l.b16 %v565
    %v952 = vunpack.c.h.b16 %v565
    %v953 = vunpack.c.l.b16 %v566
    %v954 = vunpack.c.h.b16 %v566
    %v955 = vunpack.c.l.b16 %v567
    %v956 = vunpack.c.h.b16 %v567
    %v957 = vunpack.c.l.b16 %v568
    %v958 = vunpack.c.h.b16 %v568
    %v959 = vunpack.c.l.b16 %v569
    %v960 = vunpack.c.h.b16 %v569
    %v961 = vunpack.c.l.b16 %v570
    %v962 = vunpack.c.h.b16 %v570
    %v963 = vunpack.c.l.b16 %v571
    %v964 = vunpack.c.h.b16 %v571
    %v965 = vunpack.c.l.b16 %v572
    %v966 = vunpack.c.h.b16 %v572
    %v967 = vunpack.c.l.b16 %v573
    %v968 = vunpack.c.h.b16 %v573
    %v969 = vunpack.c.l.b16 %v574
    %v970 = vunpack.c.h.b16 %v574
    %v971 = vunpack.c.l.b16 %v575
    %v972 = vunpack.c.h.b16 %v575
    %v973 = vunpack.c.l.b16 %v576
    %v974 = vunpack.c.h.b16 %v576
    %v975 = vpack.c.b16 %v723, %v719
    %v976 = vpack.c.b16 %v724, %v720
    %v977 = vpack.c.b16 %v725, %v721
    %v978 = vpack.c.b16 %v726, %v722
    %v979 = vpack.c.b16 %v731, %v727
    %v980 = vpack.c.b16 %v732, %v728
    %v981 = vpack.c.b16 %v733, %v729
    %v982 = vpack.c.b16 %v734, %v730
    %v983 = vpack.c.b16 %v739, %v735
    %v984 = vpack.c.b16 %v740, %v736
    %v985 = vpack.c.b16 %v741, %v737
    %v986 = vpack.c.b16 %v742, %v738
    %v987 = vpack.c.b16 %v747, %v743
    %v988 = vpack.c.b16 %v748, %v744
    %v989 = vpack.c.b16 %v749, %v745
    %v990 = vpack.c.b16 %v750, %v746
    %v991 = vpack.c.b16 %v755, %v751
    %v992 = vpack.c.b16 %v756, %v752
    %v993 = vpack.c.b16 %v757, %v753
    %v994 = vpack.c.b16 %v758, %v754
    %v995 = vpack.c.b16 %v763, %v759
    %v996 = vpack.c.b16 %v764, %v760
    %v997 = vpack.c.b16 %v765, %v761
    %v998 = vpack.c.b16 %v766, %v762
    %v999 = vpack.c.b16 %v771, %v767
    %v1000 = vpack.c.b16 %v772, %v768
    %v1001 = vpack.c.b16 %v773, %v769
    %v1002 = vpack.c.b16 %v774, %v770
    %v1003 = vpack.c.b16 %v779, %v775
    %v1004 = vpack.c.b16 %v780, %v776
    %v1005 = vpack.c.b16 %v781, %v777
    %v1006 = vpack.c.b16 %v782, %v778
    %v1007 = vpack.c.b16 %v787, %v783
    %v1008 = vpack.c.b16 %v788, %v784
    %v1009 = vpack.c.b16 %v789, %v785
    %v1010 = vpack.c.b16 %v790, %v786
    %v1011 = vpack.c.b16 %v795, %v791
    %v1012 = vpack.c.b16 %v796, %v792
    %v1013 = vpack.c.b16 %v797, %v793
    %v1014 = vpack.c.b16 %v798, %v794
    %v1015 = vpack.c.b16 %v803, %v799
    %v1016 = vpack.c.b16 %v804, %v800
    %v1017 = vpack.c.b16 %v805, %v801
    %v1018 = vpack.c.b16 %v806, %v802
    %v1019 = vpack.c.b16 %v811, %v807
    %v1020 = vpack.c.b16 %v812, %v808
    %v1021 = vpack.c.b16 %v813, %v809
    %v1022 = vpack.c.b16 %v814, %v810
    %v1023 = vpack.c.b16 %v819, %v815
    %v1024 = vpack.c.b16 %v820, %v816
    %v1025 = vpack.c.b16 %v821, %v817
    %v1026 = vpack.c.b16 %v822, %v818
    %v1027 = vpack.c.b16 %v827, %v823
    %v1028 = vpack.c.b16 %v828, %v824
    %v1029 = vpack.c.b16 %v829, %v825
    %v1030 = vpack.c.b16 %v830, %v826
    %v1031 = vpack.c.b16 %v835, %v831
    %v1032 = vpack.c.b16 %v836, %v832
    %v1033 = vpack.c.b16 %v837, %v833
    %v1034 = vpack.c.b16 %v838, %v834
    %v1035 = vpack.c.b16 %v843, %v839
    %v1036 = vpack.c.b16 %v844, %v840
    %v1037 = vpack.c.b16 %v845, %v841
    %v1038 = vpack.c.b16 %v846, %v842
    %v1039 = vpack.c.b16 %v851, %v847
    %v1040 = vpack.c.b16 %v852, %v848
    %v1041 = vpack.c.b16 %v853, %v849
    %v1042 = vpack.c.b16 %v854, %v850
    %v1043 = vpack.c.b16 %v859, %v855
    %v1044 = vpack.c.b16 %v860, %v856
    %v1045 = vpack.c.b16 %v861, %v857
    %v1046 = vpack.c.b16 %v862, %v858
    %v1047 = vpack.c.b16 %v867, %v863
    %v1048 = vpack.c.b16 %v868, %v864
    %v1049 = vpack.c.b16 %v869, %v865
    %v1050 = vpack.c.b16 %v870, %v866
    %v1051 = vpack.c.b16 %v875, %v871
    %v1052 = vpack.c.b16 %v876, %v872
    %v1053 = vpack.c.b16 %v877, %v873
    %v1054 = vpack.c.b16 %v878, %v874
    %v1055 = vpack.c.b16 %v883, %v879
    %v1056 = vpack.c.b16 %v884, %v880
    %v1057 = vpack.c.b16 %v885, %v881
    %v1058 = vpack.c.b16 %v886, %v882
    %v1059 = vpack.c.b16 %v891, %v887
    %v1060 = vpack.c.b16 %v892, %v888
    %v1061 = vpack.c.b16 %v893, %v889
    %v1062 = vpack.c.b16 %v894, %v890
    %v1063 = vpack.c.b16 %v899, %v895
    %v1064 = vpack.c.b16 %v900, %v896
    %v1065 = vpack.c.b16 %v901, %v897
    %v1066 = vpack.c.b16 %v902, %v898
    %v1067 = vpack.c.b16 %v907, %v903
    %v1068 = vpack.c.b16 %v908, %v904
    %v1069 = vpack.c.b16 %v909, %v905
    %v1070 = vpack.c.b16 %v910, %v906
    %v1071 = vpack.c.b16 %v915, %v911
    %v1072 = vpack.c.b16 %v916, %v912
    %v1073 = vpack.c.b16 %v917, %v913
    %v1074 = vpack.c.b16 %v918, %v914
    %v1075 = vpack.c.b16 %v923, %v919
    %v1076 = vpack.c.b16 %v924, %v920
    %v1077 = vpack.c.b16 %v925, %v921
    %v1078 = vpack.c.b16 %v926, %v922
    %v1079 = vpack.c.b16 %v931, %v927
    %v1080 = vpack.c.b16 %v932, %v928
    %v1081 = vpack.c.b16 %v933, %v929
    %v1082 = vpack.c.b16 %v934, %v930
    %v1083 = vpack.c.b16 %v939, %v935
    %v1084 = vpack.c.b16 %v940, %v936
    %v1085 = vpack.c.b16 %v941, %v937
    %v1086 = vpack.c.b16 %v942, %v938
    %v1087 = vpack.c.b16 %v947, %v943
    %v1088 = vpack.c.b16 %v948, %v944
    %v1089 = vpack.c.b16 %v949, %v945
    %v1090 = vpack.c.b16 %v950, %v946
    %v1091 = vpack.c.b16 %v955, %v951
    %v1092 = vpack.c.b16 %v956, %v952
    %v1093 = vpack.c.b16 %v957, %v953
    %v1094 = vpack.c.b16 %v958, %v954
    %v1095 = vpack.c.b16 %v963, %v959
    %v1096 = vpack.c.b16 %v964, %v960
    %v1097 = vpack.c.b16 %v965, %v961
    %v1098 = vpack.c.b16 %v966, %v962
    %v1099 = vpack.c.b16 %v971, %v967
    %v1100 = vpack.c.b16 %v972, %v968
    %v1101 = vpack.c.b16 %v973, %v969
    %v1102 = vpack.c.b16 %v974, %v970
    %1231 = vmatpush.bf16.msra.mxu0 %v1003
    %1232 = vmatpush.bf16.msra.mxu0 %v999
    %1233 = vmatpush.bf16.msra.mxu0 %v995
    %1234 = vmatpush.bf16.msra.mxu0 %v991
    %1235 = vmatpush.bf16.msra.mxu0 %v987
    %1236 = vmatpush.bf16.msra.mxu0 %v983
    %1237 = vmatpush.bf16.msra.mxu0 %v979
    %1238 = vmatpush.bf16.msra.mxu0 %v975
    %1239 = vmatmul.bf16.gmra.mxu0 %v578
    %v1240 = vpop.f32.mrf.mxu0
    %v1241 = vadd.f32 %v583, %v1240
    %v1242 = vpop.f32.mrf.mxu0
    %1243 = vdwg.mxu0
    %1244 = vmatpush.bf16.msra.mxu0 %v1035
    %1245 = vmatpush.bf16.msra.mxu0 %v1031
    %1246 = vmatpush.bf16.msra.mxu0 %v1027
    %1247 = vmatpush.bf16.msra.mxu0 %v1023
    %1248 = vmatpush.bf16.msra.mxu0 %v1019
    %1249 = vmatpush.bf16.msra.mxu0 %v1015
    %1250 = vmatpush.bf16.msra.mxu0 %v1011
    %1251 = vmatpush.bf16.msra.mxu0 %v1007
    %1252 = vmatmul.bf16.gmra.mxu0 %v579
    %v1253 = vpop.f32.mrf.mxu0
    %v1254 = vadd.f32 %v1241, %v1253
    %v1255 = vpop.f32.mrf.mxu0
    %1256 = vdwg.mxu0
    %1257 = vmatpush.bf16.msra.mxu0 %v1067
    %1258 = vmatpush.bf16.msra.mxu0 %v1063
    %1259 = vmatpush.bf16.msra.mxu0 %v1059
    %1260 = vmatpush.bf16.msra.mxu0 %v1055
    %1261 = vmatpush.bf16.msra.mxu0 %v1051
    %1262 = vmatpush.bf16.msra.mxu0 %v1047
    %1263 = vmatpush.bf16.msra.mxu0 %v1043
    %1264 = vmatpush.bf16.msra.mxu0 %v1039
    %1265 = vmatmul.bf16.gmra.mxu0 %v580
    %v1266 = vpop.f32.mrf.mxu0
    %v1267 = vadd.f32 %v1254, %v1266
    %v1268 = vpop.f32.mrf.mxu0
    %1269 = vdwg.mxu0
    %1270 = vmatpush.bf16.msra.mxu0 %v1099
    %1271 = vmatpush.bf16.msra.mxu0 %v1095
    %1272 = vmatpush.bf16.msra.mxu0 %v1091
    %1273 = vmatpush.bf16.msra.mxu0 %v1087
    %1274 = vmatpush.bf16.msra.mxu0 %v1083
    %1275 = vmatpush.bf16.msra.mxu0 %v1079
    %1276 = vmatpush.bf16.msra.mxu0 %v1075
    %1277 = vmatpush.bf16.msra.mxu0 %v1071
    %1278 = vmatmul.bf16.gmra.mxu0 %v581
    %v1279 = vpop.f32.mrf.mxu0
    %v1280 = vadd.f32 %v1267, %v1279
    %v1281 = vpop.f32.mrf.mxu0
    %1282 = vdwg.mxu0
    %1283 = vmatpush.bf16.msra.mxu0 %v1004
    %1284 = vmatpush.bf16.msra.mxu0 %v1000
    %1285 = vmatpush.bf16.msra.mxu0 %v996
    %1286 = vmatpush.bf16.msra.mxu0 %v992
    %1287 = vmatpush.bf16.msra.mxu0 %v988
    %1288 = vmatpush.bf16.msra.mxu0 %v984
    %1289 = vmatpush.bf16.msra.mxu0 %v980
    %1290 = vmatpush.bf16.msra.mxu0 %v976
    %1291 = vmatmul.bf16.gmra.mxu0 %v578
    %v1292 = vpop.f32.mrf.mxu0
    %v1293 = vadd.f32 %v584, %v1292
    %v1294 = vpop.f32.mrf.mxu0
    %1295 = vdwg.mxu0
    %1296 = vmatpush.bf16.msra.mxu0 %v1036
    %1297 = vmatpush.bf16.msra.mxu0 %v1032
    %1298 = vmatpush.bf16.msra.mxu0 %v1028
    %1299 = vmatpush.bf16.msra.mxu0 %v1024
    %1300 = vmatpush.bf16.msra.mxu0 %v1020
    %1301 = vmatpush.bf16.msra.mxu0 %v1016
    %1302 = vmatpush.bf16.msra.mxu0 %v1012
    %1303 = vmatpush.bf16.msra.mxu0 %v1008
    %1304 = vmatmul.bf16.gmra.mxu0 %v579
    %v1305 = vpop.f32.mrf.mxu0
    %v1306 = vadd.f32 %v1293, %v1305
    %v1307 = vpop.f32.mrf.mxu0
    %1308 = vdwg.mxu0
    %1309 = vmatpush.bf16.msra.mxu0 %v1068
    %1310 = vmatpush.bf16.msra.mxu0 %v1064
    %1311 = vmatpush.bf16.msra.mxu0 %v1060
    %1312 = vmatpush.bf16.msra.mxu0 %v1056
    %1313 = vmatpush.bf16.msra.mxu0 %v1052
    %1314 = vmatpush.bf16.msra.mxu0 %v1048
    %1315 = vmatpush.bf16.msra.mxu0 %v1044
    %1316 = vmatpush.bf16.msra.mxu0 %v1040
    %1317 = vmatmul.bf16.gmra.mxu0 %v580
    %v1318 = vpop.f32.mrf.mxu0
    %v1319 = vadd.f32 %v1306, %v1318
    %v1320 = vpop.f32.mrf.mxu0
    %1321 = vdwg.mxu0
    %1322 = vmatpush.bf16.msra.mxu0 %v1100
    %1323 = vmatpush.bf16.msra.mxu0 %v1096
    %1324 = vmatpush.bf16.msra.mxu0 %v1092
    %1325 = vmatpush.bf16.msra.mxu0 %v1088
    %1326 = vmatpush.bf16.msra.mxu0 %v1084
    %1327 = vmatpush.bf16.msra.mxu0 %v1080
    %1328 = vmatpush.bf16.msra.mxu0 %v1076
    %1329 = vmatpush.bf16.msra.mxu0 %v1072
    %1330 = vmatmul.bf16.gmra.mxu0 %v581
    %v1331 = vpop.f32.mrf.mxu0
    %v1332 = vadd.f32 %v1319, %v1331
    %v1333 = vpop.f32.mrf.mxu0
    %1334 = vdwg.mxu0
    %1335 = vmatpush.bf16.msra.mxu0 %v1005
    %1336 = vmatpush.bf16.msra.mxu0 %v1001
    %1337 = vmatpush.bf16.msra.mxu0 %v997
    %1338 = vmatpush.bf16.msra.mxu0 %v993
    %1339 = vmatpush.bf16.msra.mxu0 %v989
    %1340 = vmatpush.bf16.msra.mxu0 %v985
    %1341 = vmatpush.bf16.msra.mxu0 %v981
    %1342 = vmatpush.bf16.msra.mxu0 %v977
    %1343 = vmatmul.bf16.gmra.mxu0 %v578
    %v1344 = vpop.f32.mrf.mxu0
    %v1345 = vadd.f32 %v585, %v1344
    %v1346 = vpop.f32.mrf.mxu0
    %1347 = vdwg.mxu0
    %1348 = vmatpush.bf16.msra.mxu0 %v1037
    %1349 = vmatpush.bf16.msra.mxu0 %v1033
    %1350 = vmatpush.bf16.msra.mxu0 %v1029
    %1351 = vmatpush.bf16.msra.mxu0 %v1025
    %1352 = vmatpush.bf16.msra.mxu0 %v1021
    %1353 = vmatpush.bf16.msra.mxu0 %v1017
    %1354 = vmatpush.bf16.msra.mxu0 %v1013
    %1355 = vmatpush.bf16.msra.mxu0 %v1009
    %1356 = vmatmul.bf16.gmra.mxu0 %v579
    %v1357 = vpop.f32.mrf.mxu0
    %v1358 = vadd.f32 %v1345, %v1357
    %v1359 = vpop.f32.mrf.mxu0
    %1360 = vdwg.mxu0
    %1361 = vmatpush.bf16.msra.mxu0 %v1069
    %1362 = vmatpush.bf16.msra.mxu0 %v1065
    %1363 = vmatpush.bf16.msra.mxu0 %v1061
    %1364 = vmatpush.bf16.msra.mxu0 %v1057
    %1365 = vmatpush.bf16.msra.mxu0 %v1053
    %1366 = vmatpush.bf16.msra.mxu0 %v1049
    %1367 = vmatpush.bf16.msra.mxu0 %v1045
    %1368 = vmatpush.bf16.msra.mxu0 %v1041
    %1369 = vmatmul.bf16.gmra.mxu0 %v580
    %v1370 = vpop.f32.mrf.mxu0
    %v1371 = vadd.f32 %v1358, %v1370
    %v1372 = vpop.f32.mrf.mxu0
    %1373 = vdwg.mxu0
    %1374 = vmatpush.bf16.msra.mxu0 %v1101
    %1375 = vmatpush.bf16.msra.mxu0 %v1097
    %1376 = vmatpush.bf16.msra.mxu0 %v1093
    %1377 = vmatpush.bf16.msra.mxu0 %v1089
    %1378 = vmatpush.bf16.msra.mxu0 %v1085
    %1379 = vmatpush.bf16.msra.mxu0 %v1081
    %1380 = vmatpush.bf16.msra.mxu0 %v1077
    %1381 = vmatpush.bf16.msra.mxu0 %v1073
    %1382 = vmatmul.bf16.gmra.mxu0 %v581
    %v1383 = vpop.f32.mrf.mxu0
    %v1384 = vadd.f32 %v1371, %v1383
    %v1385 = vpop.f32.mrf.mxu0
    %1386 = vdwg.mxu0
    %1387 = vmatpush.bf16.msra.mxu0 %v1006
    %1388 = vmatpush.bf16.msra.mxu0 %v1002
    %1389 = vmatpush.bf16.msra.mxu0 %v998
    %1390 = vmatpush.bf16.msra.mxu0 %v994
    %1391 = vmatpush.bf16.msra.mxu0 %v990
    %1392 = vmatpush.bf16.msra.mxu0 %v986
    %1393 = vmatpush.bf16.msra.mxu0 %v982
    %1394 = vmatpush.bf16.msra.mxu0 %v978
    %1395 = vmatmul.bf16.gmra.mxu0 %v578
    %v1396 = vpop.f32.mrf.mxu0
    %v1397 = vadd.f32 %v586, %v1396
    %v1398 = vpop.f32.mrf.mxu0
    %1399 = vdwg.mxu0
    %1400 = vmatpush.bf16.msra.mxu0 %v1038
    %1401 = vmatpush.bf16.msra.mxu0 %v1034
    %1402 = vmatpush.bf16.msra.mxu0 %v1030
    %1403 = vmatpush.bf16.msra.mxu0 %v1026
    %1404 = vmatpush.bf16.msra.mxu0 %v1022
    %1405 = vmatpush.bf16.msra.mxu0 %v1018
    %1406 = vmatpush.bf16.msra.mxu0 %v1014
    %1407 = vmatpush.bf16.msra.mxu0 %v1010
    %1408 = vmatmul.bf16.gmra.mxu0 %v579
    %v1409 = vpop.f32.mrf.mxu0
    %v1410 = vadd.f32 %v1397, %v1409
    %v1411 = vpop.f32.mrf.mxu0
    %1412 = vdwg.mxu0
    %1413 = vmatpush.bf16.msra.mxu0 %v1070
    %1414 = vmatpush.bf16.msra.mxu0 %v1066
    %1415 = vmatpush.bf16.msra.mxu0 %v1062
    %1416 = vmatpush.bf16.msra.mxu0 %v1058
    %1417 = vmatpush.bf16.msra.mxu0 %v1054
    %1418 = vmatpush.bf16.msra.mxu0 %v1050
    %1419 = vmatpush.bf16.msra.mxu0 %v1046
    %1420 = vmatpush.bf16.msra.mxu0 %v1042
    %1421 = vmatmul.bf16.gmra.mxu0 %v580
    %v1422 = vpop.f32.mrf.mxu0
    %v1423 = vadd.f32 %v1410, %v1422
    %v1424 = vpop.f32.mrf.mxu0
    %1425 = vdwg.mxu0
    %1426 = vmatpush.bf16.msra.mxu0 %v1102
    %1427 = vmatpush.bf16.msra.mxu0 %v1098
    %1428 = vmatpush.bf16.msra.mxu0 %v1094
    %1429 = vmatpush.bf16.msra.mxu0 %v1090
    %1430 = vmatpush.bf16.msra.mxu0 %v1086
    %1431 = vmatpush.bf16.msra.mxu0 %v1082
    %1432 = vmatpush.bf16.msra.mxu0 %v1078
    %1433 = vmatpush.bf16.msra.mxu0 %v1074
    %1434 = vmatmul.bf16.gmra.mxu0 %v581
    %v1435 = vpop.f32.mrf.mxu0
    %v1436 = vadd.f32 %v1423, %v1435
    %v1437 = vpop.f32.mrf.mxu0
    %1438 = vdwg.mxu0
    %v1439 = vmax.f32 %v1280, 0.0
    %v1440 = vmax.f32 %v1332, 0.0
    %v1441 = vmax.f32 %v1384, 0.0
    %v1442 = vmax.f32 %v1436, 0.0
    %s1443 = smul.u32 %s445, 2
    %s1444 = sshll.u32 %s1443, 4
    %1445 = dma.done %s73, %s1444
    %v1446 = vld [vmem:[#allocation3] sm:$0xff]
    %v1447 = vld [vmem:[#allocation3 + $0x8] sm:$0xff]
    %v1448 = vld [vmem:[#allocation3 + $0x10] sm:$0xff]
    %v1449 = vld [vmem:[#allocation3 + $0x18] sm:$0xff]
    %v1450 = vld [vmem:[#allocation3 + $0x20] sm:$0xff]
    %v1451 = vld [vmem:[#allocation3 + $0x28] sm:$0xff]
    %v1452 = vld [vmem:[#allocation3 + $0x30] sm:$0xff]
    %v1453 = vld [vmem:[#allocation3 + $0x38] sm:$0xff]
    %v1454 = vld [vmem:[#allocation3 + $0x40] sm:$0xff]
    %v1455 = vld [vmem:[#allocation3 + $0x48] sm:$0xff]
    %v1456 = vld [vmem:[#allocation3 + $0x50] sm:$0xff]
    %v1457 = vld [vmem:[#allocation3 + $0x58] sm:$0xff]
    %v1458 = vld [vmem:[#allocation3 + $0x60] sm:$0xff]
    %v1459 = vld [vmem:[#allocation3 + $0x68] sm:$0xff]
    %v1460 = vld [vmem:[#allocation3 + $0x70] sm:$0xff]
    %v1461 = vld [vmem:[#allocation3 + $0x78] sm:$0xff]
    %v1462 = vld [vmem:[#allocation3 + $0x80] sm:$0xff]
    %v1463 = vld [vmem:[#allocation3 + $0x88] sm:$0xff]
    %v1464 = vld [vmem:[#allocation3 + $0x90] sm:$0xff]
    %v1465 = vld [vmem:[#allocation3 + $0x98] sm:$0xff]
    %v1466 = vld [vmem:[#allocation3 + $0xa0] sm:$0xff]
    %v1467 = vld [vmem:[#allocation3 + $0xa8] sm:$0xff]
    %v1468 = vld [vmem:[#allocation3 + $0xb0] sm:$0xff]
    %v1469 = vld [vmem:[#allocation3 + $0xb8] sm:$0xff]
    %v1470 = vld [vmem:[#allocation3 + $0xc0] sm:$0xff]
    %v1471 = vld [vmem:[#allocation3 + $0xc8] sm:$0xff]
    %v1472 = vld [vmem:[#allocation3 + $0xd0] sm:$0xff]
    %v1473 = vld [vmem:[#allocation3 + $0xd8] sm:$0xff]
    %v1474 = vld [vmem:[#allocation3 + $0xe0] sm:$0xff]
    %v1475 = vld [vmem:[#allocation3 + $0xe8] sm:$0xff]
    %v1476 = vld [vmem:[#allocation3 + $0xf0] sm:$0xff]
    %v1477 = vld [vmem:[#allocation3 + $0xf8] sm:$0xff]
    %v1478 = vld [vmem:[#allocation3 + $0x100] sm:$0xff]
    %v1479 = vld [vmem:[#allocation3 + $0x108] sm:$0xff]
    %v1480 = vld [vmem:[#allocation3 + $0x110] sm:$0xff]
    %v1481 = vld [vmem:[#allocation3 + $0x118] sm:$0xff]
    %v1482 = vld [vmem:[#allocation3 + $0x120] sm:$0xff]
    %v1483 = vld [vmem:[#allocation3 + $0x128] sm:$0xff]
    %v1484 = vld [vmem:[#allocation3 + $0x130] sm:$0xff]
    %v1485 = vld [vmem:[#allocation3 + $0x138] sm:$0xff]
    %v1486 = vld [vmem:[#allocation3 + $0x140] sm:$0xff]
    %v1487 = vld [vmem:[#allocation3 + $0x148] sm:$0xff]
    %v1488 = vld [vmem:[#allocation3 + $0x150] sm:$0xff]
    %v1489 = vld [vmem:[#allocation3 + $0x158] sm:$0xff]
    %v1490 = vld [vmem:[#allocation3 + $0x160] sm:$0xff]
    %v1491 = vld [vmem:[#allocation3 + $0x168] sm:$0xff]
    %v1492 = vld [vmem:[#allocation3 + $0x170] sm:$0xff]
    %v1493 = vld [vmem:[#allocation3 + $0x178] sm:$0xff]
    %v1494 = vld [vmem:[#allocation3 + $0x180] sm:$0xff]
    %v1495 = vld [vmem:[#allocation3 + $0x188] sm:$0xff]
    %v1496 = vld [vmem:[#allocation3 + $0x190] sm:$0xff]
    %v1497 = vld [vmem:[#allocation3 + $0x198] sm:$0xff]
    %v1498 = vld [vmem:[#allocation3 + $0x1a0] sm:$0xff]
    %v1499 = vld [vmem:[#allocation3 + $0x1a8] sm:$0xff]
    %v1500 = vld [vmem:[#allocation3 + $0x1b0] sm:$0xff]
    %v1501 = vld [vmem:[#allocation3 + $0x1b8] sm:$0xff]
    %v1502 = vld [vmem:[#allocation3 + $0x1c0] sm:$0xff]
    %v1503 = vld [vmem:[#allocation3 + $0x1c8] sm:$0xff]
    %v1504 = vld [vmem:[#allocation3 + $0x1d0] sm:$0xff]
    %v1505 = vld [vmem:[#allocation3 + $0x1d8] sm:$0xff]
    %v1506 = vld [vmem:[#allocation3 + $0x1e0] sm:$0xff]
    %v1507 = vld [vmem:[#allocation3 + $0x1e8] sm:$0xff]
    %v1508 = vld [vmem:[#allocation3 + $0x1f0] sm:$0xff]
    %v1509 = vld [vmem:[#allocation3 + $0x1f8] sm:$0xff]
    %v1510 = vld [vmem:[#allocation12 + $0x8] sm:$0x3]
    %v1511 = vpack.c.bf16 %v1439, %v1439
    %v1512 = vpack.c.bf16 %v1440, %v1440
    %v1513 = vpack.c.bf16 %v1441, %v1441
    %v1514 = vpack.c.bf16 %v1442, %v1442
    %v1516 = vperm.slane %v1510, 0
    %v1517 = vperm.slane %v1510, 1
    %v1584 = vunpack.c.l.b16 %v1446
    %v1585 = vunpack.c.h.b16 %v1446
    %v1586 = vunpack.c.l.b16 %v1447
    %v1587 = vunpack.c.h.b16 %v1447
    %v1588 = vunpack.c.l.b16 %v1448
    %v1589 = vunpack.c.h.b16 %v1448
    %v1590 = vunpack.c.l.b16 %v1449
    %v1591 = vunpack.c.h.b16 %v1449
    %v1592 = vunpack.c.l.b16 %v1450
    %v1593 = vunpack.c.h.b16 %v1450
    %v1594 = vunpack.c.l.b16 %v1451
    %v1595 = vunpack.c.h.b16 %v1451
    %v1596 = vunpack.c.l.b16 %v1452
    %v1597 = vunpack.c.h.b16 %v1452
    %v1598 = vunpack.c.l.b16 %v1453
    %v1599 = vunpack.c.h.b16 %v1453
    %v1600 = vunpack.c.l.b16 %v1454
    %v1601 = vunpack.c.h.b16 %v1454
    %v1602 = vunpack.c.l.b16 %v1455
    %v1603 = vunpack.c.h.b16 %v1455
    %v1604 = vunpack.c.l.b16 %v1456
    %v1605 = vunpack.c.h.b16 %v1456
    %v1606 = vunpack.c.l.b16 %v1457
    %v1607 = vunpack.c.h.b16 %v1457
    %v1608 = vunpack.c.l.b16 %v1458
    %v1609 = vunpack.c.h.b16 %v1458
    %v1610 = vunpack.c.l.b16 %v1459
    %v1611 = vunpack.c.h.b16 %v1459
    %v1612 = vunpack.c.l.b16 %v1460
    %v1613 = vunpack.c.h.b16 %v1460
    %v1614 = vunpack.c.l.b16 %v1461
    %v1615 = vunpack.c.h.b16 %v1461
    %v1616 = vunpack.c.l.b16 %v1462
    %v1617 = vunpack.c.h.b16 %v1462
    %v1618 = vunpack.c.l.b16 %v1463
    %v1619 = vunpack.c.h.b16 %v1463
    %v1620 = vunpack.c.l.b16 %v1464
    %v1621 = vunpack.c.h.b16 %v1464
    %v1622 = vunpack.c.l.b16 %v1465
    %v1623 = vunpack.c.h.b16 %v1465
    %v1624 = vunpack.c.l.b16 %v1466
    %v1625 = vunpack.c.h.b16 %v1466
    %v1626 = vunpack.c.l.b16 %v1467
    %v1627 = vunpack.c.h.b16 %v1467
    %v1628 = vunpack.c.l.b16 %v1468
    %v1629 = vunpack.c.h.b16 %v1468
    %v1630 = vunpack.c.l.b16 %v1469
    %v1631 = vunpack.c.h.b16 %v1469
    %v1632 = vunpack.c.l.b16 %v1470
    %v1633 = vunpack.c.h.b16 %v1470
    %v1634 = vunpack.c.l.b16 %v1471
    %v1635 = vunpack.c.h.b16 %v1471
    %v1636 = vunpack.c.l.b16 %v1472
    %v1637 = vunpack.c.h.b16 %v1472
    %v1638 = vunpack.c.l.b16 %v1473
    %v1639 = vunpack.c.h.b16 %v1473
    %v1640 = vunpack.c.l.b16 %v1474
    %v1641 = vunpack.c.h.b16 %v1474
    %v1642 = vunpack.c.l.b16 %v1475
    %v1643 = vunpack.c.h.b16 %v1475
    %v1644 = vunpack.c.l.b16 %v1476
    %v1645 = vunpack.c.h.b16 %v1476
    %v1646 = vunpack.c.l.b16 %v1477
    %v1647 = vunpack.c.h.b16 %v1477
    %v1648 = vunpack.c.l.b16 %v1478
    %v1649 = vunpack.c.h.b16 %v1478
    %v1650 = vunpack.c.l.b16 %v1479
    %v1651 = vunpack.c.h.b16 %v1479
    %v1652 = vunpack.c.l.b16 %v1480
    %v1653 = vunpack.c.h.b16 %v1480
    %v1654 = vunpack.c.l.b16 %v1481
    %v1655 = vunpack.c.h.b16 %v1481
    %v1656 = vunpack.c.l.b16 %v1482
    %v1657 = vunpack.c.h.b16 %v1482
    %v1658 = vunpack.c.l.b16 %v1483
    %v1659 = vunpack.c.h.b16 %v1483
    %v1660 = vunpack.c.l.b16 %v1484
    %v1661 = vunpack.c.h.b16 %v1484
    %v1662 = vunpack.c.l.b16 %v1485
    %v1663 = vunpack.c.h.b16 %v1485
    %v1664 = vunpack.c.l.b16 %v1486
    %v1665 = vunpack.c.h.b16 %v1486
    %v1666 = vunpack.c.l.b16 %v1487
    %v1667 = vunpack.c.h.b16 %v1487
    %v1668 = vunpack.c.l.b16 %v1488
    %v1669 = vunpack.c.h.b16 %v1488
    %v1670 = vunpack.c.l.b16 %v1489
    %v1671 = vunpack.c.h.b16 %v1489
    %v1672 = vunpack.c.l.b16 %v1490
    %v1673 = vunpack.c.h.b16 %v1490
    %v1674 = vunpack.c.l.b16 %v1491
    %v1675 = vunpack.c.h.b16 %v1491
    %v1676 = vunpack.c.l.b16 %v1492
    %v1677 = vunpack.c.h.b16 %v1492
    %v1678 = vunpack.c.l.b16 %v1493
    %v1679 = vunpack.c.h.b16 %v1493
    %v1680 = vunpack.c.l.b16 %v1494
    %v1681 = vunpack.c.h.b16 %v1494
    %v1682 = vunpack.c.l.b16 %v1495
    %v1683 = vunpack.c.h.b16 %v1495
    %v1684 = vunpack.c.l.b16 %v1496
    %v1685 = vunpack.c.h.b16 %v1496
    %v1686 = vunpack.c.l.b16 %v1497
    %v1687 = vunpack.c.h.b16 %v1497
    %v1688 = vunpack.c.l.b16 %v1498
    %v1689 = vunpack.c.h.b16 %v1498
    %v1690 = vunpack.c.l.b16 %v1499
    %v1691 = vunpack.c.h.b16 %v1499
    %v1692 = vunpack.c.l.b16 %v1500
    %v1693 = vunpack.c.h.b16 %v1500
    %v1694 = vunpack.c.l.b16 %v1501
    %v1695 = vunpack.c.h.b16 %v1501
    %v1696 = vunpack.c.l.b16 %v1502
    %v1697 = vunpack.c.h.b16 %v1502
    %v1698 = vunpack.c.l.b16 %v1503
    %v1699 = vunpack.c.h.b16 %v1503
    %v1700 = vunpack.c.l.b16 %v1504
    %v1701 = vunpack.c.h.b16 %v1504
    %v1702 = vunpack.c.l.b16 %v1505
    %v1703 = vunpack.c.h.b16 %v1505
    %v1704 = vunpack.c.l.b16 %v1506
    %v1705 = vunpack.c.h.b16 %v1506
    %v1706 = vunpack.c.l.b16 %v1507
    %v1707 = vunpack.c.h.b16 %v1507
    %v1708 = vunpack.c.l.b16 %v1508
    %v1709 = vunpack.c.h.b16 %v1508
    %v1710 = vunpack.c.l.b16 %v1509
    %v1711 = vunpack.c.h.b16 %v1509
    %v1712 = vpack.c.b16 %v1586, %v1584
    %v1713 = vpack.c.b16 %v1587, %v1585
    %v1714 = vpack.c.b16 %v1590, %v1588
    %v1715 = vpack.c.b16 %v1591, %v1589
    %v1716 = vpack.c.b16 %v1594, %v1592
    %v1717 = vpack.c.b16 %v1595, %v1593
    %v1718 = vpack.c.b16 %v1598, %v1596
    %v1719 = vpack.c.b16 %v1599, %v1597
    %v1720 = vpack.c.b16 %v1602, %v1600
    %v1721 = vpack.c.b16 %v1603, %v1601
    %v1722 = vpack.c.b16 %v1606, %v1604
    %v1723 = vpack.c.b16 %v1607, %v1605
    %v1724 = vpack.c.b16 %v1610, %v1608
    %v1725 = vpack.c.b16 %v1611, %v1609
    %v1726 = vpack.c.b16 %v1614, %v1612
    %v1727 = vpack.c.b16 %v1615, %v1613
    %v1728 = vpack.c.b16 %v1618, %v1616
    %v1729 = vpack.c.b16 %v1619, %v1617
    %v1730 = vpack.c.b16 %v1622, %v1620
    %v1731 = vpack.c.b16 %v1623, %v1621
    %v1732 = vpack.c.b16 %v1626, %v1624
    %v1733 = vpack.c.b16 %v1627, %v1625
    %v1734 = vpack.c.b16 %v1630, %v1628
    %v1735 = vpack.c.b16 %v1631, %v1629
    %v1736 = vpack.c.b16 %v1634, %v1632
    %v1737 = vpack.c.b16 %v1635, %v1633
    %v1738 = vpack.c.b16 %v1638, %v1636
    %v1739 = vpack.c.b16 %v1639, %v1637
    %v1740 = vpack.c.b16 %v1642, %v1640
    %v1741 = vpack.c.b16 %v1643, %v1641
    %v1742 = vpack.c.b16 %v1646, %v1644
    %v1743 = vpack.c.b16 %v1647, %v1645
    %v1744 = vpack.c.b16 %v1650, %v1648
    %v1745 = vpack.c.b16 %v1651, %v1649
    %v1746 = vpack.c.b16 %v1654, %v1652
    %v1747 = vpack.c.b16 %v1655, %v1653
    %v1748 = vpack.c.b16 %v1658, %v1656
    %v1749 = vpack.c.b16 %v1659, %v1657
    %v1750 = vpack.c.b16 %v1662, %v1660
    %v1751 = vpack.c.b16 %v1663, %v1661
    %v1752 = vpack.c.b16 %v1666, %v1664
    %v1753 = vpack.c.b16 %v1667, %v1665
    %v1754 = vpack.c.b16 %v1670, %v1668
    %v1755 = vpack.c.b16 %v1671, %v1669
    %v1756 = vpack.c.b16 %v1674, %v1672
    %v1757 = vpack.c.b16 %v1675, %v1673
    %v1758 = vpack.c.b16 %v1678, %v1676
    %v1759 = vpack.c.b16 %v1679, %v1677
    %v1760 = vpack.c.b16 %v1682, %v1680
    %v1761 = vpack.c.b16 %v1683, %v1681
    %v1762 = vpack.c.b16 %v1686, %v1684
    %v1763 = vpack.c.b16 %v1687, %v1685
    %v1764 = vpack.c.b16 %v1690, %v1688
    %v1765 = vpack.c.b16 %v1691, %v1689
    %v1766 = vpack.c.b16 %v1694, %v1692
    %v1767 = vpack.c.b16 %v1695, %v1693
    %v1768 = vpack.c.b16 %v1698, %v1696
    %v1769 = vpack.c.b16 %v1699, %v1697
    %v1770 = vpack.c.b16 %v1702, %v1700
    %v1771 = vpack.c.b16 %v1703, %v1701
    %v1772 = vpack.c.b16 %v1706, %v1704
    %v1773 = vpack.c.b16 %v1707, %v1705
    %v1774 = vpack.c.b16 %v1710, %v1708
    %v1775 = vpack.c.b16 %v1711, %v1709
    %1840 = vmatpush.bf16.msra.mxu0 %v1726
    %1841 = vmatpush.bf16.msra.mxu0 %v1724
    %1842 = vmatpush.bf16.msra.mxu0 %v1722
    %1843 = vmatpush.bf16.msra.mxu0 %v1720
    %1844 = vmatpush.bf16.msra.mxu0 %v1718
    %1845 = vmatpush.bf16.msra.mxu0 %v1716
    %1846 = vmatpush.bf16.msra.mxu0 %v1714
    %1847 = vmatpush.bf16.msra.mxu0 %v1712
    %1848 = vmatmul.bf16.gmra.mxu0 %v1511
    %v1849 = vpop.f32.mrf.mxu0
    %v1850 = vadd.f32 %v1516, %v1849
    %v1851 = vpop.f32.mrf.mxu0
    %1852 = vdwg.mxu0
    %1853 = vmatpush.bf16.msra.mxu0 %v1742
    %1854 = vmatpush.bf16.msra.mxu0 %v1740
    %1855 = vmatpush.bf16.msra.mxu0 %v1738
    %1856 = vmatpush.bf16.msra.mxu0 %v1736
    %1857 = vmatpush.bf16.msra.mxu0 %v1734
    %1858 = vmatpush.bf16.msra.mxu0 %v1732
    %1859 = vmatpush.bf16.msra.mxu0 %v1730
    %1860 = vmatpush.bf16.msra.mxu0 %v1728
    %1861 = vmatmul.bf16.gmra.mxu0 %v1512
    %v1862 = vpop.f32.mrf.mxu0
    %v1863 = vadd.f32 %v1850, %v1862
    %v1864 = vpop.f32.mrf.mxu0
    %1865 = vdwg.mxu0
    %1866 = vmatpush.bf16.msra.mxu0 %v1758
    %1867 = vmatpush.bf16.msra.mxu0 %v1756
    %1868 = vmatpush.bf16.msra.mxu0 %v1754
    %1869 = vmatpush.bf16.msra.mxu0 %v1752
    %1870 = vmatpush.bf16.msra.mxu0 %v1750
    %1871 = vmatpush.bf16.msra.mxu0 %v1748
    %1872 = vmatpush.bf16.msra.mxu0 %v1746
    %1873 = vmatpush.bf16.msra.mxu0 %v1744
    %1874 = vmatmul.bf16.gmra.mxu0 %v1513
    %v1875 = vpop.f32.mrf.mxu0
    %v1876 = vadd.f32 %v1863, %v1875
    %v1877 = vpop.f32.mrf.mxu0
    %1878 = vdwg.mxu0
    %1879 = vmatpush.bf16.msra.mxu0 %v1774
    %1880 = vmatpush.bf16.msra.mxu0 %v1772
    %1881 = vmatpush.bf16.msra.mxu0 %v1770
    %1882 = vmatpush.bf16.msra.mxu0 %v1768
    %1883 = vmatpush.bf16.msra.mxu0 %v1766
    %1884 = vmatpush.bf16.msra.mxu0 %v1764
    %1885 = vmatpush.bf16.msra.mxu0 %v1762
    %1886 = vmatpush.bf16.msra.mxu0 %v1760
    %1887 = vmatmul.bf16.gmra.mxu0 %v1514
    %v1888 = vpop.f32.mrf.mxu0
    %v1889 = vadd.f32 %v1876, %v1888
    %v1890 = vpop.f32.mrf.mxu0
    %1891 = vdwg.mxu0
    %1892 = vmatpush.bf16.msra.mxu0 %v1727
    %1893 = vmatpush.bf16.msra.mxu0 %v1725
    %1894 = vmatpush.bf16.msra.mxu0 %v1723
    %1895 = vmatpush.bf16.msra.mxu0 %v1721
    %1896 = vmatpush.bf16.msra.mxu0 %v1719
    %1897 = vmatpush.bf16.msra.mxu0 %v1717
    %1898 = vmatpush.bf16.msra.mxu0 %v1715
    %1899 = vmatpush.bf16.msra.mxu0 %v1713
    %1900 = vmatmul.bf16.gmra.mxu0 %v1511
    %v1901 = vpop.f32.mrf.mxu0
    %v1902 = vadd.f32 %v1517, %v1901
    %v1903 = vpop.f32.mrf.mxu0
    %1904 = vdwg.mxu0
    %1905 = vmatpush.bf16.msra.mxu0 %v1743
    %1906 = vmatpush.bf16.msra.mxu0 %v1741
    %1907 = vmatpush.bf16.msra.mxu0 %v1739
    %1908 = vmatpush.bf16.msra.mxu0 %v1737
    %1909 = vmatpush.bf16.msra.mxu0 %v1735
    %1910 = vmatpush.bf16.msra.mxu0 %v1733
    %1911 = vmatpush.bf16.msra.mxu0 %v1731
    %1912 = vmatpush.bf16.msra.mxu0 %v1729
    %1913 = vmatmul.bf16.gmra.mxu0 %v1512
    %v1914 = vpop.f32.mrf.mxu0
    %v1915 = vadd.f32 %v1902, %v1914
    %v1916 = vpop.f32.mrf.mxu0
    %1917 = vdwg.mxu0
    %1918 = vmatpush.bf16.msra.mxu0 %v1759
    %1919 = vmatpush.bf16.msra.mxu0 %v1757
    %1920 = vmatpush.bf16.msra.mxu0 %v1755
    %1921 = vmatpush.bf16.msra.mxu0 %v1753
    %1922 = vmatpush.bf16.msra.mxu0 %v1751
    %1923 = vmatpush.bf16.msra.mxu0 %v1749
    %1924 = vmatpush.bf16.msra.mxu0 %v1747
    %1925 = vmatpush.bf16.msra.mxu0 %v1745
    %1926 = vmatmul.bf16.gmra.mxu0 %v1513
    %v1927 = vpop.f32.mrf.mxu0
    %v1928 = vadd.f32 %v1915, %v1927
    %v1929 = vpop.f32.mrf.mxu0
    %1930 = vdwg.mxu0
    %1931 = vmatpush.bf16.msra.mxu0 %v1775
    %1932 = vmatpush.bf16.msra.mxu0 %v1773
    %1933 = vmatpush.bf16.msra.mxu0 %v1771
    %1934 = vmatpush.bf16.msra.mxu0 %v1769
    %1935 = vmatpush.bf16.msra.mxu0 %v1767
    %1936 = vmatpush.bf16.msra.mxu0 %v1765
    %1937 = vmatpush.bf16.msra.mxu0 %v1763
    %1938 = vmatpush.bf16.msra.mxu0 %v1761
    %1939 = vmatmul.bf16.gmra.mxu0 %v1514
    %v1940 = vpop.f32.mrf.mxu0
    %v1941 = vadd.f32 %v1928, %v1940
    %v1942 = vpop.f32.mrf.mxu0
    %1943 = vdwg.mxu0
    %v1944 = vmax.f32 %v1889, 0.0
    %v1945 = vmax.f32 %v1941, 0.0
    %s1946 = smul.u32 4, 32
    %s1947 = smul.u32 %s1946, 1
    %s1948 = sshll.u32 %s1947, 4
    %1949 = dma.done %s87, %s1948
    %v1950 = vld [vmem:[#allocation4] sm:$0xf]
    %v1951 = vld [vmem:[#allocation4 + $0x4] sm:$0xf]
    %v1952 = vld [vmem:[#allocation4 + $0x8] sm:$0xf]
    %v1953 = vld [vmem:[#allocation4 + $0xc] sm:$0xf]
    %v1954 = vld [vmem:[#allocation4 + $0x10] sm:$0xf]
    %v1955 = vld [vmem:[#allocation4 + $0x14] sm:$0xf]
    %v1956 = vld [vmem:[#allocation4 + $0x18] sm:$0xf]
    %v1957 = vld [vmem:[#allocation4 + $0x1c] sm:$0xf]
    %v1958 = vld [vmem:[#allocation4 + $0x20] sm:$0xf]
    %v1959 = vld [vmem:[#allocation4 + $0x24] sm:$0xf]
    %v1960 = vld [vmem:[#allocation4 + $0x28] sm:$0xf]
    %v1961 = vld [vmem:[#allocation4 + $0x2c] sm:$0xf]
    %v1962 = vld [vmem:[#allocation4 + $0x30] sm:$0xf]
    %v1963 = vld [vmem:[#allocation4 + $0x34] sm:$0xf]
    %v1964 = vld [vmem:[#allocation4 + $0x38] sm:$0xf]
    %v1965 = vld [vmem:[#allocation4 + $0x3c] sm:$0xf]
    %v1966 = vld [vmem:[#allocation4 + $0x40] sm:$0xf]
    %v1967 = vld [vmem:[#allocation4 + $0x44] sm:$0xf]
    %v1968 = vld [vmem:[#allocation4 + $0x48] sm:$0xf]
    %v1969 = vld [vmem:[#allocation4 + $0x4c] sm:$0xf]
    %v1970 = vld [vmem:[#allocation4 + $0x50] sm:$0xf]
    %v1971 = vld [vmem:[#allocation4 + $0x54] sm:$0xf]
    %v1972 = vld [vmem:[#allocation4 + $0x58] sm:$0xf]
    %v1973 = vld [vmem:[#allocation4 + $0x5c] sm:$0xf]
    %v1974 = vld [vmem:[#allocation4 + $0x60] sm:$0xf]
    %v1975 = vld [vmem:[#allocation4 + $0x64] sm:$0xf]
    %v1976 = vld [vmem:[#allocation4 + $0x68] sm:$0xf]
    %v1977 = vld [vmem:[#allocation4 + $0x6c] sm:$0xf]
    %v1978 = vld [vmem:[#allocation4 + $0x70] sm:$0xf]
    %v1979 = vld [vmem:[#allocation4 + $0x74] sm:$0xf]
    %v1980 = vld [vmem:[#allocation4 + $0x78] sm:$0xf]
    %v1981 = vld [vmem:[#allocation4 + $0x7c] sm:$0xf]
    %v1982 = vld [vmem:[#allocation12 + $0xa] sm:$0x1]
    %v1983 = vpack.c.bf16 %v1944, %v1944
    %v1984 = vpack.c.bf16 %v1945, %v1945
    %v1986 = vperm.slane %v1982, 0
    %v2020 = vunpack.c.l.b16 %v1950
    %v2021 = vunpack.c.l.b16 %v1951
    %v2022 = vunpack.c.l.b16 %v1952
    %v2023 = vunpack.c.l.b16 %v1953
    %v2024 = vunpack.c.l.b16 %v1954
    %v2025 = vunpack.c.l.b16 %v1955
    %v2026 = vunpack.c.l.b16 %v1956
    %v2027 = vunpack.c.l.b16 %v1957
    %v2028 = vunpack.c.l.b16 %v1958
    %v2029 = vunpack.c.l.b16 %v1959
    %v2030 = vunpack.c.l.b16 %v1960
    %v2031 = vunpack.c.l.b16 %v1961
    %v2032 = vunpack.c.l.b16 %v1962
    %v2033 = vunpack.c.l.b16 %v1963
    %v2034 = vunpack.c.l.b16 %v1964
    %v2035 = vunpack.c.l.b16 %v1965
    %v2036 = vunpack.c.l.b16 %v1966
    %v2037 = vunpack.c.l.b16 %v1967
    %v2038 = vunpack.c.l.b16 %v1968
    %v2039 = vunpack.c.l.b16 %v1969
    %v2040 = vunpack.c.l.b16 %v1970
    %v2041 = vunpack.c.l.b16 %v1971
    %v2042 = vunpack.c.l.b16 %v1972
    %v2043 = vunpack.c.l.b16 %v1973
    %v2044 = vunpack.c.l.b16 %v1974
    %v2045 = vunpack.c.l.b16 %v1975
    %v2046 = vunpack.c.l.b16 %v1976
    %v2047 = vunpack.c.l.b16 %v1977
    %v2048 = vunpack.c.l.b16 %v1978
    %v2049 = vunpack.c.l.b16 %v1979
    %v2050 = vunpack.c.l.b16 %v1980
    %v2051 = vunpack.c.l.b16 %v1981
    %v2052 = vpack.c.b16 %v2021, %v2020
    %v2053 = vpack.c.b16 %v2023, %v2022
    %v2054 = vpack.c.b16 %v2025, %v2024
    %v2055 = vpack.c.b16 %v2027, %v2026
    %v2056 = vpack.c.b16 %v2029, %v2028
    %v2057 = vpack.c.b16 %v2031, %v2030
    %v2058 = vpack.c.b16 %v2033, %v2032
    %v2059 = vpack.c.b16 %v2035, %v2034
    %v2060 = vpack.c.b16 %v2037, %v2036
    %v2061 = vpack.c.b16 %v2039, %v2038
    %v2062 = vpack.c.b16 %v2041, %v2040
    %v2063 = vpack.c.b16 %v2043, %v2042
    %v2064 = vpack.c.b16 %v2045, %v2044
    %v2065 = vpack.c.b16 %v2047, %v2046
    %v2066 = vpack.c.b16 %v2049, %v2048
    %v2067 = vpack.c.b16 %v2051, %v2050
    %2084 = vmatpush.bf16.msra.mxu0 %v2059
    %2085 = vmatpush.bf16.msra.mxu0 %v2058
    %2086 = vmatpush.bf16.msra.mxu0 %v2057
    %2087 = vmatpush.bf16.msra.mxu0 %v2056
    %2088 = vmatpush.bf16.msra.mxu0 %v2055
    %2089 = vmatpush.bf16.msra.mxu0 %v2054
    %2090 = vmatpush.bf16.msra.mxu0 %v2053
    %2091 = vmatpush.bf16.msra.mxu0 %v2052
    %2092 = vmatmul.bf16.gmra.mxu0 %v1983
    %v2093 = vpop.f32.mrf.mxu0
    %v2094 = vadd.f32 %v1986, %v2093
    %v2095 = vpop.f32.mrf.mxu0
    %2096 = vdwg.mxu0
    %2097 = vmatpush.bf16.msra.mxu0 %v2067
    %2098 = vmatpush.bf16.msra.mxu0 %v2066
    %2099 = vmatpush.bf16.msra.mxu0 %v2065
    %2100 = vmatpush.bf16.msra.mxu0 %v2064
    %2101 = vmatpush.bf16.msra.mxu0 %v2063
    %2102 = vmatpush.bf16.msra.mxu0 %v2062
    %2103 = vmatpush.bf16.msra.mxu0 %v2061
    %2104 = vmatpush.bf16.msra.mxu0 %v2060
    %2105 = vmatmul.bf16.gmra.mxu0 %v1984
    %v2106 = vpop.f32.mrf.mxu0
    %v2107 = vadd.f32 %v2094, %v2106
    %v2108 = vpop.f32.mrf.mxu0
    %2109 = vdwg.mxu0
    %v2110 = vmax.f32 %v2107, 0.0
    %s2111 = smul.u32 4, 16
    %s2112 = smul.u32 %s2111, 1
    %s2113 = sshll.u32 %s2112, 4
    %2114 = dma.done %s101, %s2113
    %v2115 = vld [vmem:[#allocation5] sm:$0xf]
    %v2116 = vld [vmem:[#allocation5 + $0x4] sm:$0xf]
    %v2117 = vld [vmem:[#allocation5 + $0x8] sm:$0xf]
    %v2118 = vld [vmem:[#allocation5 + $0xc] sm:$0xf]
    %v2119 = vld [vmem:[#allocation5 + $0x10] sm:$0xf]
    %v2120 = vld [vmem:[#allocation5 + $0x14] sm:$0xf]
    %v2121 = vld [vmem:[#allocation5 + $0x18] sm:$0xf]
    %v2122 = vld [vmem:[#allocation5 + $0x1c] sm:$0xf]
    %v2123 = vld [vmem:[#allocation5 + $0x20] sm:$0xf]
    %v2124 = vld [vmem:[#allocation5 + $0x24] sm:$0xf]
    %v2125 = vld [vmem:[#allocation5 + $0x28] sm:$0xf]
    %v2126 = vld [vmem:[#allocation5 + $0x2c] sm:$0xf]
    %v2127 = vld [vmem:[#allocation5 + $0x30] sm:$0xf]
    %v2128 = vld [vmem:[#allocation5 + $0x34] sm:$0xf]
    %v2129 = vld [vmem:[#allocation5 + $0x38] sm:$0xf]
    %v2130 = vld [vmem:[#allocation5 + $0x3c] sm:$0xf]
    %v2131 = vld [vmem:[#allocation12 + $0xb] sm:$0x1]
    %v2132 = vpack.c.bf16 %v2110, %v2110
    %v2134 = vperm.slane %v2131, 0
    %v2152 = vunpack.c.l.b16 %v2115
    %v2153 = vunpack.c.l.b16 %v2116
    %v2154 = vunpack.c.l.b16 %v2117
    %v2155 = vunpack.c.l.b16 %v2118
    %v2156 = vunpack.c.l.b16 %v2119
    %v2157 = vunpack.c.l.b16 %v2120
    %v2158 = vunpack.c.l.b16 %v2121
    %v2159 = vunpack.c.l.b16 %v2122
    %v2160 = vunpack.c.l.b16 %v2123
    %v2161 = vunpack.c.l.b16 %v2124
    %v2162 = vunpack.c.l.b16 %v2125
    %v2163 = vunpack.c.l.b16 %v2126
    %v2164 = vunpack.c.l.b16 %v2127
    %v2165 = vunpack.c.l.b16 %v2128
    %v2166 = vunpack.c.l.b16 %v2129
    %v2167 = vunpack.c.l.b16 %v2130
    %v2168 = vpack.c.b16 %v2153, %v2152
    %v2169 = vpack.c.b16 %v2155, %v2154
    %v2170 = vpack.c.b16 %v2157, %v2156
    %v2171 = vpack.c.b16 %v2159, %v2158
    %v2172 = vpack.c.b16 %v2161, %v2160
    %v2173 = vpack.c.b16 %v2163, %v2162
    %v2174 = vpack.c.b16 %v2165, %v2164
    %v2175 = vpack.c.b16 %v2167, %v2166
    %2184 = vmatpush.bf16.msra.mxu0 %v2175
    %2185 = vmatpush.bf16.msra.mxu0 %v2174
    %2186 = vmatpush.bf16.msra.mxu0 %v2173
    %2187 = vmatpush.bf16.msra.mxu0 %v2172
    %2188 = vmatpush.bf16.msra.mxu0 %v2171
    %2189 = vmatpush.bf16.msra.mxu0 %v2170
    %2190 = vmatpush.bf16.msra.mxu0 %v2169
    %2191 = vmatpush.bf16.msra.mxu0 %v2168
    %2192 = vmatmul.bf16.gmra.mxu0 %v2132
    %v2193 = vpop.f32.mrf.mxu0
    %v2194 = vadd.f32 %v2134, %v2193
    %v2195 = vpop.f32.mrf.mxu0
    %2196 = vdwg.mxu0
    %v2197 = vmul.f32 %v2194, 0.5
    %v2198 = vmul.f32 %v2197, 1.442695
    %v2199 = vpow.pop %v2198
    %v2200 = vld [vmem:[%s1] sm:$0xff]
    %2202 = vrot.lane.b32.xlu0 %v2200, 64
    %v2203 = vpop.permute.xlu0 %2202
    %v2205 = vmul.f32 %v2199, %v2203
    %2207 = vrot.lane.b32.xlu0 %v2205, 64
    %v2208 = vpop.permute.xlu0 %2207
    %v2210 = vadd.f32 %v2194, %v2208
    %s2211 = smul.u32 4, 8
    %s2212 = smul.u32 %s2211, 1
    %s2213 = sshll.u32 %s2212, 4
    %2214 = dma.done %s115, %s2213
    %v2215 = vld [vmem:[#allocation6] sm:$0xf]
    %v2216 = vld [vmem:[#allocation6 + $0x4] sm:$0xf]
    %v2217 = vld [vmem:[#allocation6 + $0x8] sm:$0xf]
    %v2218 = vld [vmem:[#allocation6 + $0xc] sm:$0xf]
    %v2219 = vld [vmem:[#allocation6 + $0x10] sm:$0xf]
    %v2220 = vld [vmem:[#allocation6 + $0x14] sm:$0xf]
    %v2221 = vld [vmem:[#allocation6 + $0x18] sm:$0xf]
    %v2222 = vld [vmem:[#allocation6 + $0x1c] sm:$0xf]
    %v2223 = vld [vmem:[#allocation12 + $0xc] sm:$0x1]
    %v2224 = vpack.c.bf16 %v2210, %v2210
    %v2226 = vperm.slane %v2223, 0
    %v2236 = vunpack.c.l.b16 %v2215
    %v2237 = vunpack.c.l.b16 %v2216
    %v2238 = vunpack.c.l.b16 %v2217
    %v2239 = vunpack.c.l.b16 %v2218
    %v2240 = vunpack.c.l.b16 %v2219
    %v2241 = vunpack.c.l.b16 %v2220
    %v2242 = vunpack.c.l.b16 %v2221
    %v2243 = vunpack.c.l.b16 %v2222
    %v2244 = vpack.c.b16 %v2237, %v2236
    %v2245 = vpack.c.b16 %v2239, %v2238
    %v2246 = vpack.c.b16 %v2241, %v2240
    %v2247 = vpack.c.b16 %v2243, %v2242
    %vm2252 = vcmask 523264
    %v2254 = vsel %vm2252, %v2224, 0
    %2256 = vmatpush.bf16.msra.mxu0 0
    %2257 = vmatpush.bf16.msra.mxu0 0
    %2258 = vmatpush.bf16.msra.mxu0 0
    %2259 = vmatpush.bf16.msra.mxu0 0
    %2260 = vmatpush.bf16.msra.mxu0 %v2247
    %2261 = vmatpush.bf16.msra.mxu0 %v2246
    %2262 = vmatpush.bf16.msra.mxu0 %v2245
    %2263 = vmatpush.bf16.msra.mxu0 %v2244
    %2264 = vmatmul.bf16.gmra.mxu0 %v2254
    %v2265 = vpop.f32.mrf.mxu0
    %v2266 = vadd.f32 %v2226, %v2265
    %v2267 = vpop.f32.mrf.mxu0
    %2268 = vdwg.mxu0
    %v2269 = vmax.f32 %v2266, 0.0
    %s2270 = smul.u32 %s2111, 2
    %s2271 = sshll.u32 %s2270, 4
    %2272 = dma.done %s129, %s2271
    %v2273 = vld [vmem:[#allocation7] sm:$0xff]
    %v2274 = vld [vmem:[#allocation7 + $0x8] sm:$0xff]
    %v2275 = vld [vmem:[#allocation7 + $0x10] sm:$0xff]
    %v2276 = vld [vmem:[#allocation7 + $0x18] sm:$0xff]
    %v2277 = vld [vmem:[#allocation7 + $0x20] sm:$0xff]
    %v2278 = vld [vmem:[#allocation7 + $0x28] sm:$0xff]
    %v2279 = vld [vmem:[#allocation7 + $0x30] sm:$0xff]
    %v2280 = vld [vmem:[#allocation7 + $0x38] sm:$0xff]
    %v2281 = vld [vmem:[#allocation7 + $0x40] sm:$0xff]
    %v2282 = vld [vmem:[#allocation7 + $0x48] sm:$0xff]
    %v2283 = vld [vmem:[#allocation7 + $0x50] sm:$0xff]
    %v2284 = vld [vmem:[#allocation7 + $0x58] sm:$0xff]
    %v2285 = vld [vmem:[#allocation7 + $0x60] sm:$0xff]
    %v2286 = vld [vmem:[#allocation7 + $0x68] sm:$0xff]
    %v2287 = vld [vmem:[#allocation7 + $0x70] sm:$0xff]
    %v2288 = vld [vmem:[#allocation7 + $0x78] sm:$0xff]
    %v2289 = vld [vmem:[#allocation12 + $0xd] sm:$0x3]
    %v2290 = vpack.c.bf16 %v2269, %v2269
    %v2292 = vperm.slane %v2289, 0
    %v2293 = vperm.slane %v2289, 1
    %v2312 = vunpack.c.l.b16 %v2273
    %v2313 = vunpack.c.h.b16 %v2273
    %v2314 = vunpack.c.l.b16 %v2274
    %v2315 = vunpack.c.h.b16 %v2274
    %v2316 = vunpack.c.l.b16 %v2275
    %v2317 = vunpack.c.h.b16 %v2275
    %v2318 = vunpack.c.l.b16 %v2276
    %v2319 = vunpack.c.h.b16 %v2276
    %v2320 = vunpack.c.l.b16 %v2277
    %v2321 = vunpack.c.h.b16 %v2277
    %v2322 = vunpack.c.l.b16 %v2278
    %v2323 = vunpack.c.h.b16 %v2278
    %v2324 = vunpack.c.l.b16 %v2279
    %v2325 = vunpack.c.h.b16 %v2279
    %v2326 = vunpack.c.l.b16 %v2280
    %v2327 = vunpack.c.h.b16 %v2280
    %v2328 = vunpack.c.l.b16 %v2281
    %v2329 = vunpack.c.h.b16 %v2281
    %v2330 = vunpack.c.l.b16 %v2282
    %v2331 = vunpack.c.h.b16 %v2282
    %v2332 = vunpack.c.l.b16 %v2283
    %v2333 = vunpack.c.h.b16 %v2283
    %v2334 = vunpack.c.l.b16 %v2284
    %v2335 = vunpack.c.h.b16 %v2284
    %v2336 = vunpack.c.l.b16 %v2285
    %v2337 = vunpack.c.h.b16 %v2285
    %v2338 = vunpack.c.l.b16 %v2286
    %v2339 = vunpack.c.h.b16 %v2286
    %v2340 = vunpack.c.l.b16 %v2287
    %v2341 = vunpack.c.h.b16 %v2287
    %v2342 = vunpack.c.l.b16 %v2288
    %v2343 = vunpack.c.h.b16 %v2288
    %v2344 = vpack.c.b16 %v2314, %v2312
    %v2345 = vpack.c.b16 %v2315, %v2313
    %v2346 = vpack.c.b16 %v2318, %v2316
    %v2347 = vpack.c.b16 %v2319, %v2317
    %v2348 = vpack.c.b16 %v2322, %v2320
    %v2349 = vpack.c.b16 %v2323, %v2321
    %v2350 = vpack.c.b16 %v2326, %v2324
    %v2351 = vpack.c.b16 %v2327, %v2325
    %v2352 = vpack.c.b16 %v2330, %v2328
    %v2353 = vpack.c.b16 %v2331, %v2329
    %v2354 = vpack.c.b16 %v2334, %v2332
    %v2355 = vpack.c.b16 %v2335, %v2333
    %v2356 = vpack.c.b16 %v2338, %v2336
    %v2357 = vpack.c.b16 %v2339, %v2337
    %v2358 = vpack.c.b16 %v2342, %v2340
    %v2359 = vpack.c.b16 %v2343, %v2341
    %2376 = vmatpush.bf16.msra.mxu0 %v2358
    %2377 = vmatpush.bf16.msra.mxu0 %v2356
    %2378 = vmatpush.bf16.msra.mxu0 %v2354
    %2379 = vmatpush.bf16.msra.mxu0 %v2352
    %2380 = vmatpush.bf16.msra.mxu0 %v2350
    %2381 = vmatpush.bf16.msra.mxu0 %v2348
    %2382 = vmatpush.bf16.msra.mxu0 %v2346
    %2383 = vmatpush.bf16.msra.mxu0 %v2344
    %2384 = vmatmul.bf16.gmra.mxu0 %v2290
    %v2385 = vpop.f32.mrf.mxu0
    %v2386 = vadd.f32 %v2292, %v2385
    %v2387 = vpop.f32.mrf.mxu0
    %2388 = vdwg.mxu0
    %2389 = vmatpush.bf16.msra.mxu0 %v2359
    %2390 = vmatpush.bf16.msra.mxu0 %v2357
    %2391 = vmatpush.bf16.msra.mxu0 %v2355
    %2392 = vmatpush.bf16.msra.mxu0 %v2353
    %2393 = vmatpush.bf16.msra.mxu0 %v2351
    %2394 = vmatpush.bf16.msra.mxu0 %v2349
    %2395 = vmatpush.bf16.msra.mxu0 %v2347
    %2396 = vmatpush.bf16.msra.mxu0 %v2345
    %2397 = vmatmul.bf16.gmra.mxu0 %v2290
    %v2398 = vpop.f32.mrf.mxu0
    %v2399 = vadd.f32 %v2293, %v2398
    %v2400 = vpop.f32.mrf.mxu0
    %2401 = vdwg.mxu0
    %v2402 = vmax.f32 %v2386, 0.0
    %v2403 = vmax.f32 %v2399, 0.0
    %s2404 = smul.u32 %s1946, 4
    %s2405 = sshll.u32 %s2404, 4
    %2406 = dma.done %s143, %s2405
    %v2407 = vld [vmem:[#allocation8] sm:$0xff]
    %v2408 = vld [vmem:[#allocation8 + $0x8] sm:$0xff]
    %v2409 = vld [vmem:[#allocation8 + $0x10] sm:$0xff]
    %v2410 = vld [vmem:[#allocation8 + $0x18] sm:$0xff]
    %v2411 = vld [vmem:[#allocation8 + $0x20] sm:$0xff]
    %v2412 = vld [vmem:[#allocation8 + $0x28] sm:$0xff]
    %v2413 = vld [vmem:[#allocation8 + $0x30] sm:$0xff]
    %v2414 = vld [vmem:[#allocation8 + $0x38] sm:$0xff]
    %v2415 = vld [vmem:[#allocation8 + $0x40] sm:$0xff]
    %v2416 = vld [vmem:[#allocation8 + $0x48] sm:$0xff]
    %v2417 = vld [vmem:[#allocation8 + $0x50] sm:$0xff]
    %v2418 = vld [vmem:[#allocation8 + $0x58] sm:$0xff]
    %v2419 = vld [vmem:[#allocation8 + $0x60] sm:$0xff]
    %v2420 = vld [vmem:[#allocation8 + $0x68] sm:$0xff]
    %v2421 = vld [vmem:[#allocation8 + $0x70] sm:$0xff]
    %v2422 = vld [vmem:[#allocation8 + $0x78] sm:$0xff]
    %v2423 = vld [vmem:[#allocation8 + $0x80] sm:$0xff]
    %v2424 = vld [vmem:[#allocation8 + $0x88] sm:$0xff]
    %v2425 = vld [vmem:[#allocation8 + $0x90] sm:$0xff]
    %v2426 = vld [vmem:[#allocation8 + $0x98] sm:$0xff]
    %v2427 = vld [vmem:[#allocation8 + $0xa0] sm:$0xff]
    %v2428 = vld [vmem:[#allocation8 + $0xa8] sm:$0xff]
    %v2429 = vld [vmem:[#allocation8 + $0xb0] sm:$0xff]
    %v2430 = vld [vmem:[#allocation8 + $0xb8] sm:$0xff]
    %v2431 = vld [vmem:[#allocation8 + $0xc0] sm:$0xff]
    %v2432 = vld [vmem:[#allocation8 + $0xc8] sm:$0xff]
    %v2433 = vld [vmem:[#allocation8 + $0xd0] sm:$0xff]
    %v2434 = vld [vmem:[#allocation8 + $0xd8] sm:$0xff]
    %v2435 = vld [vmem:[#allocation8 + $0xe0] sm:$0xff]
    %v2436 = vld [vmem:[#allocation8 + $0xe8] sm:$0xff]
    %v2437 = vld [vmem:[#allocation8 + $0xf0] sm:$0xff]
    %v2438 = vld [vmem:[#allocation8 + $0xf8] sm:$0xff]
    %v2439 = vld [vmem:[#allocation8 + $0x100] sm:$0xff]
    %v2440 = vld [vmem:[#allocation8 + $0x108] sm:$0xff]
    %v2441 = vld [vmem:[#allocation8 + $0x110] sm:$0xff]
    %v2442 = vld [vmem:[#allocation8 + $0x118] sm:$0xff]
    %v2443 = vld [vmem:[#allocation8 + $0x120] sm:$0xff]
    %v2444 = vld [vmem:[#allocation8 + $0x128] sm:$0xff]
    %v2445 = vld [vmem:[#allocation8 + $0x130] sm:$0xff]
    %v2446 = vld [vmem:[#allocation8 + $0x138] sm:$0xff]
    %v2447 = vld [vmem:[#allocation8 + $0x140] sm:$0xff]
    %v2448 = vld [vmem:[#allocation8 + $0x148] sm:$0xff]
    %v2449 = vld [vmem:[#allocation8 + $0x150] sm:$0xff]
    %v2450 = vld [vmem:[#allocation8 + $0x158] sm:$0xff]
    %v2451 = vld [vmem:[#allocation8 + $0x160] sm:$0xff]
    %v2452 = vld [vmem:[#allocation8 + $0x168] sm:$0xff]
    %v2453 = vld [vmem:[#allocation8 + $0x170] sm:$0xff]
    %v2454 = vld [vmem:[#allocation8 + $0x178] sm:$0xff]
    %v2455 = vld [vmem:[#allocation8 + $0x180] sm:$0xff]
    %v2456 = vld [vmem:[#allocation8 + $0x188] sm:$0xff]
    %v2457 = vld [vmem:[#allocation8 + $0x190] sm:$0xff]
    %v2458 = vld [vmem:[#allocation8 + $0x198] sm:$0xff]
    %v2459 = vld [vmem:[#allocation8 + $0x1a0] sm:$0xff]
    %v2460 = vld [vmem:[#allocation8 + $0x1a8] sm:$0xff]
    %v2461 = vld [vmem:[#allocation8 + $0x1b0] sm:$0xff]
    %v2462 = vld [vmem:[#allocation8 + $0x1b8] sm:$0xff]
    %v2463 = vld [vmem:[#allocation8 + $0x1c0] sm:$0xff]
    %v2464 = vld [vmem:[#allocation8 + $0x1c8] sm:$0xff]
    %v2465 = vld [vmem:[#allocation8 + $0x1d0] sm:$0xff]
    %v2466 = vld [vmem:[#allocation8 + $0x1d8] sm:$0xff]
    %v2467 = vld [vmem:[#allocation8 + $0x1e0] sm:$0xff]
    %v2468 = vld [vmem:[#allocation8 + $0x1e8] sm:$0xff]
    %v2469 = vld [vmem:[#allocation8 + $0x1f0] sm:$0xff]
    %v2470 = vld [vmem:[#allocation8 + $0x1f8] sm:$0xff]
    %v2471 = vld [vmem:[#allocation12 + $0xf] sm:$0xf]
    %v2472 = vpack.c.bf16 %v2402, %v2402
    %v2473 = vpack.c.bf16 %v2403, %v2403
    %v2475 = vperm.slane %v2471, 0
    %v2476 = vperm.slane %v2471, 1
    %v2477 = vperm.slane %v2471, 2
    %v2478 = vperm.slane %v2471, 3
    %v2547 = vunpack.c.l.b16 %v2407
    %v2548 = vunpack.c.h.b16 %v2407
    %v2549 = vunpack.c.l.b16 %v2408
    %v2550 = vunpack.c.h.b16 %v2408
    %v2551 = vunpack.c.l.b16 %v2409
    %v2552 = vunpack.c.h.b16 %v2409
    %v2553 = vunpack.c.l.b16 %v2410
    %v2554 = vunpack.c.h.b16 %v2410
    %v2555 = vunpack.c.l.b16 %v2411
    %v2556 = vunpack.c.h.b16 %v2411
    %v2557 = vunpack.c.l.b16 %v2412
    %v2558 = vunpack.c.h.b16 %v2412
    %v2559 = vunpack.c.l.b16 %v2413
    %v2560 = vunpack.c.h.b16 %v2413
    %v2561 = vunpack.c.l.b16 %v2414
    %v2562 = vunpack.c.h.b16 %v2414
    %v2563 = vunpack.c.l.b16 %v2415
    %v2564 = vunpack.c.h.b16 %v2415
    %v2565 = vunpack.c.l.b16 %v2416
    %v2566 = vunpack.c.h.b16 %v2416
    %v2567 = vunpack.c.l.b16 %v2417
    %v2568 = vunpack.c.h.b16 %v2417
    %v2569 = vunpack.c.l.b16 %v2418
    %v2570 = vunpack.c.h.b16 %v2418
    %v2571 = vunpack.c.l.b16 %v2419
    %v2572 = vunpack.c.h.b16 %v2419
    %v2573 = vunpack.c.l.b16 %v2420
    %v2574 = vunpack.c.h.b16 %v2420
    %v2575 = vunpack.c.l.b16 %v2421
    %v2576 = vunpack.c.h.b16 %v2421
    %v2577 = vunpack.c.l.b16 %v2422
    %v2578 = vunpack.c.h.b16 %v2422
    %v2579 = vunpack.c.l.b16 %v2423
    %v2580 = vunpack.c.h.b16 %v2423
    %v2581 = vunpack.c.l.b16 %v2424
    %v2582 = vunpack.c.h.b16 %v2424
    %v2583 = vunpack.c.l.b16 %v2425
    %v2584 = vunpack.c.h.b16 %v2425
    %v2585 = vunpack.c.l.b16 %v2426
    %v2586 = vunpack.c.h.b16 %v2426
    %v2587 = vunpack.c.l.b16 %v2427
    %v2588 = vunpack.c.h.b16 %v2427
    %v2589 = vunpack.c.l.b16 %v2428
    %v2590 = vunpack.c.h.b16 %v2428
    %v2591 = vunpack.c.l.b16 %v2429
    %v2592 = vunpack.c.h.b16 %v2429
    %v2593 = vunpack.c.l.b16 %v2430
    %v2594 = vunpack.c.h.b16 %v2430
    %v2595 = vunpack.c.l.b16 %v2431
    %v2596 = vunpack.c.h.b16 %v2431
    %v2597 = vunpack.c.l.b16 %v2432
    %v2598 = vunpack.c.h.b16 %v2432
    %v2599 = vunpack.c.l.b16 %v2433
    %v2600 = vunpack.c.h.b16 %v2433
    %v2601 = vunpack.c.l.b16 %v2434
    %v2602 = vunpack.c.h.b16 %v2434
    %v2603 = vunpack.c.l.b16 %v2435
    %v2604 = vunpack.c.h.b16 %v2435
    %v2605 = vunpack.c.l.b16 %v2436
    %v2606 = vunpack.c.h.b16 %v2436
    %v2607 = vunpack.c.l.b16 %v2437
    %v2608 = vunpack.c.h.b16 %v2437
    %v2609 = vunpack.c.l.b16 %v2438
    %v2610 = vunpack.c.h.b16 %v2438
    %v2611 = vunpack.c.l.b16 %v2439
    %v2612 = vunpack.c.h.b16 %v2439
    %v2613 = vunpack.c.l.b16 %v2440
    %v2614 = vunpack.c.h.b16 %v2440
    %v2615 = vunpack.c.l.b16 %v2441
    %v2616 = vunpack.c.h.b16 %v2441
    %v2617 = vunpack.c.l.b16 %v2442
    %v2618 = vunpack.c.h.b16 %v2442
    %v2619 = vunpack.c.l.b16 %v2443
    %v2620 = vunpack.c.h.b16 %v2443
    %v2621 = vunpack.c.l.b16 %v2444
    %v2622 = vunpack.c.h.b16 %v2444
    %v2623 = vunpack.c.l.b16 %v2445
    %v2624 = vunpack.c.h.b16 %v2445
    %v2625 = vunpack.c.l.b16 %v2446
    %v2626 = vunpack.c.h.b16 %v2446
    %v2627 = vunpack.c.l.b16 %v2447
    %v2628 = vunpack.c.h.b16 %v2447
    %v2629 = vunpack.c.l.b16 %v2448
    %v2630 = vunpack.c.h.b16 %v2448
    %v2631 = vunpack.c.l.b16 %v2449
    %v2632 = vunpack.c.h.b16 %v2449
    %v2633 = vunpack.c.l.b16 %v2450
    %v2634 = vunpack.c.h.b16 %v2450
    %v2635 = vunpack.c.l.b16 %v2451
    %v2636 = vunpack.c.h.b16 %v2451
    %v2637 = vunpack.c.l.b16 %v2452
    %v2638 = vunpack.c.h.b16 %v2452
    %v2639 = vunpack.c.l.b16 %v2453
    %v2640 = vunpack.c.h.b16 %v2453
    %v2641 = vunpack.c.l.b16 %v2454
    %v2642 = vunpack.c.h.b16 %v2454
    %v2643 = vunpack.c.l.b16 %v2455
    %v2644 = vunpack.c.h.b16 %v2455
    %v2645 = vunpack.c.l.b16 %v2456
    %v2646 = vunpack.c.h.b16 %v2456
    %v2647 = vunpack.c.l.b16 %v2457
    %v2648 = vunpack.c.h.b16 %v2457
    %v2649 = vunpack.c.l.b16 %v2458
    %v2650 = vunpack.c.h.b16 %v2458
    %v2651 = vunpack.c.l.b16 %v2459
    %v2652 = vunpack.c.h.b16 %v2459
    %v2653 = vunpack.c.l.b16 %v2460
    %v2654 = vunpack.c.h.b16 %v2460
    %v2655 = vunpack.c.l.b16 %v2461
    %v2656 = vunpack.c.h.b16 %v2461
    %v2657 = vunpack.c.l.b16 %v2462
    %v2658 = vunpack.c.h.b16 %v2462
    %v2659 = vunpack.c.l.b16 %v2463
    %v2660 = vunpack.c.h.b16 %v2463
    %v2661 = vunpack.c.l.b16 %v2464
    %v2662 = vunpack.c.h.b16 %v2464
    %v2663 = vunpack.c.l.b16 %v2465
    %v2664 = vunpack.c.h.b16 %v2465
    %v2665 = vunpack.c.l.b16 %v2466
    %v2666 = vunpack.c.h.b16 %v2466
    %v2667 = vunpack.c.l.b16 %v2467
    %v2668 = vunpack.c.h.b16 %v2467
    %v2669 = vunpack.c.l.b16 %v2468
    %v2670 = vunpack.c.h.b16 %v2468
    %v2671 = vunpack.c.l.b16 %v2469
    %v2672 = vunpack.c.h.b16 %v2469
    %v2673 = vunpack.c.l.b16 %v2470
    %v2674 = vunpack.c.h.b16 %v2470
    %v2675 = vpack.c.b16 %v2551, %v2547
    %v2676 = vpack.c.b16 %v2552, %v2548
    %v2677 = vpack.c.b16 %v2553, %v2549
    %v2678 = vpack.c.b16 %v2554, %v2550
    %v2679 = vpack.c.b16 %v2559, %v2555
    %v2680 = vpack.c.b16 %v2560, %v2556
    %v2681 = vpack.c.b16 %v2561, %v2557
    %v2682 = vpack.c.b16 %v2562, %v2558
    %v2683 = vpack.c.b16 %v2567, %v2563
    %v2684 = vpack.c.b16 %v2568, %v2564
    %v2685 = vpack.c.b16 %v2569, %v2565
    %v2686 = vpack.c.b16 %v2570, %v2566
    %v2687 = vpack.c.b16 %v2575, %v2571
    %v2688 = vpack.c.b16 %v2576, %v2572
    %v2689 = vpack.c.b16 %v2577, %v2573
    %v2690 = vpack.c.b16 %v2578, %v2574
    %v2691 = vpack.c.b16 %v2583, %v2579
    %v2692 = vpack.c.b16 %v2584, %v2580
    %v2693 = vpack.c.b16 %v2585, %v2581
    %v2694 = vpack.c.b16 %v2586, %v2582
    %v2695 = vpack.c.b16 %v2591, %v2587
    %v2696 = vpack.c.b16 %v2592, %v2588
    %v2697 = vpack.c.b16 %v2593, %v2589
    %v2698 = vpack.c.b16 %v2594, %v2590
    %v2699 = vpack.c.b16 %v2599, %v2595
    %v2700 = vpack.c.b16 %v2600, %v2596
    %v2701 = vpack.c.b16 %v2601, %v2597
    %v2702 = vpack.c.b16 %v2602, %v2598
    %v2703 = vpack.c.b16 %v2607, %v2603
    %v2704 = vpack.c.b16 %v2608, %v2604
    %v2705 = vpack.c.b16 %v2609, %v2605
    %v2706 = vpack.c.b16 %v2610, %v2606
    %v2707 = vpack.c.b16 %v2615, %v2611
    %v2708 = vpack.c.b16 %v2616, %v2612
    %v2709 = vpack.c.b16 %v2617, %v2613
    %v2710 = vpack.c.b16 %v2618, %v2614
    %v2711 = vpack.c.b16 %v2623, %v2619
    %v2712 = vpack.c.b16 %v2624, %v2620
    %v2713 = vpack.c.b16 %v2625, %v2621
    %v2714 = vpack.c.b16 %v2626, %v2622
    %v2715 = vpack.c.b16 %v2631, %v2627
    %v2716 = vpack.c.b16 %v2632, %v2628
    %v2717 = vpack.c.b16 %v2633, %v2629
    %v2718 = vpack.c.b16 %v2634, %v2630
    %v2719 = vpack.c.b16 %v2639, %v2635
    %v2720 = vpack.c.b16 %v2640, %v2636
    %v2721 = vpack.c.b16 %v2641, %v2637
    %v2722 = vpack.c.b16 %v2642, %v2638
    %v2723 = vpack.c.b16 %v2647, %v2643
    %v2724 = vpack.c.b16 %v2648, %v2644
    %v2725 = vpack.c.b16 %v2649, %v2645
    %v2726 = vpack.c.b16 %v2650, %v2646
    %v2727 = vpack.c.b16 %v2655, %v2651
    %v2728 = vpack.c.b16 %v2656, %v2652
    %v2729 = vpack.c.b16 %v2657, %v2653
    %v2730 = vpack.c.b16 %v2658, %v2654
    %v2731 = vpack.c.b16 %v2663, %v2659
    %v2732 = vpack.c.b16 %v2664, %v2660
    %v2733 = vpack.c.b16 %v2665, %v2661
    %v2734 = vpack.c.b16 %v2666, %v2662
    %v2735 = vpack.c.b16 %v2671, %v2667
    %v2736 = vpack.c.b16 %v2672, %v2668
    %v2737 = vpack.c.b16 %v2673, %v2669
    %v2738 = vpack.c.b16 %v2674, %v2670
    %2803 = vmatpush.bf16.msra.mxu0 %v2703
    %2804 = vmatpush.bf16.msra.mxu0 %v2699
    %2805 = vmatpush.bf16.msra.mxu0 %v2695
    %2806 = vmatpush.bf16.msra.mxu0 %v2691
    %2807 = vmatpush.bf16.msra.mxu0 %v2687
    %2808 = vmatpush.bf16.msra.mxu0 %v2683
    %2809 = vmatpush.bf16.msra.mxu0 %v2679
    %2810 = vmatpush.bf16.msra.mxu0 %v2675
    %2811 = vmatmul.bf16.gmra.mxu0 %v2472
    %v2812 = vpop.f32.mrf.mxu0
    %v2813 = vadd.f32 %v2475, %v2812
    %v2814 = vpop.f32.mrf.mxu0
    %2815 = vdwg.mxu0
    %2816 = vmatpush.bf16.msra.mxu0 %v2735
    %2817 = vmatpush.bf16.msra.mxu0 %v2731
    %2818 = vmatpush.bf16.msra.mxu0 %v2727
    %2819 = vmatpush.bf16.msra.mxu0 %v2723
    %2820 = vmatpush.bf16.msra.mxu0 %v2719
    %2821 = vmatpush.bf16.msra.mxu0 %v2715
    %2822 = vmatpush.bf16.msra.mxu0 %v2711
    %2823 = vmatpush.bf16.msra.mxu0 %v2707
    %2824 = vmatmul.bf16.gmra.mxu0 %v2473
    %v2825 = vpop.f32.mrf.mxu0
    %v2826 = vadd.f32 %v2813, %v2825
    %v2827 = vpop.f32.mrf.mxu0
    %2828 = vdwg.mxu0
    %2829 = vmatpush.bf16.msra.mxu0 %v2704
    %2830 = vmatpush.bf16.msra.mxu0 %v2700
    %2831 = vmatpush.bf16.msra.mxu0 %v2696
    %2832 = vmatpush.bf16.msra.mxu0 %v2692
    %2833 = vmatpush.bf16.msra.mxu0 %v2688
    %2834 = vmatpush.bf16.msra.mxu0 %v2684
    %2835 = vmatpush.bf16.msra.mxu0 %v2680
    %2836 = vmatpush.bf16.msra.mxu0 %v2676
    %2837 = vmatmul.bf16.gmra.mxu0 %v2472
    %v2838 = vpop.f32.mrf.mxu0
    %v2839 = vadd.f32 %v2476, %v2838
    %v2840 = vpop.f32.mrf.mxu0
    %2841 = vdwg.mxu0
    %2842 = vmatpush.bf16.msra.mxu0 %v2736
    %2843 = vmatpush.bf16.msra.mxu0 %v2732
    %2844 = vmatpush.bf16.msra.mxu0 %v2728
    %2845 = vmatpush.bf16.msra.mxu0 %v2724
    %2846 = vmatpush.bf16.msra.mxu0 %v2720
    %2847 = vmatpush.bf16.msra.mxu0 %v2716
    %2848 = vmatpush.bf16.msra.mxu0 %v2712
    %2849 = vmatpush.bf16.msra.mxu0 %v2708
    %2850 = vmatmul.bf16.gmra.mxu0 %v2473
    %v2851 = vpop.f32.mrf.mxu0
    %v2852 = vadd.f32 %v2839, %v2851
    %v2853 = vpop.f32.mrf.mxu0
    %2854 = vdwg.mxu0
    %2855 = vmatpush.bf16.msra.mxu0 %v2705
    %2856 = vmatpush.bf16.msra.mxu0 %v2701
    %2857 = vmatpush.bf16.msra.mxu0 %v2697
    %2858 = vmatpush.bf16.msra.mxu0 %v2693
    %2859 = vmatpush.bf16.msra.mxu0 %v2689
    %2860 = vmatpush.bf16.msra.mxu0 %v2685
    %2861 = vmatpush.bf16.msra.mxu0 %v2681
    %2862 = vmatpush.bf16.msra.mxu0 %v2677
    %2863 = vmatmul.bf16.gmra.mxu0 %v2472
    %v2864 = vpop.f32.mrf.mxu0
    %v2865 = vadd.f32 %v2477, %v2864
    %v2866 = vpop.f32.mrf.mxu0
    %2867 = vdwg.mxu0
    %2868 = vmatpush.bf16.msra.mxu0 %v2737
    %2869 = vmatpush.bf16.msra.mxu0 %v2733
    %2870 = vmatpush.bf16.msra.mxu0 %v2729
    %2871 = vmatpush.bf16.msra.mxu0 %v2725
    %2872 = vmatpush.bf16.msra.mxu0 %v2721
    %2873 = vmatpush.bf16.msra.mxu0 %v2717
    %2874 = vmatpush.bf16.msra.mxu0 %v2713
    %2875 = vmatpush.bf16.msra.mxu0 %v2709
    %2876 = vmatmul.bf16.gmra.mxu0 %v2473
    %v2877 = vpop.f32.mrf.mxu0
    %v2878 = vadd.f32 %v2865, %v2877
    %v2879 = vpop.f32.mrf.mxu0
    %2880 = vdwg.mxu0
    %2881 = vmatpush.bf16.msra.mxu0 %v2706
    %2882 = vmatpush.bf16.msra.mxu0 %v2702
    %2883 = vmatpush.bf16.msra.mxu0 %v2698
    %2884 = vmatpush.bf16.msra.mxu0 %v2694
    %2885 = vmatpush.bf16.msra.mxu0 %v2690
    %2886 = vmatpush.bf16.msra.mxu0 %v2686
    %2887 = vmatpush.bf16.msra.mxu0 %v2682
    %2888 = vmatpush.bf16.msra.mxu0 %v2678
    %2889 = vmatmul.bf16.gmra.mxu0 %v2472
    %v2890 = vpop.f32.mrf.mxu0
    %v2891 = vadd.f32 %v2478, %v2890
    %v2892 = vpop.f32.mrf.mxu0
    %2893 = vdwg.mxu0
    %2894 = vmatpush.bf16.msra.mxu0 %v2738
    %2895 = vmatpush.bf16.msra.mxu0 %v2734
    %2896 = vmatpush.bf16.msra.mxu0 %v2730
    %2897 = vmatpush.bf16.msra.mxu0 %v2726
    %2898 = vmatpush.bf16.msra.mxu0 %v2722
    %2899 = vmatpush.bf16.msra.mxu0 %v2718
    %2900 = vmatpush.bf16.msra.mxu0 %v2714
    %2901 = vmatpush.bf16.msra.mxu0 %v2710
    %2902 = vmatmul.bf16.gmra.mxu0 %v2473
    %v2903 = vpop.f32.mrf.mxu0
    %v2904 = vadd.f32 %v2891, %v2903
    %v2905 = vpop.f32.mrf.mxu0
    %2906 = vdwg.mxu0
    %v2907 = vmax.f32 %v2826, 0.0
    %v2908 = vmax.f32 %v2852, 0.0
    %v2909 = vmax.f32 %v2878, 0.0
    %v2910 = vmax.f32 %v2904, 0.0
    %s2911 = sshll.u32 %s446, 4
    %2912 = dma.done %s157, %s2911
    %v2913 = vld [vmem:[#allocation9] sm:$0xff]
    %v2914 = vld [vmem:[#allocation9 + $0x8] sm:$0xff]
    %v2915 = vld [vmem:[#allocation9 + $0x10] sm:$0xff]
    %v2916 = vld [vmem:[#allocation9 + $0x18] sm:$0xff]
    %v2917 = vld [vmem:[#allocation9 + $0x20] sm:$0xff]
    %v2918 = vld [vmem:[#allocation9 + $0x28] sm:$0xff]
    %v2919 = vld [vmem:[#allocation9 + $0x30] sm:$0xff]
    %v2920 = vld [vmem:[#allocation9 + $0x38] sm:$0xff]
    %v2921 = vld [vmem:[#allocation9 + $0x40] sm:$0xff]
    %v2922 = vld [vmem:[#allocation9 + $0x48] sm:$0xff]
    %v2923 = vld [vmem:[#allocation9 + $0x50] sm:$0xff]
    %v2924 = vld [vmem:[#allocation9 + $0x58] sm:$0xff]
    %v2925 = vld [vmem:[#allocation9 + $0x60] sm:$0xff]
    %v2926 = vld [vmem:[#allocation9 + $0x68] sm:$0xff]
    %v2927 = vld [vmem:[#allocation9 + $0x70] sm:$0xff]
    %v2928 = vld [vmem:[#allocation9 + $0x78] sm:$0xff]
    %v2929 = vld [vmem:[#allocation9 + $0x80] sm:$0xff]
    %v2930 = vld [vmem:[#allocation9 + $0x88] sm:$0xff]
    %v2931 = vld [vmem:[#allocation9 + $0x90] sm:$0xff]
    %v2932 = vld [vmem:[#allocation9 + $0x98] sm:$0xff]
    %v2933 = vld [vmem:[#allocation9 + $0xa0] sm:$0xff]
    %v2934 = vld [vmem:[#allocation9 + $0xa8] sm:$0xff]
    %v2935 = vld [vmem:[#allocation9 + $0xb0] sm:$0xff]
    %v2936 = vld [vmem:[#allocation9 + $0xb8] sm:$0xff]
    %v2937 = vld [vmem:[#allocation9 + $0xc0] sm:$0xff]
    %v2938 = vld [vmem:[#allocation9 + $0xc8] sm:$0xff]
    %v2939 = vld [vmem:[#allocation9 + $0xd0] sm:$0xff]
    %v2940 = vld [vmem:[#allocation9 + $0xd8] sm:$0xff]
    %v2941 = vld [vmem:[#allocation9 + $0xe0] sm:$0xff]
    %v2942 = vld [vmem:[#allocation9 + $0xe8] sm:$0xff]
    %v2943 = vld [vmem:[#allocation9 + $0xf0] sm:$0xff]
    %v2944 = vld [vmem:[#allocation9 + $0xf8] sm:$0xff]
    %v2945 = vld [vmem:[#allocation9 + $0x100] sm:$0xff]
    %v2946 = vld [vmem:[#allocation9 + $0x108] sm:$0xff]
    %v2947 = vld [vmem:[#allocation9 + $0x110] sm:$0xff]
    %v2948 = vld [vmem:[#allocation9 + $0x118] sm:$0xff]
    %v2949 = vld [vmem:[#allocation9 + $0x120] sm:$0xff]
    %v2950 = vld [vmem:[#allocation9 + $0x128] sm:$0xff]
    %v2951 = vld [vmem:[#allocation9 + $0x130] sm:$0xff]
    %v2952 = vld [vmem:[#allocation9 + $0x138] sm:$0xff]
    %v2953 = vld [vmem:[#allocation9 + $0x140] sm:$0xff]
    %v2954 = vld [vmem:[#allocation9 + $0x148] sm:$0xff]
    %v2955 = vld [vmem:[#allocation9 + $0x150] sm:$0xff]
    %v2956 = vld [vmem:[#allocation9 + $0x158] sm:$0xff]
    %v2957 = vld [vmem:[#allocation9 + $0x160] sm:$0xff]
    %v2958 = vld [vmem:[#allocation9 + $0x168] sm:$0xff]
    %v2959 = vld [vmem:[#allocation9 + $0x170] sm:$0xff]
    %v2960 = vld [vmem:[#allocation9 + $0x178] sm:$0xff]
    %v2961 = vld [vmem:[#allocation9 + $0x180] sm:$0xff]
    %v2962 = vld [vmem:[#allocation9 + $0x188] sm:$0xff]
    %v2963 = vld [vmem:[#allocation9 + $0x190] sm:$0xff]
    %v2964 = vld [vmem:[#allocation9 + $0x198] sm:$0xff]
    %v2965 = vld [vmem:[#allocation9 + $0x1a0] sm:$0xff]
    %v2966 = vld [vmem:[#allocation9 + $0x1a8] sm:$0xff]
    %v2967 = vld [vmem:[#allocation9 + $0x1b0] sm:$0xff]
    %v2968 = vld [vmem:[#allocation9 + $0x1b8] sm:$0xff]
    %v2969 = vld [vmem:[#allocation9 + $0x1c0] sm:$0xff]
    %v2970 = vld [vmem:[#allocation9 + $0x1c8] sm:$0xff]
    %v2971 = vld [vmem:[#allocation9 + $0x1d0] sm:$0xff]
    %v2972 = vld [vmem:[#allocation9 + $0x1d8] sm:$0xff]
    %v2973 = vld [vmem:[#allocation9 + $0x1e0] sm:$0xff]
    %v2974 = vld [vmem:[#allocation9 + $0x1e8] sm:$0xff]
    %v2975 = vld [vmem:[#allocation9 + $0x1f0] sm:$0xff]
    %v2976 = vld [vmem:[#allocation9 + $0x1f8] sm:$0xff]
    %v2977 = vld [vmem:[#allocation9 + $0x200] sm:$0xff]
    %v2978 = vld [vmem:[#allocation9 + $0x208] sm:$0xff]
    %v2979 = vld [vmem:[#allocation9 + $0x210] sm:$0xff]
    %v2980 = vld [vmem:[#allocation9 + $0x218] sm:$0xff]
    %v2981 = vld [vmem:[#allocation9 + $0x220] sm:$0xff]
    %v2982 = vld [vmem:[#allocation9 + $0x228] sm:$0xff]
    %v2983 = vld [vmem:[#allocation9 + $0x230] sm:$0xff]
    %v2984 = vld [vmem:[#allocation9 + $0x238] sm:$0xff]
    %v2985 = vld [vmem:[#allocation9 + $0x240] sm:$0xff]
    %v2986 = vld [vmem:[#allocation9 + $0x248] sm:$0xff]
    %v2987 = vld [vmem:[#allocation9 + $0x250] sm:$0xff]
    %v2988 = vld [vmem:[#allocation9 + $0x258] sm:$0xff]
    %v2989 = vld [vmem:[#allocation9 + $0x260] sm:$0xff]
    %v2990 = vld [vmem:[#allocation9 + $0x268] sm:$0xff]
    %v2991 = vld [vmem:[#allocation9 + $0x270] sm:$0xff]
    %v2992 = vld [vmem:[#allocation9 + $0x278] sm:$0xff]
    %v2993 = vld [vmem:[#allocation9 + $0x280] sm:$0xff]
    %v2994 = vld [vmem:[#allocation9 + $0x288] sm:$0xff]
    %v2995 = vld [vmem:[#allocation9 + $0x290] sm:$0xff]
    %v2996 = vld [vmem:[#allocation9 + $0x298] sm:$0xff]
    %v2997 = vld [vmem:[#allocation9 + $0x2a0] sm:$0xff]
    %v2998 = vld [vmem:[#allocation9 + $0x2a8] sm:$0xff]
    %v2999 = vld [vmem:[#allocation9 + $0x2b0] sm:$0xff]
    %v3000 = vld [vmem:[#allocation9 + $0x2b8] sm:$0xff]
    %v3001 = vld [vmem:[#allocation9 + $0x2c0] sm:$0xff]
    %v3002 = vld [vmem:[#allocation9 + $0x2c8] sm:$0xff]
    %v3003 = vld [vmem:[#allocation9 + $0x2d0] sm:$0xff]
    %v3004 = vld [vmem:[#allocation9 + $0x2d8] sm:$0xff]
    %v3005 = vld [vmem:[#allocation9 + $0x2e0] sm:$0xff]
    %v3006 = vld [vmem:[#allocation9 + $0x2e8] sm:$0xff]
    %v3007 = vld [vmem:[#allocation9 + $0x2f0] sm:$0xff]
    %v3008 = vld [vmem:[#allocation9 + $0x2f8] sm:$0xff]
    %v3009 = vld [vmem:[#allocation9 + $0x300] sm:$0xff]
    %v3010 = vld [vmem:[#allocation9 + $0x308] sm:$0xff]
    %v3011 = vld [vmem:[#allocation9 + $0x310] sm:$0xff]
    %v3012 = vld [vmem:[#allocation9 + $0x318] sm:$0xff]
    %v3013 = vld [vmem:[#allocation9 + $0x320] sm:$0xff]
    %v3014 = vld [vmem:[#allocation9 + $0x328] sm:$0xff]
    %v3015 = vld [vmem:[#allocation9 + $0x330] sm:$0xff]
    %v3016 = vld [vmem:[#allocation9 + $0x338] sm:$0xff]
    %v3017 = vld [vmem:[#allocation9 + $0x340] sm:$0xff]
    %v3018 = vld [vmem:[#allocation9 + $0x348] sm:$0xff]
    %v3019 = vld [vmem:[#allocation9 + $0x350] sm:$0xff]
    %v3020 = vld [vmem:[#allocation9 + $0x358] sm:$0xff]
    %v3021 = vld [vmem:[#allocation9 + $0x360] sm:$0xff]
    %v3022 = vld [vmem:[#allocation9 + $0x368] sm:$0xff]
    %v3023 = vld [vmem:[#allocation9 + $0x370] sm:$0xff]
    %v3024 = vld [vmem:[#allocation9 + $0x378] sm:$0xff]
    %v3025 = vld [vmem:[#allocation9 + $0x380] sm:$0xff]
    %v3026 = vld [vmem:[#allocation9 + $0x388] sm:$0xff]
    %v3027 = vld [vmem:[#allocation9 + $0x390] sm:$0xff]
    %v3028 = vld [vmem:[#allocation9 + $0x398] sm:$0xff]
    %v3029 = vld [vmem:[#allocation9 + $0x3a0] sm:$0xff]
    %v3030 = vld [vmem:[#allocation9 + $0x3a8] sm:$0xff]
    %v3031 = vld [vmem:[#allocation9 + $0x3b0] sm:$0xff]
    %v3032 = vld [vmem:[#allocation9 + $0x3b8] sm:$0xff]
    %v3033 = vld [vmem:[#allocation9 + $0x3c0] sm:$0xff]
    %v3034 = vld [vmem:[#allocation9 + $0x3c8] sm:$0xff]
    %v3035 = vld [vmem:[#allocation9 + $0x3d0] sm:$0xff]
    %v3036 = vld [vmem:[#allocation9 + $0x3d8] sm:$0xff]
    %v3037 = vld [vmem:[#allocation9 + $0x3e0] sm:$0xff]
    %v3038 = vld [vmem:[#allocation9 + $0x3e8] sm:$0xff]
    %v3039 = vld [vmem:[#allocation9 + $0x3f0] sm:$0xff]
    %v3040 = vld [vmem:[#allocation9 + $0x3f8] sm:$0xff]
    %v3041 = vld [vmem:[#allocation12 + $0x13] sm:$0xf]
    %v3042 = vpack.c.bf16 %v2907, %v2907
    %v3043 = vpack.c.bf16 %v2908, %v2908
    %v3044 = vpack.c.bf16 %v2909, %v2909
    %v3045 = vpack.c.bf16 %v2910, %v2910
    %v3047 = vperm.slane %v3041, 0
    %v3048 = vperm.slane %v3041, 1
    %v3049 = vperm.slane %v3041, 2
    %v3050 = vperm.slane %v3041, 3
    %v3183 = vunpack.c.l.b16 %v2913
    %v3184 = vunpack.c.h.b16 %v2913
    %v3185 = vunpack.c.l.b16 %v2914
    %v3186 = vunpack.c.h.b16 %v2914
    %v3187 = vunpack.c.l.b16 %v2915
    %v3188 = vunpack.c.h.b16 %v2915
    %v3189 = vunpack.c.l.b16 %v2916
    %v3190 = vunpack.c.h.b16 %v2916
    %v3191 = vunpack.c.l.b16 %v2917
    %v3192 = vunpack.c.h.b16 %v2917
    %v3193 = vunpack.c.l.b16 %v2918
    %v3194 = vunpack.c.h.b16 %v2918
    %v3195 = vunpack.c.l.b16 %v2919
    %v3196 = vunpack.c.h.b16 %v2919
    %v3197 = vunpack.c.l.b16 %v2920
    %v3198 = vunpack.c.h.b16 %v2920
    %v3199 = vunpack.c.l.b16 %v2921
    %v3200 = vunpack.c.h.b16 %v2921
    %v3201 = vunpack.c.l.b16 %v2922
    %v3202 = vunpack.c.h.b16 %v2922
    %v3203 = vunpack.c.l.b16 %v2923
    %v3204 = vunpack.c.h.b16 %v2923
    %v3205 = vunpack.c.l.b16 %v2924
    %v3206 = vunpack.c.h.b16 %v2924
    %v3207 = vunpack.c.l.b16 %v2925
    %v3208 = vunpack.c.h.b16 %v2925
    %v3209 = vunpack.c.l.b16 %v2926
    %v3210 = vunpack.c.h.b16 %v2926
    %v3211 = vunpack.c.l.b16 %v2927
    %v3212 = vunpack.c.h.b16 %v2927
    %v3213 = vunpack.c.l.b16 %v2928
    %v3214 = vunpack.c.h.b16 %v2928
    %v3215 = vunpack.c.l.b16 %v2929
    %v3216 = vunpack.c.h.b16 %v2929
    %v3217 = vunpack.c.l.b16 %v2930
    %v3218 = vunpack.c.h.b16 %v2930
    %v3219 = vunpack.c.l.b16 %v2931
    %v3220 = vunpack.c.h.b16 %v2931
    %v3221 = vunpack.c.l.b16 %v2932
    %v3222 = vunpack.c.h.b16 %v2932
    %v3223 = vunpack.c.l.b16 %v2933
    %v3224 = vunpack.c.h.b16 %v2933
    %v3225 = vunpack.c.l.b16 %v2934
    %v3226 = vunpack.c.h.b16 %v2934
    %v3227 = vunpack.c.l.b16 %v2935
    %v3228 = vunpack.c.h.b16 %v2935
    %v3229 = vunpack.c.l.b16 %v2936
    %v3230 = vunpack.c.h.b16 %v2936
    %v3231 = vunpack.c.l.b16 %v2937
    %v3232 = vunpack.c.h.b16 %v2937
    %v3233 = vunpack.c.l.b16 %v2938
    %v3234 = vunpack.c.h.b16 %v2938
    %v3235 = vunpack.c.l.b16 %v2939
    %v3236 = vunpack.c.h.b16 %v2939
    %v3237 = vunpack.c.l.b16 %v2940
    %v3238 = vunpack.c.h.b16 %v2940
    %v3239 = vunpack.c.l.b16 %v2941
    %v3240 = vunpack.c.h.b16 %v2941
    %v3241 = vunpack.c.l.b16 %v2942
    %v3242 = vunpack.c.h.b16 %v2942
    %v3243 = vunpack.c.l.b16 %v2943
    %v3244 = vunpack.c.h.b16 %v2943
    %v3245 = vunpack.c.l.b16 %v2944
    %v3246 = vunpack.c.h.b16 %v2944
    %v3247 = vunpack.c.l.b16 %v2945
    %v3248 = vunpack.c.h.b16 %v2945
    %v3249 = vunpack.c.l.b16 %v2946
    %v3250 = vunpack.c.h.b16 %v2946
    %v3251 = vunpack.c.l.b16 %v2947
    %v3252 = vunpack.c.h.b16 %v2947
    %v3253 = vunpack.c.l.b16 %v2948
    %v3254 = vunpack.c.h.b16 %v2948
    %v3255 = vunpack.c.l.b16 %v2949
    %v3256 = vunpack.c.h.b16 %v2949
    %v3257 = vunpack.c.l.b16 %v2950
    %v3258 = vunpack.c.h.b16 %v2950
    %v3259 = vunpack.c.l.b16 %v2951
    %v3260 = vunpack.c.h.b16 %v2951
    %v3261 = vunpack.c.l.b16 %v2952
    %v3262 = vunpack.c.h.b16 %v2952
    %v3263 = vunpack.c.l.b16 %v2953
    %v3264 = vunpack.c.h.b16 %v2953
    %v3265 = vunpack.c.l.b16 %v2954
    %v3266 = vunpack.c.h.b16 %v2954
    %v3267 = vunpack.c.l.b16 %v2955
    %v3268 = vunpack.c.h.b16 %v2955
    %v3269 = vunpack.c.l.b16 %v2956
    %v3270 = vunpack.c.h.b16 %v2956
    %v3271 = vunpack.c.l.b16 %v2957
    %v3272 = vunpack.c.h.b16 %v2957
    %v3273 = vunpack.c.l.b16 %v2958
    %v3274 = vunpack.c.h.b16 %v2958
    %v3275 = vunpack.c.l.b16 %v2959
    %v3276 = vunpack.c.h.b16 %v2959
    %v3277 = vunpack.c.l.b16 %v2960
    %v3278 = vunpack.c.h.b16 %v2960
    %v3279 = vunpack.c.l.b16 %v2961
    %v3280 = vunpack.c.h.b16 %v2961
    %v3281 = vunpack.c.l.b16 %v2962
    %v3282 = vunpack.c.h.b16 %v2962
    %v3283 = vunpack.c.l.b16 %v2963
    %v3284 = vunpack.c.h.b16 %v2963
    %v3285 = vunpack.c.l.b16 %v2964
    %v3286 = vunpack.c.h.b16 %v2964
    %v3287 = vunpack.c.l.b16 %v2965
    %v3288 = vunpack.c.h.b16 %v2965
    %v3289 = vunpack.c.l.b16 %v2966
    %v3290 = vunpack.c.h.b16 %v2966
    %v3291 = vunpack.c.l.b16 %v2967
    %v3292 = vunpack.c.h.b16 %v2967
    %v3293 = vunpack.c.l.b16 %v2968
    %v3294 = vunpack.c.h.b16 %v2968
    %v3295 = vunpack.c.l.b16 %v2969
    %v3296 = vunpack.c.h.b16 %v2969
    %v3297 = vunpack.c.l.b16 %v2970
    %v3298 = vunpack.c.h.b16 %v2970
    %v3299 = vunpack.c.l.b16 %v2971
    %v3300 = vunpack.c.h.b16 %v2971
    %v3301 = vunpack.c.l.b16 %v2972
    %v3302 = vunpack.c.h.b16 %v2972
    %v3303 = vunpack.c.l.b16 %v2973
    %v3304 = vunpack.c.h.b16 %v2973
    %v3305 = vunpack.c.l.b16 %v2974
    %v3306 = vunpack.c.h.b16 %v2974
    %v3307 = vunpack.c.l.b16 %v2975
    %v3308 = vunpack.c.h.b16 %v2975
    %v3309 = vunpack.c.l.b16 %v2976
    %v3310 = vunpack.c.h.b16 %v2976
    %v3311 = vunpack.c.l.b16 %v2977
    %v3312 = vunpack.c.h.b16 %v2977
    %v3313 = vunpack.c.l.b16 %v2978
    %v3314 = vunpack.c.h.b16 %v2978
    %v3315 = vunpack.c.l.b16 %v2979
    %v3316 = vunpack.c.h.b16 %v2979
    %v3317 = vunpack.c.l.b16 %v2980
    %v3318 = vunpack.c.h.b16 %v2980
    %v3319 = vunpack.c.l.b16 %v2981
    %v3320 = vunpack.c.h.b16 %v2981
    %v3321 = vunpack.c.l.b16 %v2982
    %v3322 = vunpack.c.h.b16 %v2982
    %v3323 = vunpack.c.l.b16 %v2983
    %v3324 = vunpack.c.h.b16 %v2983
    %v3325 = vunpack.c.l.b16 %v2984
    %v3326 = vunpack.c.h.b16 %v2984
    %v3327 = vunpack.c.l.b16 %v2985
    %v3328 = vunpack.c.h.b16 %v2985
    %v3329 = vunpack.c.l.b16 %v2986
    %v3330 = vunpack.c.h.b16 %v2986
    %v3331 = vunpack.c.l.b16 %v2987
    %v3332 = vunpack.c.h.b16 %v2987
    %v3333 = vunpack.c.l.b16 %v2988
    %v3334 = vunpack.c.h.b16 %v2988
    %v3335 = vunpack.c.l.b16 %v2989
    %v3336 = vunpack.c.h.b16 %v2989
    %v3337 = vunpack.c.l.b16 %v2990
    %v3338 = vunpack.c.h.b16 %v2990
    %v3339 = vunpack.c.l.b16 %v2991
    %v3340 = vunpack.c.h.b16 %v2991
    %v3341 = vunpack.c.l.b16 %v2992
    %v3342 = vunpack.c.h.b16 %v2992
    %v3343 = vunpack.c.l.b16 %v2993
    %v3344 = vunpack.c.h.b16 %v2993
    %v3345 = vunpack.c.l.b16 %v2994
    %v3346 = vunpack.c.h.b16 %v2994
    %v3347 = vunpack.c.l.b16 %v2995
    %v3348 = vunpack.c.h.b16 %v2995
    %v3349 = vunpack.c.l.b16 %v2996
    %v3350 = vunpack.c.h.b16 %v2996
    %v3351 = vunpack.c.l.b16 %v2997
    %v3352 = vunpack.c.h.b16 %v2997
    %v3353 = vunpack.c.l.b16 %v2998
    %v3354 = vunpack.c.h.b16 %v2998
    %v3355 = vunpack.c.l.b16 %v2999
    %v3356 = vunpack.c.h.b16 %v2999
    %v3357 = vunpack.c.l.b16 %v3000
    %v3358 = vunpack.c.h.b16 %v3000
    %v3359 = vunpack.c.l.b16 %v3001
    %v3360 = vunpack.c.h.b16 %v3001
    %v3361 = vunpack.c.l.b16 %v3002
    %v3362 = vunpack.c.h.b16 %v3002
    %v3363 = vunpack.c.l.b16 %v3003
    %v3364 = vunpack.c.h.b16 %v3003
    %v3365 = vunpack.c.l.b16 %v3004
    %v3366 = vunpack.c.h.b16 %v3004
    %v3367 = vunpack.c.l.b16 %v3005
    %v3368 = vunpack.c.h.b16 %v3005
    %v3369 = vunpack.c.l.b16 %v3006
    %v3370 = vunpack.c.h.b16 %v3006
    %v3371 = vunpack.c.l.b16 %v3007
    %v3372 = vunpack.c.h.b16 %v3007
    %v3373 = vunpack.c.l.b16 %v3008
    %v3374 = vunpack.c.h.b16 %v3008
    %v3375 = vunpack.c.l.b16 %v3009
    %v3376 = vunpack.c.h.b16 %v3009
    %v3377 = vunpack.c.l.b16 %v3010
    %v3378 = vunpack.c.h.b16 %v3010
    %v3379 = vunpack.c.l.b16 %v3011
    %v3380 = vunpack.c.h.b16 %v3011
    %v3381 = vunpack.c.l.b16 %v3012
    %v3382 = vunpack.c.h.b16 %v3012
    %v3383 = vunpack.c.l.b16 %v3013
    %v3384 = vunpack.c.h.b16 %v3013
    %v3385 = vunpack.c.l.b16 %v3014
    %v3386 = vunpack.c.h.b16 %v3014
    %v3387 = vunpack.c.l.b16 %v3015
    %v3388 = vunpack.c.h.b16 %v3015
    %v3389 = vunpack.c.l.b16 %v3016
    %v3390 = vunpack.c.h.b16 %v3016
    %v3391 = vunpack.c.l.b16 %v3017
    %v3392 = vunpack.c.h.b16 %v3017
    %v3393 = vunpack.c.l.b16 %v3018
    %v3394 = vunpack.c.h.b16 %v3018
    %v3395 = vunpack.c.l.b16 %v3019
    %v3396 = vunpack.c.h.b16 %v3019
    %v3397 = vunpack.c.l.b16 %v3020
    %v3398 = vunpack.c.h.b16 %v3020
    %v3399 = vunpack.c.l.b16 %v3021
    %v3400 = vunpack.c.h.b16 %v3021
    %v3401 = vunpack.c.l.b16 %v3022
    %v3402 = vunpack.c.h.b16 %v3022
    %v3403 = vunpack.c.l.b16 %v3023
    %v3404 = vunpack.c.h.b16 %v3023
    %v3405 = vunpack.c.l.b16 %v3024
    %v3406 = vunpack.c.h.b16 %v3024
    %v3407 = vunpack.c.l.b16 %v3025
    %v3408 = vunpack.c.h.b16 %v3025
    %v3409 = vunpack.c.l.b16 %v3026
    %v3410 = vunpack.c.h.b16 %v3026
    %v3411 = vunpack.c.l.b16 %v3027
    %v3412 = vunpack.c.h.b16 %v3027
    %v3413 = vunpack.c.l.b16 %v3028
    %v3414 = vunpack.c.h.b16 %v3028
    %v3415 = vunpack.c.l.b16 %v3029
    %v3416 = vunpack.c.h.b16 %v3029
    %v3417 = vunpack.c.l.b16 %v3030
    %v3418 = vunpack.c.h.b16 %v3030
    %v3419 = vunpack.c.l.b16 %v3031
    %v3420 = vunpack.c.h.b16 %v3031
    %v3421 = vunpack.c.l.b16 %v3032
    %v3422 = vunpack.c.h.b16 %v3032
    %v3423 = vunpack.c.l.b16 %v3033
    %v3424 = vunpack.c.h.b16 %v3033
    %v3425 = vunpack.c.l.b16 %v3034
    %v3426 = vunpack.c.h.b16 %v3034
    %v3427 = vunpack.c.l.b16 %v3035
    %v3428 = vunpack.c.h.b16 %v3035
    %v3429 = vunpack.c.l.b16 %v3036
    %v3430 = vunpack.c.h.b16 %v3036
    %v3431 = vunpack.c.l.b16 %v3037
    %v3432 = vunpack.c.h.b16 %v3037
    %v3433 = vunpack.c.l.b16 %v3038
    %v3434 = vunpack.c.h.b16 %v3038
    %v3435 = vunpack.c.l.b16 %v3039
    %v3436 = vunpack.c.h.b16 %v3039
    %v3437 = vunpack.c.l.b16 %v3040
    %v3438 = vunpack.c.h.b16 %v3040
    %v3439 = vpack.c.b16 %v3187, %v3183
    %v3440 = vpack.c.b16 %v3188, %v3184
    %v3441 = vpack.c.b16 %v3189, %v3185
    %v3442 = vpack.c.b16 %v3190, %v3186
    %v3443 = vpack.c.b16 %v3195, %v3191
    %v3444 = vpack.c.b16 %v3196, %v3192
    %v3445 = vpack.c.b16 %v3197, %v3193
    %v3446 = vpack.c.b16 %v3198, %v3194
    %v3447 = vpack.c.b16 %v3203, %v3199
    %v3448 = vpack.c.b16 %v3204, %v3200
    %v3449 = vpack.c.b16 %v3205, %v3201
    %v3450 = vpack.c.b16 %v3206, %v3202
    %v3451 = vpack.c.b16 %v3211, %v3207
    %v3452 = vpack.c.b16 %v3212, %v3208
    %v3453 = vpack.c.b16 %v3213, %v3209
    %v3454 = vpack.c.b16 %v3214, %v3210
    %v3455 = vpack.c.b16 %v3219, %v3215
    %v3456 = vpack.c.b16 %v3220, %v3216
    %v3457 = vpack.c.b16 %v3221, %v3217
    %v3458 = vpack.c.b16 %v3222, %v3218
    %v3459 = vpack.c.b16 %v3227, %v3223
    %v3460 = vpack.c.b16 %v3228, %v3224
    %v3461 = vpack.c.b16 %v3229, %v3225
    %v3462 = vpack.c.b16 %v3230, %v3226
    %v3463 = vpack.c.b16 %v3235, %v3231
    %v3464 = vpack.c.b16 %v3236, %v3232
    %v3465 = vpack.c.b16 %v3237, %v3233
    %v3466 = vpack.c.b16 %v3238, %v3234
    %v3467 = vpack.c.b16 %v3243, %v3239
    %v3468 = vpack.c.b16 %v3244, %v3240
    %v3469 = vpack.c.b16 %v3245, %v3241
    %v3470 = vpack.c.b16 %v3246, %v3242
    %v3471 = vpack.c.b16 %v3251, %v3247
    %v3472 = vpack.c.b16 %v3252, %v3248
    %v3473 = vpack.c.b16 %v3253, %v3249
    %v3474 = vpack.c.b16 %v3254, %v3250
    %v3475 = vpack.c.b16 %v3259, %v3255
    %v3476 = vpack.c.b16 %v3260, %v3256
    %v3477 = vpack.c.b16 %v3261, %v3257
    %v3478 = vpack.c.b16 %v3262, %v3258
    %v3479 = vpack.c.b16 %v3267, %v3263
    %v3480 = vpack.c.b16 %v3268, %v3264
    %v3481 = vpack.c.b16 %v3269, %v3265
    %v3482 = vpack.c.b16 %v3270, %v3266
    %v3483 = vpack.c.b16 %v3275, %v3271
    %v3484 = vpack.c.b16 %v3276, %v3272
    %v3485 = vpack.c.b16 %v3277, %v3273
    %v3486 = vpack.c.b16 %v3278, %v3274
    %v3487 = vpack.c.b16 %v3283, %v3279
    %v3488 = vpack.c.b16 %v3284, %v3280
    %v3489 = vpack.c.b16 %v3285, %v3281
    %v3490 = vpack.c.b16 %v3286, %v3282
    %v3491 = vpack.c.b16 %v3291, %v3287
    %v3492 = vpack.c.b16 %v3292, %v3288
    %v3493 = vpack.c.b16 %v3293, %v3289
    %v3494 = vpack.c.b16 %v3294, %v3290
    %v3495 = vpack.c.b16 %v3299, %v3295
    %v3496 = vpack.c.b16 %v3300, %v3296
    %v3497 = vpack.c.b16 %v3301, %v3297
    %v3498 = vpack.c.b16 %v3302, %v3298
    %v3499 = vpack.c.b16 %v3307, %v3303
    %v3500 = vpack.c.b16 %v3308, %v3304
    %v3501 = vpack.c.b16 %v3309, %v3305
    %v3502 = vpack.c.b16 %v3310, %v3306
    %v3503 = vpack.c.b16 %v3315, %v3311
    %v3504 = vpack.c.b16 %v3316, %v3312
    %v3505 = vpack.c.b16 %v3317, %v3313
    %v3506 = vpack.c.b16 %v3318, %v3314
    %v3507 = vpack.c.b16 %v3323, %v3319
    %v3508 = vpack.c.b16 %v3324, %v3320
    %v3509 = vpack.c.b16 %v3325, %v3321
    %v3510 = vpack.c.b16 %v3326, %v3322
    %v3511 = vpack.c.b16 %v3331, %v3327
    %v3512 = vpack.c.b16 %v3332, %v3328
    %v3513 = vpack.c.b16 %v3333, %v3329
    %v3514 = vpack.c.b16 %v3334, %v3330
    %v3515 = vpack.c.b16 %v3339, %v3335
    %v3516 = vpack.c.b16 %v3340, %v3336
    %v3517 = vpack.c.b16 %v3341, %v3337
    %v3518 = vpack.c.b16 %v3342, %v3338
    %v3519 = vpack.c.b16 %v3347, %v3343
    %v3520 = vpack.c.b16 %v3348, %v3344
    %v3521 = vpack.c.b16 %v3349, %v3345
    %v3522 = vpack.c.b16 %v3350, %v3346
    %v3523 = vpack.c.b16 %v3355, %v3351
    %v3524 = vpack.c.b16 %v3356, %v3352
    %v3525 = vpack.c.b16 %v3357, %v3353
    %v3526 = vpack.c.b16 %v3358, %v3354
    %v3527 = vpack.c.b16 %v3363, %v3359
    %v3528 = vpack.c.b16 %v3364, %v3360
    %v3529 = vpack.c.b16 %v3365, %v3361
    %v3530 = vpack.c.b16 %v3366, %v3362
    %v3531 = vpack.c.b16 %v3371, %v3367
    %v3532 = vpack.c.b16 %v3372, %v3368
    %v3533 = vpack.c.b16 %v3373, %v3369
    %v3534 = vpack.c.b16 %v3374, %v3370
    %v3535 = vpack.c.b16 %v3379, %v3375
    %v3536 = vpack.c.b16 %v3380, %v3376
    %v3537 = vpack.c.b16 %v3381, %v3377
    %v3538 = vpack.c.b16 %v3382, %v3378
    %v3539 = vpack.c.b16 %v3387, %v3383
    %v3540 = vpack.c.b16 %v3388, %v3384
    %v3541 = vpack.c.b16 %v3389, %v3385
    %v3542 = vpack.c.b16 %v3390, %v3386
    %v3543 = vpack.c.b16 %v3395, %v3391
    %v3544 = vpack.c.b16 %v3396, %v3392
    %v3545 = vpack.c.b16 %v3397, %v3393
    %v3546 = vpack.c.b16 %v3398, %v3394
    %v3547 = vpack.c.b16 %v3403, %v3399
    %v3548 = vpack.c.b16 %v3404, %v3400
    %v3549 = vpack.c.b16 %v3405, %v3401
    %v3550 = vpack.c.b16 %v3406, %v3402
    %v3551 = vpack.c.b16 %v3411, %v3407
    %v3552 = vpack.c.b16 %v3412, %v3408
    %v3553 = vpack.c.b16 %v3413, %v3409
    %v3554 = vpack.c.b16 %v3414, %v3410
    %v3555 = vpack.c.b16 %v3419, %v3415
    %v3556 = vpack.c.b16 %v3420, %v3416
    %v3557 = vpack.c.b16 %v3421, %v3417
    %v3558 = vpack.c.b16 %v3422, %v3418
    %v3559 = vpack.c.b16 %v3427, %v3423
    %v3560 = vpack.c.b16 %v3428, %v3424
    %v3561 = vpack.c.b16 %v3429, %v3425
    %v3562 = vpack.c.b16 %v3430, %v3426
    %v3563 = vpack.c.b16 %v3435, %v3431
    %v3564 = vpack.c.b16 %v3436, %v3432
    %v3565 = vpack.c.b16 %v3437, %v3433
    %v3566 = vpack.c.b16 %v3438, %v3434
    %3695 = vmatpush.bf16.msra.mxu0 %v3467
    %3696 = vmatpush.bf16.msra.mxu0 %v3463
    %3697 = vmatpush.bf16.msra.mxu0 %v3459
    %3698 = vmatpush.bf16.msra.mxu0 %v3455
    %3699 = vmatpush.bf16.msra.mxu0 %v3451
    %3700 = vmatpush.bf16.msra.mxu0 %v3447
    %3701 = vmatpush.bf16.msra.mxu0 %v3443
    %3702 = vmatpush.bf16.msra.mxu0 %v3439
    %3703 = vmatmul.bf16.gmra.mxu0 %v3042
    %v3704 = vpop.f32.mrf.mxu0
    %v3705 = vadd.f32 %v3047, %v3704
    %v3706 = vpop.f32.mrf.mxu0
    %3707 = vdwg.mxu0
    %3708 = vmatpush.bf16.msra.mxu0 %v3499
    %3709 = vmatpush.bf16.msra.mxu0 %v3495
    %3710 = vmatpush.bf16.msra.mxu0 %v3491
    %3711 = vmatpush.bf16.msra.mxu0 %v3487
    %3712 = vmatpush.bf16.msra.mxu0 %v3483
    %3713 = vmatpush.bf16.msra.mxu0 %v3479
    %3714 = vmatpush.bf16.msra.mxu0 %v3475
    %3715 = vmatpush.bf16.msra.mxu0 %v3471
    %3716 = vmatmul.bf16.gmra.mxu0 %v3043
    %v3717 = vpop.f32.mrf.mxu0
    %v3718 = vadd.f32 %v3705, %v3717
    %v3719 = vpop.f32.mrf.mxu0
    %3720 = vdwg.mxu0
    %3721 = vmatpush.bf16.msra.mxu0 %v3531
    %3722 = vmatpush.bf16.msra.mxu0 %v3527
    %3723 = vmatpush.bf16.msra.mxu0 %v3523
    %3724 = vmatpush.bf16.msra.mxu0 %v3519
    %3725 = vmatpush.bf16.msra.mxu0 %v3515
    %3726 = vmatpush.bf16.msra.mxu0 %v3511
    %3727 = vmatpush.bf16.msra.mxu0 %v3507
    %3728 = vmatpush.bf16.msra.mxu0 %v3503
    %3729 = vmatmul.bf16.gmra.mxu0 %v3044
    %v3730 = vpop.f32.mrf.mxu0
    %v3731 = vadd.f32 %v3718, %v3730
    %v3732 = vpop.f32.mrf.mxu0
    %3733 = vdwg.mxu0
    %3734 = vmatpush.bf16.msra.mxu0 %v3563
    %3735 = vmatpush.bf16.msra.mxu0 %v3559
    %3736 = vmatpush.bf16.msra.mxu0 %v3555
    %3737 = vmatpush.bf16.msra.mxu0 %v3551
    %3738 = vmatpush.bf16.msra.mxu0 %v3547
    %3739 = vmatpush.bf16.msra.mxu0 %v3543
    %3740 = vmatpush.bf16.msra.mxu0 %v3539
    %3741 = vmatpush.bf16.msra.mxu0 %v3535
    %3742 = vmatmul.bf16.gmra.mxu0 %v3045
    %v3743 = vpop.f32.mrf.mxu0
    %v3744 = vadd.f32 %v3731, %v3743
    %v3745 = vpop.f32.mrf.mxu0
    %3746 = vdwg.mxu0
    %3747 = vmatpush.bf16.msra.mxu0 %v3468
    %3748 = vmatpush.bf16.msra.mxu0 %v3464
    %3749 = vmatpush.bf16.msra.mxu0 %v3460
    %3750 = vmatpush.bf16.msra.mxu0 %v3456
    %3751 = vmatpush.bf16.msra.mxu0 %v3452
    %3752 = vmatpush.bf16.msra.mxu0 %v3448
    %3753 = vmatpush.bf16.msra.mxu0 %v3444
    %3754 = vmatpush.bf16.msra.mxu0 %v3440
    %3755 = vmatmul.bf16.gmra.mxu0 %v3042
    %v3756 = vpop.f32.mrf.mxu0
    %v3757 = vadd.f32 %v3048, %v3756
    %v3758 = vpop.f32.mrf.mxu0
    %3759 = vdwg.mxu0
    %3760 = vmatpush.bf16.msra.mxu0 %v3500
    %3761 = vmatpush.bf16.msra.mxu0 %v3496
    %3762 = vmatpush.bf16.msra.mxu0 %v3492
    %3763 = vmatpush.bf16.msra.mxu0 %v3488
    %3764 = vmatpush.bf16.msra.mxu0 %v3484
    %3765 = vmatpush.bf16.msra.mxu0 %v3480
    %3766 = vmatpush.bf16.msra.mxu0 %v3476
    %3767 = vmatpush.bf16.msra.mxu0 %v3472
    %3768 = vmatmul.bf16.gmra.mxu0 %v3043
    %v3769 = vpop.f32.mrf.mxu0
    %v3770 = vadd.f32 %v3757, %v3769
    %v3771 = vpop.f32.mrf.mxu0
    %3772 = vdwg.mxu0
    %3773 = vmatpush.bf16.msra.mxu0 %v3532
    %3774 = vmatpush.bf16.msra.mxu0 %v3528
    %3775 = vmatpush.bf16.msra.mxu0 %v3524
    %3776 = vmatpush.bf16.msra.mxu0 %v3520
    %3777 = vmatpush.bf16.msra.mxu0 %v3516
    %3778 = vmatpush.bf16.msra.mxu0 %v3512
    %3779 = vmatpush.bf16.msra.mxu0 %v3508
    %3780 = vmatpush.bf16.msra.mxu0 %v3504
    %3781 = vmatmul.bf16.gmra.mxu0 %v3044
    %v3782 = vpop.f32.mrf.mxu0
    %v3783 = vadd.f32 %v3770, %v3782
    %v3784 = vpop.f32.mrf.mxu0
    %3785 = vdwg.mxu0
    %3786 = vmatpush.bf16.msra.mxu0 %v3564
    %3787 = vmatpush.bf16.msra.mxu0 %v3560
    %3788 = vmatpush.bf16.msra.mxu0 %v3556
    %3789 = vmatpush.bf16.msra.mxu0 %v3552
    %3790 = vmatpush.bf16.msra.mxu0 %v3548
    %3791 = vmatpush.bf16.msra.mxu0 %v3544
    %3792 = vmatpush.bf16.msra.mxu0 %v3540
    %3793 = vmatpush.bf16.msra.mxu0 %v3536
    %3794 = vmatmul.bf16.gmra.mxu0 %v3045
    %v3795 = vpop.f32.mrf.mxu0
    %v3796 = vadd.f32 %v3783, %v3795
    %v3797 = vpop.f32.mrf.mxu0
    %3798 = vdwg.mxu0
    %3799 = vmatpush.bf16.msra.mxu0 %v3469
    %3800 = vmatpush.bf16.msra.mxu0 %v3465
    %3801 = vmatpush.bf16.msra.mxu0 %v3461
    %3802 = vmatpush.bf16.msra.mxu0 %v3457
    %3803 = vmatpush.bf16.msra.mxu0 %v3453
    %3804 = vmatpush.bf16.msra.mxu0 %v3449
    %3805 = vmatpush.bf16.msra.mxu0 %v3445
    %3806 = vmatpush.bf16.msra.mxu0 %v3441
    %3807 = vmatmul.bf16.gmra.mxu0 %v3042
    %v3808 = vpop.f32.mrf.mxu0
    %v3809 = vadd.f32 %v3049, %v3808
    %v3810 = vpop.f32.mrf.mxu0
    %3811 = vdwg.mxu0
    %3812 = vmatpush.bf16.msra.mxu0 %v3501
    %3813 = vmatpush.bf16.msra.mxu0 %v3497
    %3814 = vmatpush.bf16.msra.mxu0 %v3493
    %3815 = vmatpush.bf16.msra.mxu0 %v3489
    %3816 = vmatpush.bf16.msra.mxu0 %v3485
    %3817 = vmatpush.bf16.msra.mxu0 %v3481
    %3818 = vmatpush.bf16.msra.mxu0 %v3477
    %3819 = vmatpush.bf16.msra.mxu0 %v3473
    %3820 = vmatmul.bf16.gmra.mxu0 %v3043
    %v3821 = vpop.f32.mrf.mxu0
    %v3822 = vadd.f32 %v3809, %v3821
    %v3823 = vpop.f32.mrf.mxu0
    %3824 = vdwg.mxu0
    %3825 = vmatpush.bf16.msra.mxu0 %v3533
    %3826 = vmatpush.bf16.msra.mxu0 %v3529
    %3827 = vmatpush.bf16.msra.mxu0 %v3525
    %3828 = vmatpush.bf16.msra.mxu0 %v3521
    %3829 = vmatpush.bf16.msra.mxu0 %v3517
    %3830 = vmatpush.bf16.msra.mxu0 %v3513
    %3831 = vmatpush.bf16.msra.mxu0 %v3509
    %3832 = vmatpush.bf16.msra.mxu0 %v3505
    %3833 = vmatmul.bf16.gmra.mxu0 %v3044
    %v3834 = vpop.f32.mrf.mxu0
    %v3835 = vadd.f32 %v3822, %v3834
    %v3836 = vpop.f32.mrf.mxu0
    %3837 = vdwg.mxu0
    %3838 = vmatpush.bf16.msra.mxu0 %v3565
    %3839 = vmatpush.bf16.msra.mxu0 %v3561
    %3840 = vmatpush.bf16.msra.mxu0 %v3557
    %3841 = vmatpush.bf16.msra.mxu0 %v3553
    %3842 = vmatpush.bf16.msra.mxu0 %v3549
    %3843 = vmatpush.bf16.msra.mxu0 %v3545
    %3844 = vmatpush.bf16.msra.mxu0 %v3541
    %3845 = vmatpush.bf16.msra.mxu0 %v3537
    %3846 = vmatmul.bf16.gmra.mxu0 %v3045
    %v3847 = vpop.f32.mrf.mxu0
    %v3848 = vadd.f32 %v3835, %v3847
    %v3849 = vpop.f32.mrf.mxu0
    %3850 = vdwg.mxu0
    %3851 = vmatpush.bf16.msra.mxu0 %v3470
    %3852 = vmatpush.bf16.msra.mxu0 %v3466
    %3853 = vmatpush.bf16.msra.mxu0 %v3462
    %3854 = vmatpush.bf16.msra.mxu0 %v3458
    %3855 = vmatpush.bf16.msra.mxu0 %v3454
    %3856 = vmatpush.bf16.msra.mxu0 %v3450
    %3857 = vmatpush.bf16.msra.mxu0 %v3446
    %3858 = vmatpush.bf16.msra.mxu0 %v3442
    %3859 = vmatmul.bf16.gmra.mxu0 %v3042
    %v3860 = vpop.f32.mrf.mxu0
    %v3861 = vadd.f32 %v3050, %v3860
    %v3862 = vpop.f32.mrf.mxu0
    %3863 = vdwg.mxu0
    %3864 = vmatpush.bf16.msra.mxu0 %v3502
    %3865 = vmatpush.bf16.msra.mxu0 %v3498
    %3866 = vmatpush.bf16.msra.mxu0 %v3494
    %3867 = vmatpush.bf16.msra.mxu0 %v3490
    %3868 = vmatpush.bf16.msra.mxu0 %v3486
    %3869 = vmatpush.bf16.msra.mxu0 %v3482
    %3870 = vmatpush.bf16.msra.mxu0 %v3478
    %3871 = vmatpush.bf16.msra.mxu0 %v3474
    %3872 = vmatmul.bf16.gmra.mxu0 %v3043
    %v3873 = vpop.f32.mrf.mxu0
    %v3874 = vadd.f32 %v3861, %v3873
    %v3875 = vpop.f32.mrf.mxu0
    %3876 = vdwg.mxu0
    %3877 = vmatpush.bf16.msra.mxu0 %v3534
    %3878 = vmatpush.bf16.msra.mxu0 %v3530
    %3879 = vmatpush.bf16.msra.mxu0 %v3526
    %3880 = vmatpush.bf16.msra.mxu0 %v3522
    %3881 = vmatpush.bf16.msra.mxu0 %v3518
    %3882 = vmatpush.bf16.msra.mxu0 %v3514
    %3883 = vmatpush.bf16.msra.mxu0 %v3510
    %3884 = vmatpush.bf16.msra.mxu0 %v3506
    %3885 = vmatmul.bf16.gmra.mxu0 %v3044
    %v3886 = vpop.f32.mrf.mxu0
    %v3887 = vadd.f32 %v3874, %v3886
    %v3888 = vpop.f32.mrf.mxu0
    %3889 = vdwg.mxu0
    %3890 = vmatpush.bf16.msra.mxu0 %v3566
    %3891 = vmatpush.bf16.msra.mxu0 %v3562
    %3892 = vmatpush.bf16.msra.mxu0 %v3558
    %3893 = vmatpush.bf16.msra.mxu0 %v3554
    %3894 = vmatpush.bf16.msra.mxu0 %v3550
    %3895 = vmatpush.bf16.msra.mxu0 %v3546
    %3896 = vmatpush.bf16.msra.mxu0 %v3542
    %3897 = vmatpush.bf16.msra.mxu0 %v3538
    %3898 = vmatmul.bf16.gmra.mxu0 %v3045
    %v3899 = vpop.f32.mrf.mxu0
    %v3900 = vadd.f32 %v3887, %v3899
    %v3901 = vpop.f32.mrf.mxu0
    %3902 = vdwg.mxu0
    %v3903 = vmax.f32 %v3744, 0.0
    %v3904 = vmax.f32 %v3796, 0.0
    %v3905 = vmax.f32 %v3848, 0.0
    %v3906 = vmax.f32 %v3900, 0.0
    %s3907 = smul.u32 %s445, 1
    %s3908 = sshll.u32 %s3907, 4
    %3909 = dma.done %s171, %s3908
    %v3910 = vld [vmem:[#allocation10] sm:$0xf]
    %v3911 = vld [vmem:[#allocation10 + $0x4] sm:$0xf]
    %v3912 = vld [vmem:[#allocation10 + $0x8] sm:$0xf]
    %v3913 = vld [vmem:[#allocation10 + $0xc] sm:$0xf]
    %v3914 = vld [vmem:[#allocation10 + $0x10] sm:$0xf]
    %v3915 = vld [vmem:[#allocation10 + $0x14] sm:$0xf]
    %v3916 = vld [vmem:[#allocation10 + $0x18] sm:$0xf]
    %v3917 = vld [vmem:[#allocation10 + $0x1c] sm:$0xf]
    %v3918 = vld [vmem:[#allocation10 + $0x20] sm:$0xf]
    %v3919 = vld [vmem:[#allocation10 + $0x24] sm:$0xf]
    %v3920 = vld [vmem:[#allocation10 + $0x28] sm:$0xf]
    %v3921 = vld [vmem:[#allocation10 + $0x2c] sm:$0xf]
    %v3922 = vld [vmem:[#allocation10 + $0x30] sm:$0xf]
    %v3923 = vld [vmem:[#allocation10 + $0x34] sm:$0xf]
    %v3924 = vld [vmem:[#allocation10 + $0x38] sm:$0xf]
    %v3925 = vld [vmem:[#allocation10 + $0x3c] sm:$0xf]
    %v3926 = vld [vmem:[#allocation10 + $0x40] sm:$0xf]
    %v3927 = vld [vmem:[#allocation10 + $0x44] sm:$0xf]
    %v3928 = vld [vmem:[#allocation10 + $0x48] sm:$0xf]
    %v3929 = vld [vmem:[#allocation10 + $0x4c] sm:$0xf]
    %v3930 = vld [vmem:[#allocation10 + $0x50] sm:$0xf]
    %v3931 = vld [vmem:[#allocation10 + $0x54] sm:$0xf]
    %v3932 = vld [vmem:[#allocation10 + $0x58] sm:$0xf]
    %v3933 = vld [vmem:[#allocation10 + $0x5c] sm:$0xf]
    %v3934 = vld [vmem:[#allocation10 + $0x60] sm:$0xf]
    %v3935 = vld [vmem:[#allocation10 + $0x64] sm:$0xf]
    %v3936 = vld [vmem:[#allocation10 + $0x68] sm:$0xf]
    %v3937 = vld [vmem:[#allocation10 + $0x6c] sm:$0xf]
    %v3938 = vld [vmem:[#allocation10 + $0x70] sm:$0xf]
    %v3939 = vld [vmem:[#allocation10 + $0x74] sm:$0xf]
    %v3940 = vld [vmem:[#allocation10 + $0x78] sm:$0xf]
    %v3941 = vld [vmem:[#allocation10 + $0x7c] sm:$0xf]
    %v3942 = vld [vmem:[#allocation10 + $0x80] sm:$0xf]
    %v3943 = vld [vmem:[#allocation10 + $0x84] sm:$0xf]
    %v3944 = vld [vmem:[#allocation10 + $0x88] sm:$0xf]
    %v3945 = vld [vmem:[#allocation10 + $0x8c] sm:$0xf]
    %v3946 = vld [vmem:[#allocation10 + $0x90] sm:$0xf]
    %v3947 = vld [vmem:[#allocation10 + $0x94] sm:$0xf]
    %v3948 = vld [vmem:[#allocation10 + $0x98] sm:$0xf]
    %v3949 = vld [vmem:[#allocation10 + $0x9c] sm:$0xf]
    %v3950 = vld [vmem:[#allocation10 + $0xa0] sm:$0xf]
    %v3951 = vld [vmem:[#allocation10 + $0xa4] sm:$0xf]
    %v3952 = vld [vmem:[#allocation10 + $0xa8] sm:$0xf]
    %v3953 = vld [vmem:[#allocation10 + $0xac] sm:$0xf]
    %v3954 = vld [vmem:[#allocation10 + $0xb0] sm:$0xf]
    %v3955 = vld [vmem:[#allocation10 + $0xb4] sm:$0xf]
    %v3956 = vld [vmem:[#allocation10 + $0xb8] sm:$0xf]
    %v3957 = vld [vmem:[#allocation10 + $0xbc] sm:$0xf]
    %v3958 = vld [vmem:[#allocation10 + $0xc0] sm:$0xf]
    %v3959 = vld [vmem:[#allocation10 + $0xc4] sm:$0xf]
    %v3960 = vld [vmem:[#allocation10 + $0xc8] sm:$0xf]
    %v3961 = vld [vmem:[#allocation10 + $0xcc] sm:$0xf]
    %v3962 = vld [vmem:[#allocation10 + $0xd0] sm:$0xf]
    %v3963 = vld [vmem:[#allocation10 + $0xd4] sm:$0xf]
    %v3964 = vld [vmem:[#allocation10 + $0xd8] sm:$0xf]
    %v3965 = vld [vmem:[#allocation10 + $0xdc] sm:$0xf]
    %v3966 = vld [vmem:[#allocation10 + $0xe0] sm:$0xf]
    %v3967 = vld [vmem:[#allocation10 + $0xe4] sm:$0xf]
    %v3968 = vld [vmem:[#allocation10 + $0xe8] sm:$0xf]
    %v3969 = vld [vmem:[#allocation10 + $0xec] sm:$0xf]
    %v3970 = vld [vmem:[#allocation10 + $0xf0] sm:$0xf]
    %v3971 = vld [vmem:[#allocation10 + $0xf4] sm:$0xf]
    %v3972 = vld [vmem:[#allocation10 + $0xf8] sm:$0xf]
    %v3973 = vld [vmem:[#allocation10 + $0xfc] sm:$0xf]
    %v3974 = vld [vmem:[#allocation12 + $0x17] sm:$0x1]
    %v3975 = vpack.c.bf16 %v3903, %v3903
    %v3976 = vpack.c.bf16 %v3904, %v3904
    %v3977 = vpack.c.bf16 %v3905, %v3905
    %v3978 = vpack.c.bf16 %v3906, %v3906
    %v3980 = vperm.slane %v3974, 0
    %v4046 = vunpack.c.l.b16 %v3910
    %v4047 = vunpack.c.l.b16 %v3911
    %v4048 = vunpack.c.l.b16 %v3912
    %v4049 = vunpack.c.l.b16 %v3913
    %v4050 = vunpack.c.l.b16 %v3914
    %v4051 = vunpack.c.l.b16 %v3915
    %v4052 = vunpack.c.l.b16 %v3916
    %v4053 = vunpack.c.l.b16 %v3917
    %v4054 = vunpack.c.l.b16 %v3918
    %v4055 = vunpack.c.l.b16 %v3919
    %v4056 = vunpack.c.l.b16 %v3920
    %v4057 = vunpack.c.l.b16 %v3921
    %v4058 = vunpack.c.l.b16 %v3922
    %v4059 = vunpack.c.l.b16 %v3923
    %v4060 = vunpack.c.l.b16 %v3924
    %v4061 = vunpack.c.l.b16 %v3925
    %v4062 = vunpack.c.l.b16 %v3926
    %v4063 = vunpack.c.l.b16 %v3927
    %v4064 = vunpack.c.l.b16 %v3928
    %v4065 = vunpack.c.l.b16 %v3929
    %v4066 = vunpack.c.l.b16 %v3930
    %v4067 = vunpack.c.l.b16 %v3931
    %v4068 = vunpack.c.l.b16 %v3932
    %v4069 = vunpack.c.l.b16 %v3933
    %v4070 = vunpack.c.l.b16 %v3934
    %v4071 = vunpack.c.l.b16 %v3935
    %v4072 = vunpack.c.l.b16 %v3936
    %v4073 = vunpack.c.l.b16 %v3937
    %v4074 = vunpack.c.l.b16 %v3938
    %v4075 = vunpack.c.l.b16 %v3939
    %v4076 = vunpack.c.l.b16 %v3940
    %v4077 = vunpack.c.l.b16 %v3941
    %v4078 = vunpack.c.l.b16 %v3942
    %v4079 = vunpack.c.l.b16 %v3943
    %v4080 = vunpack.c.l.b16 %v3944
    %v4081 = vunpack.c.l.b16 %v3945
    %v4082 = vunpack.c.l.b16 %v3946
    %v4083 = vunpack.c.l.b16 %v3947
    %v4084 = vunpack.c.l.b16 %v3948
    %v4085 = vunpack.c.l.b16 %v3949
    %v4086 = vunpack.c.l.b16 %v3950
    %v4087 = vunpack.c.l.b16 %v3951
    %v4088 = vunpack.c.l.b16 %v3952
    %v4089 = vunpack.c.l.b16 %v3953
    %v4090 = vunpack.c.l.b16 %v3954
    %v4091 = vunpack.c.l.b16 %v3955
    %v4092 = vunpack.c.l.b16 %v3956
    %v4093 = vunpack.c.l.b16 %v3957
    %v4094 = vunpack.c.l.b16 %v3958
    %v4095 = vunpack.c.l.b16 %v3959
    %v4096 = vunpack.c.l.b16 %v3960
    %v4097 = vunpack.c.l.b16 %v3961
    %v4098 = vunpack.c.l.b16 %v3962
    %v4099 = vunpack.c.l.b16 %v3963
    %v4100 = vunpack.c.l.b16 %v3964
    %v4101 = vunpack.c.l.b16 %v3965
    %v4102 = vunpack.c.l.b16 %v3966
    %v4103 = vunpack.c.l.b16 %v3967
    %v4104 = vunpack.c.l.b16 %v3968
    %v4105 = vunpack.c.l.b16 %v3969
    %v4106 = vunpack.c.l.b16 %v3970
    %v4107 = vunpack.c.l.b16 %v3971
    %v4108 = vunpack.c.l.b16 %v3972
    %v4109 = vunpack.c.l.b16 %v3973
    %v4110 = vpack.c.b16 %v4047, %v4046
    %v4111 = vpack.c.b16 %v4049, %v4048
    %v4112 = vpack.c.b16 %v4051, %v4050
    %v4113 = vpack.c.b16 %v4053, %v4052
    %v4114 = vpack.c.b16 %v4055, %v4054
    %v4115 = vpack.c.b16 %v4057, %v4056
    %v4116 = vpack.c.b16 %v4059, %v4058
    %v4117 = vpack.c.b16 %v4061, %v4060
    %v4118 = vpack.c.b16 %v4063, %v4062
    %v4119 = vpack.c.b16 %v4065, %v4064
    %v4120 = vpack.c.b16 %v4067, %v4066
    %v4121 = vpack.c.b16 %v4069, %v4068
    %v4122 = vpack.c.b16 %v4071, %v4070
    %v4123 = vpack.c.b16 %v4073, %v4072
    %v4124 = vpack.c.b16 %v4075, %v4074
    %v4125 = vpack.c.b16 %v4077, %v4076
    %v4126 = vpack.c.b16 %v4079, %v4078
    %v4127 = vpack.c.b16 %v4081, %v4080
    %v4128 = vpack.c.b16 %v4083, %v4082
    %v4129 = vpack.c.b16 %v4085, %v4084
    %v4130 = vpack.c.b16 %v4087, %v4086
    %v4131 = vpack.c.b16 %v4089, %v4088
    %v4132 = vpack.c.b16 %v4091, %v4090
    %v4133 = vpack.c.b16 %v4093, %v4092
    %v4134 = vpack.c.b16 %v4095, %v4094
    %v4135 = vpack.c.b16 %v4097, %v4096
    %v4136 = vpack.c.b16 %v4099, %v4098
    %v4137 = vpack.c.b16 %v4101, %v4100
    %v4138 = vpack.c.b16 %v4103, %v4102
    %v4139 = vpack.c.b16 %v4105, %v4104
    %v4140 = vpack.c.b16 %v4107, %v4106
    %v4141 = vpack.c.b16 %v4109, %v4108
    %4174 = vmatpush.bf16.msra.mxu0 %v4117
    %4175 = vmatpush.bf16.msra.mxu0 %v4116
    %4176 = vmatpush.bf16.msra.mxu0 %v4115
    %4177 = vmatpush.bf16.msra.mxu0 %v4114
    %4178 = vmatpush.bf16.msra.mxu0 %v4113
    %4179 = vmatpush.bf16.msra.mxu0 %v4112
    %4180 = vmatpush.bf16.msra.mxu0 %v4111
    %4181 = vmatpush.bf16.msra.mxu0 %v4110
    %4182 = vmatmul.bf16.gmra.mxu0 %v3975
    %v4183 = vpop.f32.mrf.mxu0
    %v4184 = vadd.f32 %v3980, %v4183
    %v4185 = vpop.f32.mrf.mxu0
    %4186 = vdwg.mxu0
    %4187 = vmatpush.bf16.msra.mxu0 %v4125
    %4188 = vmatpush.bf16.msra.mxu0 %v4124
    %4189 = vmatpush.bf16.msra.mxu0 %v4123
    %4190 = vmatpush.bf16.msra.mxu0 %v4122
    %4191 = vmatpush.bf16.msra.mxu0 %v4121
    %4192 = vmatpush.bf16.msra.mxu0 %v4120
    %4193 = vmatpush.bf16.msra.mxu0 %v4119
    %4194 = vmatpush.bf16.msra.mxu0 %v4118
    %4195 = vmatmul.bf16.gmra.mxu0 %v3976
    %v4196 = vpop.f32.mrf.mxu0
    %v4197 = vadd.f32 %v4184, %v4196
    %v4198 = vpop.f32.mrf.mxu0
    %4199 = vdwg.mxu0
    %4200 = vmatpush.bf16.msra.mxu0 %v4133
    %4201 = vmatpush.bf16.msra.mxu0 %v4132
    %4202 = vmatpush.bf16.msra.mxu0 %v4131
    %4203 = vmatpush.bf16.msra.mxu0 %v4130
    %4204 = vmatpush.bf16.msra.mxu0 %v4129
    %4205 = vmatpush.bf16.msra.mxu0 %v4128
    %4206 = vmatpush.bf16.msra.mxu0 %v4127
    %4207 = vmatpush.bf16.msra.mxu0 %v4126
    %4208 = vmatmul.bf16.gmra.mxu0 %v3977
    %v4209 = vpop.f32.mrf.mxu0
    %v4210 = vadd.f32 %v4197, %v4209
    %v4211 = vpop.f32.mrf.mxu0
    %4212 = vdwg.mxu0
    %4213 = vmatpush.bf16.msra.mxu0 %v4141
    %4214 = vmatpush.bf16.msra.mxu0 %v4140
    %4215 = vmatpush.bf16.msra.mxu0 %v4139
    %4216 = vmatpush.bf16.msra.mxu0 %v4138
    %4217 = vmatpush.bf16.msra.mxu0 %v4137
    %4218 = vmatpush.bf16.msra.mxu0 %v4136
    %4219 = vmatpush.bf16.msra.mxu0 %v4135
    %4220 = vmatpush.bf16.msra.mxu0 %v4134
    %4221 = vmatmul.bf16.gmra.mxu0 %v3978
    %v4222 = vpop.f32.mrf.mxu0
    %v4223 = vadd.f32 %v4210, %v4222
    %v4224 = vpop.f32.mrf.mxu0
    %4225 = vdwg.mxu0
    %v4226 = vsub.f32 0.0, %v4223
    %v4227 = vmul.f32 %v4226, 1.442695
    %v4228 = vpow.pop %v4227
    %v4229 = vadd.f32 %v4228, 1.0
    %v4230 = vrcp.pop %v4229
    %4231 = vst [vmem:[#allocation17] sm:$0xff] %v4230
    %4232 = vst [vmem:[%s14] sm:$0xff] %v2194
    // Predicated region
    $region62: #{vae_forward.1} parent=1 // pred_check
      _
    $region63: #{vae_forward.1} parent=1 // pred_check_branch
      %4234 = sbr.rel (0) target = $region65
    $region64: #{vae_forward.1} parent=1 // pred_region
      %4236 = vsyncadd [#allocation14], 0
      %s4238 = sshll.u32 [#allocation17], 4
      %s4239 = int_to_ptr.vmem [resolvable:$true] %s4238
      %s4240 = sshll.u32 %s13, 4
      %s4241 = int_to_ptr.hbm [resolvable:$true] %s4240
      %4243 = dma.vmem_to_hbm [thread:$0]  %s4239, 128, %s4241, [#allocation14]
    $region65: #{vae_forward.1} parent=1 // pred_fallthru
      _
    // Predicated region
    $region66: #{vae_forward.1} parent=1 // pred_check
      _
    $region67: #{vae_forward.1} parent=1 // pred_check_branch
      %4245 = sbr.rel (0) target = $region69
    $region68: #{vae_forward.1} parent=1 // pred_region
      _
    $region69: #{vae_forward.1} parent=1 // pred_fallthru
      _
    // Predicated region
    $region70: #{vae_forward.1} parent=1 // pred_check
      _
    $region71: #{vae_forward.1} parent=1 // pred_check_branch
      %4247 = sbr.rel (0) target = $region73
    $region72: #{vae_forward.1} parent=1 // pred_region
      %4249 = dma.done [#allocation14], 128
    $region73: #{vae_forward.1} parent=1 // pred_fallthru
      _
    // Predicated region
    $region74: #{vae_forward.1} parent=1 // pred_check
      _
    $region75: #{vae_forward.1} parent=1 // pred_check_branch
      %4251 = sbr.rel (0) target = $region77
    $region76: #{vae_forward.1} parent=1 // pred_region
      _
    $region77: #{vae_forward.1} parent=1 // pred_fallthru
      _
    %4252 = vsyncpa [#allocation13], 1
    %4253 = vsyncpa [#allocation16], 1
    %4254 = vsyncpa [#allocation14], 1
  %4255 = vsyncmov [#allocation11]
  %s4256 = vpop.sfrf %4255
  %p4257 = scmp.eq.s32.totalorder %s4256, 0
  %p4258 = pneg %p4257
  %4260 = shalt.err (%p4258)
  %s4261 = scalar_lea.sflag [#allocation11], 1
  %4262 = vsyncmov %s4261
  %s4263 = vpop.sfrf %4262
  %p4264 = scmp.eq.s32.totalorder %s4263, 0
  %p4265 = pneg %p4264
  %4267 = shalt.err (%p4265)
  %s4268 = scalar_lea.sflag [#allocation11], 2
  %4269 = vsyncmov %s4268
  %s4270 = vpop.sfrf %4269
  %p4271 = scmp.eq.s32.totalorder %s4270, 0
  %p4272 = pneg %p4271
  %4274 = shalt.err (%p4272)
  %s4275 = scalar_lea.sflag [#allocation11], 3
  %4276 = vsyncmov %s4275
  %s4277 = vpop.sfrf %4276
  %p4278 = scmp.eq.s32.totalorder %s4277, 0
  %p4279 = pneg %p4278
  %4281 = shalt.err (%p4279)
  %s4282 = scalar_lea.sflag [#allocation11], 4
  %4283 = vsyncmov %s4282
  %s4284 = vpop.sfrf %4283
  %p4285 = scmp.eq.s32.totalorder %s4284, 0
  %p4286 = pneg %p4285
  %4288 = shalt.err (%p4286)
  %s4289 = scalar_lea.sflag [#allocation11], 5
  %4290 = vsyncmov %s4289
  %s4291 = vpop.sfrf %4290
  %p4292 = scmp.eq.s32.totalorder %s4291, 0
  %p4293 = pneg %p4292
  %4295 = shalt.err (%p4293)
  %s4296 = scalar_lea.sflag [#allocation11], 6
  %4297 = vsyncmov %s4296
  %s4298 = vpop.sfrf %4297
  %p4299 = scmp.eq.s32.totalorder %s4298, 0
  %p4300 = pneg %p4299
  %4302 = shalt.err (%p4300)
  %s4303 = scalar_lea.sflag [#allocation11], 7
  %4304 = vsyncmov %s4303
  %s4305 = vpop.sfrf %4304
  %p4306 = scmp.eq.s32.totalorder %s4305, 0
  %p4307 = pneg %p4306
  %4309 = shalt.err (%p4307)
  %s4310 = scalar_lea.sflag [#allocation11], 8
  %4311 = vsyncmov %s4310
  %s4312 = vpop.sfrf %4311
  %p4313 = scmp.eq.s32.totalorder %s4312, 0
  %p4314 = pneg %p4313
  %4316 = shalt.err (%p4314)

</llo_original>
